<compile_context>
chip_gen: v7x
topology: tpu7x:2x2x1
jax: 0.10.0
libtpu: 0.0.40
codegen_flags: <defaults>
</compile_context>

<pallas_src>
import functools
import numpy as np
import jax
import jax.numpy as jnp
from jax import lax
from jax.experimental import pallas as pl
from jax.experimental.pallas import tpu as pltpu

ENCODE_DIM = 20            # self.encodeDim
LATENT_DIM = 10            # self.latentDim
CONV_OUT_T = 60            # self.encode_conv_outputDim
SEQ_LEN = 2 * CONV_OUT_T   # 120 : input length implied by the architecture
BN_EPS = 1e-5              # nn.BatchNorm1d default
TB = 8                     # samples per grid step (multiple of 8 for sublane alignment)


# --------------------------------- fused kernel ----------------------------------------
def _fused_vae_kernel(
    a_ref,        # (1, 2, TB*3*Cin, 60)  even/odd conv-phase inputs, samples stacked on sublanes
    wconv_ref,    # (TB*20, TB*3*Cin)     block-diagonal stacked conv taps
    aff1_ref,     # (TB*20, 3)            conv bias | BN1 scale | BN1 shift (tiled per sample)
    wcat_ref,     # (60, 400)             encoder weight with flatten folded in
    maska_ref,    # (TB*20, 400)          channel-block mask
    seg_ref,      # (TB, TB*20)           per-sample segment-sum (0/1)
    folda_ref,    # (400, 20)             fold matrix
    benc_ref,     # (1, 20)               [lin21_b | lin22_b]
    tileb_ref,    # (10, 200)             lane-tiling of z
    rexp_ref,     # (TB*20, TB)           row expansion (0/1)
    maskb_ref,    # (TB*20, 200)          channel-block mask for decoder
    wdecr_ref,    # (200, 60)             decoder-linear weight as (20,60)-tile producer
    aff2_ref,     # (3, TB*20, 60)        decoder bias | BN2 scale | BN2 shift (tiled)
    wdec_ref,     # (3, TB*Cout, TB*20)   block-diagonal deconv taps
    scat_ref,     # (3, 60, 120)          even/odd interleave scatter matrices (k=0,1,2)
    bdct_ref,     # (TB*Cout, 1)          deconv bias (tiled)
    out_ref,      # (TB*Cout, 120)
    mulv_ref,     # (TB, 20)              [mu | logvar]
):
    f32 = jnp.float32
    dot = functools.partial(jnp.dot, preferred_element_type=f32)

    # ---- encoder_conv: Conv1d(Cin,20,3,pad=1) + ReLU + BN(eval) + MaxPool(2,2) ----
    # Even/odd output phases are two block matmuls with a block-diagonal tap weight;
    # pooling is a pure VPU max (no selection matmuls).
    wconv = wconv_ref[...]
    b1 = aff1_ref[:, 0:1]
    s1 = aff1_ref[:, 1:2]
    t1 = aff1_ref[:, 2:3]
    ye = dot(wconv, a_ref[0, 0])                                  # (TB*20, 60)
    yo = dot(wconv, a_ref[0, 1])
    ye = jnp.maximum(ye + b1, 0.0) * s1 + t1
    yo = jnp.maximum(yo + b1, 0.0) * s1 + t1
    pooled = jnp.maximum(ye, yo)                                  # (TB*20, 60)

    # ---- encoder_lin21 + encoder_lin22 (fused), flatten folded into wcat ----
    m1 = dot(pooled, wcat_ref[...]) * maska_ref[...]              # (TB*20, 400)
    segsum = dot(seg_ref[...], m1)                                # (TB, 400)
    mulv = dot(segsum, folda_ref[...]) + benc_ref[...]            # (TB, 20)
    mulv_ref[...] = mulv

    # ---- reparameterize (eval mode): z = mu ----
    z = mulv[:, :LATENT_DIM]                                      # (TB, 10)

    # ---- decoder_lin: Linear(10,1200) + ReLU + BN(eval), emitted as (TB*20, 60) ----
    ztile = dot(z, tileb_ref[...])                                # (TB, 200)
    zrep = dot(rexp_ref[...], ztile) * maskb_ref[...]             # (TB*20, 200)
    d = dot(zrep, wdecr_ref[...]) + aff2_ref[0]                   # (TB*20, 60)
    d = jnp.maximum(d, 0.0) * aff2_ref[1] + aff2_ref[2]

    # ---- decoder_conv: ConvTranspose1d(20, Cout, 3, stride=2, pad=1, out_pad=1) ----
    g0 = dot(wdec_ref[0], d)                                      # (TB*Cout, 60)
    g1 = dot(wdec_ref[1], d)
    g2 = dot(wdec_ref[2], d)
    # even t=2m gets g1[:,m]; odd t=2m+1 gets g0[:,m+1] + g2[:,m] (shift folded in scat[0])
    out_ref[...] = (dot(g1, scat_ref[1]) + dot(g0, scat_ref[0])
                    + dot(g2, scat_ref[2]) + bdct_ref[...])       # (TB*Cout, 120)


# ------------------------------------- parameters --------------------------------------
def init_params(key, feature_dim):
    flat = ENCODE_DIM * CONV_OUT_T                                  # 1200
    ks = iter(jax.random.split(key, 18))

    def nrm(shape, scale):
        return scale * jax.random.normal(next(ks), shape, jnp.float32)

    return {
        # encoder_conv: Conv1d(featureDim, 20, 3, padding=1) + BatchNorm1d(20)
        'conv_w': nrm((ENCODE_DIM, feature_dim, 3), 0.2),
        'conv_b': nrm((ENCODE_DIM,), 0.1),
        'bn1_gamma': 1.0 + nrm((ENCODE_DIM,), 0.1),
        'bn1_beta': nrm((ENCODE_DIM,), 0.1),
        'bn1_mean': nrm((ENCODE_DIM,), 0.1),
        'bn1_var': jax.random.uniform(next(ks), (ENCODE_DIM,), jnp.float32, 0.5, 1.5),
        # encoder_lin21 / encoder_lin22: Linear(1200, 10)
        'lin21_w': nrm((LATENT_DIM, flat), 0.05),
        'lin21_b': nrm((LATENT_DIM,), 0.05),
        'lin22_w': nrm((LATENT_DIM, flat), 0.05),
        'lin22_b': nrm((LATENT_DIM,), 0.05),
        # decoder_lin: Linear(10, 1200) + BatchNorm1d(1200)
        'dec_lin_w': nrm((flat, LATENT_DIM), 0.1),
        'dec_lin_b': nrm((flat,), 0.05),
        'bn2_gamma': 1.0 + nrm((flat,), 0.1),
        'bn2_beta': nrm((flat,), 0.1),
        'bn2_mean': nrm((flat,), 0.05),
        'bn2_var': jax.random.uniform(next(ks), (flat,), jnp.float32, 0.5, 1.5),
        # decoder_conv: ConvTranspose1d(20, featureDim, 3, stride=2, padding=1, output_padding=1)
        'deconv_w': nrm((ENCODE_DIM, feature_dim, 3), 0.2),
        'deconv_b': nrm((feature_dim,), 0.1),
    }


def prepare_params(params, tb=TB):
    """One-time host-side prep: fold eval-mode BN, build stacked / block-diagonal /
    mask / scatter constants used by the batch-blocked fused kernel."""
    assert tb % 8 == 0, "TB must be a multiple of 8"
    p = {k: np.asarray(v, np.float32) for k, v in params.items()}
    j2 = 2 * LATENT_DIM
    cin = p['conv_w'].shape[1]
    cout = p['deconv_b'].shape[0]
    eye_tb = np.eye(tb, dtype=np.float32)

    s1 = p['bn1_gamma'] / np.sqrt(p['bn1_var'] + BN_EPS)
    t1 = p['bn1_beta'] - p['bn1_mean'] * s1
    s2 = p['bn2_gamma'] / np.sqrt(p['bn2_var'] + BN_EPS)
    t2 = p['bn2_beta'] - p['bn2_mean'] * s2

    # conv: taps stacked along K (order matches wrapper's [prev, center, next] stacking),
    # then block-diagonal over the TB samples of a grid step.
    wstack = np.transpose(p['conv_w'], (0, 2, 1)).reshape(ENCODE_DIM, 3 * cin)  # [o, k*cin+c]
    wconv = np.kron(eye_tb, wstack)                                             # (tb*20, tb*3cin)
    aff1 = np.stack([np.tile(p['conv_b'], tb), np.tile(s1, tb), np.tile(t1, tb)], axis=1)  # (tb*20, 3)

    # fused encoder linears: flatten (20,60)->1200 folded into wcat + mask + segment-sum + fold
    wenc = np.concatenate([p['lin21_w'], p['lin22_w']], axis=0)                  # (20, 1200)
    benc = np.concatenate([p['lin21_b'], p['lin22_b']], axis=0)                  # (20,)
    wcat = np.transpose(wenc.reshape(j2, ENCODE_DIM, CONV_OUT_T), (2, 1, 0)) \
             .reshape(CONV_OUT_T, ENCODE_DIM * j2)                               # (60, 400)
    maska = np.kron(np.eye(ENCODE_DIM, dtype=np.float32), np.ones((1, j2), np.float32))   # (20, 400)
    maska_t = np.tile(maska, (tb, 1))                                            # (tb*20, 400)
    seg = np.kron(eye_tb, np.ones((1, ENCODE_DIM), np.float32))                  # (tb, tb*20)
    folda = np.tile(np.eye(j2, dtype=np.float32), (ENCODE_DIM, 1))               # (400, 20)

    # decoder linear, emitted directly as (tb*20, 60) tiles (PyTorch's view(B,20,60))
    wdecr = np.transpose(p['dec_lin_w'].reshape(ENCODE_DIM, CONV_OUT_T, LATENT_DIM),
                         (0, 2, 1)).reshape(ENCODE_DIM * LATENT_DIM, CONV_OUT_T)  # (200, 60)
    tileb = np.tile(np.eye(LATENT_DIM, dtype=np.float32), (1, ENCODE_DIM))        # (10, 200)
    rexp = np.kron(eye_tb, np.ones((ENCODE_DIM, 1), np.float32))                  # (tb*20, tb)
    maskb = np.kron(np.eye(ENCODE_DIM, dtype=np.float32),
                    np.ones((1, LATENT_DIM), np.float32))                         # (20, 200)
    maskb_t = np.tile(maskb, (tb, 1))                                             # (tb*20, 200)
    aff2 = np.stack([np.tile(p['dec_lin_b'].reshape(ENCODE_DIM, CONV_OUT_T), (tb, 1)),
                     np.tile(s2.reshape(ENCODE_DIM, CONV_OUT_T), (tb, 1)),
                     np.tile(t2.reshape(ENCODE_DIM, CONV_OUT_T), (tb, 1))], axis=0)  # (3, tb*20, 60)

    # deconv: block-diagonal taps + even/odd interleave scatter matrices
    dw = p['deconv_w']                                                            # (20, cout, 3)
    wdec = np.stack([np.kron(eye_tb, dw[:, :, k].T) for k in range(3)], axis=0)   # (3, tb*cout, tb*20)
    bdct = np.tile(p['deconv_b'], tb).reshape(tb * cout, 1)                       # (tb*cout, 1)
    u = np.arange(CONV_OUT_T)
    ee = np.zeros((CONV_OUT_T, SEQ_LEN), np.float32); ee[u, 2 * u] = 1.0          # k=1 -> even t
    eo = np.zeros((CONV_OUT_T, SEQ_LEN), np.float32); eo[u, 2 * u + 1] = 1.0      # k=2 -> odd t
    eo0 = np.zeros((CONV_OUT_T, SEQ_LEN), np.float32)                             # k=0 -> odd t (m+1 shift)
    v = np.arange(1, CONV_OUT_T); eo0[v, 2 * v - 1] = 1.0
    scat = np.stack([eo0, ee, eo], axis=0)

    cj = lambda a: jnp.asarray(a, jnp.float32)
    return dict(
        tb=tb, cin=cin, cout=cout,
        wconv=cj(wconv), aff1=cj(aff1),
        wcat=cj(wcat), maska=cj(maska_t), seg=cj(seg), folda=cj(folda),
        benc=cj(benc.reshape(1, j2)),
        tileb=cj(tileb), rexp=cj(rexp), maskb=cj(maskb_t), wdecr=cj(wdecr),
        aff2=cj(aff2), wdec=cj(wdec), scat=cj(scat), bdct=cj(bdct),
    )


# ------------------------------------- forward -----------------------------------------
def forward(prep, x):
    tb, cin, cout = prep['tb'], prep['cin'], prep['cout']
    B, xc, T = x.shape
    assert xc == cin, "channel mismatch"
    assert T == SEQ_LEN, "architecture requires input length 120 (2 * encode_conv_outputDim)"
    f32 = jnp.float32
    x = x.astype(f32)

    # --- wrapper layout plumbing (single small pass; replaces jnp.pad + in-kernel pooling matmuls):
    # deinterleave time into even/odd conv-output phases with the k=3 halo shifts pre-applied,
    # stack the 3 taps along K and the TB samples of each grid block along sublanes.
    x_e = x[:, :, 0::2]                                   # (B, cin, 60) : x[.., 2u]
    x_o = x[:, :, 1::2]                                   # (B, cin, 60) : x[.., 2u+1]
    zero = jnp.zeros((B, cin, 1), f32)
    x_o_r = jnp.concatenate([zero, x_o[:, :, :-1]], axis=2)   # x[.., 2u-1]
    x_e_l = jnp.concatenate([x_e[:, :, 1:], zero], axis=2)    # x[.., 2u+2]
    a_even = jnp.concatenate([x_o_r, x_e, x_o], axis=1)       # taps (k=0,1,2) for even t
    a_odd = jnp.concatenate([x_e, x_o, x_e_l], axis=1)        # taps (k=0,1,2) for odd t
    a = jnp.stack([a_even, a_odd], axis=1)                    # (B, 2, 3cin, 60)

    g = (B + tb - 1) // tb
    bpad = g * tb
    if bpad != B:
        a = jnp.pad(a, ((0, bpad - B), (0, 0), (0, 0), (0, 0)))
    a = a.reshape(g, tb, 2, 3 * cin, CONV_OUT_T).transpose(0, 2, 1, 3, 4) \
         .reshape(g, 2, tb * 3 * cin, CONV_OUT_T)

    order = ['wconv', 'aff1', 'wcat', 'maska', 'seg', 'folda', 'benc',
             'tileb', 'rexp', 'maskb', 'wdecr', 'aff2', 'wdec', 'scat', 'bdct']
    consts = [prep[k] for k in order]

    def _const_spec(arr):
        nd = arr.ndim
        return pl.BlockSpec(arr.shape, lambda i, _nd=nd: (0,) * _nd)   # VMEM-resident constants

    in_specs = [pl.BlockSpec((1, 2, tb * 3 * cin, CONV_OUT_T), lambda i: (i, 0, 0, 0))]
    in_specs += [_const_spec(c) for c in consts]

    out, mulv = pl.pallas_call(
        _fused_vae_kernel,
        grid=(g,),
        in_specs=in_specs,
        out_specs=(pl.BlockSpec((tb * cout, SEQ_LEN), lambda i: (i, 0)),
                   pl.BlockSpec((tb, 2 * LATENT_DIM), lambda i: (i, 0))),
        out_shape=(jax.ShapeDtypeStruct((bpad * cout, SEQ_LEN), f32),
                   jax.ShapeDtypeStruct((bpad, 2 * LATENT_DIM), f32)),
        compiler_params=pltpu.CompilerParams(dimension_semantics=("parallel",)),
    )(a, *consts)

    out = out.reshape(bpad, cout, SEQ_LEN)[:B]           # free reshape + slice off batch padding
    mu = mulv[:B, :LATENT_DIM]
    logvar = mulv[:B, LATENT_DIM:]
    return out, mu, logvar


# ----------------------------- pure-JAX reference (eval mode) --------------------------
def reference_forward(params, x):
    B, cin, T = x.shape
    y = lax.conv_general_dilated(x, params['conv_w'], (1,), [(1, 1)],
                                 dimension_numbers=('NCH', 'OIH', 'NCH'),
                                 precision=lax.Precision.HIGHEST)
    y = y + params['conv_b'][None, :, None]
    y = jnp.maximum(y, 0.0)
    s1 = params['bn1_gamma'] / jnp.sqrt(params['bn1_var'] + BN_EPS)
    y = (y - params['bn1_mean'][None, :, None]) * s1[None, :, None] + params['bn1_beta'][None, :, None]
    y = y.reshape(B, ENCODE_DIM, CONV_OUT_T, 2).max(axis=-1)         # MaxPool1d(2,2)
    h = y.reshape(B, -1)
    hp = lax.Precision.HIGHEST
    mu = jnp.dot(h, params['lin21_w'].T, precision=hp) + params['lin21_b']
    logvar = jnp.dot(h, params['lin22_w'].T, precision=hp) + params['lin22_b']
    z = mu
    d = jnp.maximum(jnp.dot(z, params['dec_lin_w'].T, precision=hp) + params['dec_lin_b'], 0.0)
    s2 = params['bn2_gamma'] / jnp.sqrt(params['bn2_var'] + BN_EPS)
    d = d * s2 + (params['bn2_beta'] - params['bn2_mean'] * s2)
    dv = d.reshape(B, ENCODE_DIM, CONV_OUT_T)
    wt = jnp.flip(params['deconv_w'], axis=2).transpose(1, 0, 2)     # (O, I, K) flipped
    out = lax.conv_general_dilated(dv, wt, (1,), [(1, 2)], lhs_dilation=(2,),
                                   dimension_numbers=('NCH', 'OIH', 'NCH'),
                                   precision=lax.Precision.HIGHEST)
    out = out + params['deconv_b'][None, :, None]
    return out, mu, logvar


if __name__ == "__main__":
    feature_dim = 5    # small featureDim
    batch = 10         # exercises multi-block grid (G=2) and batch padding (10 -> 16)
    key = jax.random.PRNGKey(0)
    pkey, xkey = jax.random.split(key)
    params = init_params(pkey, feature_dim)
    prep = prepare_params(params, tb=TB)
    x = jax.random.normal(xkey, (batch, feature_dim, SEQ_LEN), jnp.float32)

    fwd = jax.jit(functools.partial(forward, prep))
    out, mu, logvar = fwd(x)
    jax.block_until_ready((out, mu, logvar))

    ref_out, ref_mu, ref_logvar = reference_forward(params, x)
    np.testing.assert_allclose(np.asarray(mu), np.asarray(ref_mu), rtol=2e-3, atol=2e-3)
    np.testing.assert_allclose(np.asarray(logvar), np.asarray(ref_logvar), rtol=2e-3, atol=2e-3)
    np.testing.assert_allclose(np.asarray(out), np.asarray(ref_out), rtol=2e-3, atol=2e-3)
    assert out.shape == (batch, feature_dim, SEQ_LEN)
    assert mu.shape == (batch, LATENT_DIM) and logvar.shape == (batch, LATENT_DIM)
    print("KERNEL_OK")
</pallas_src>

<mosaic_0001>
module attributes {stable_mosaic.version = 11 : i64} {
  func.func @_fused_vae_kernel(%arg0: i32, %arg1: memref<1x2x120x60xf32, #tpu.memory_space<vmem>>, %arg2: memref<160x120xf32, #tpu.memory_space<vmem>>, %arg3: memref<160x3xf32, #tpu.memory_space<vmem>>, %arg4: memref<60x400xf32, #tpu.memory_space<vmem>>, %arg5: memref<160x400xf32, #tpu.memory_space<vmem>>, %arg6: memref<8x160xf32, #tpu.memory_space<vmem>>, %arg7: memref<400x20xf32, #tpu.memory_space<vmem>>, %arg8: memref<1x20xf32, #tpu.memory_space<vmem>>, %arg9: memref<10x200xf32, #tpu.memory_space<vmem>>, %arg10: memref<160x8xf32, #tpu.memory_space<vmem>>, %arg11: memref<160x200xf32, #tpu.memory_space<vmem>>, %arg12: memref<200x60xf32, #tpu.memory_space<vmem>>, %arg13: memref<3x160x60xf32, #tpu.memory_space<vmem>>, %arg14: memref<3x40x160xf32, #tpu.memory_space<vmem>>, %arg15: memref<3x60x120xf32, #tpu.memory_space<vmem>>, %arg16: memref<40x1xf32, #tpu.memory_space<vmem>>, %arg17: memref<40x120xf32, #tpu.memory_space<vmem>>, %arg18: memref<8x20xf32, #tpu.memory_space<vmem>>) attributes {dimension_semantics = [#tpu.dimension_semantics<parallel>], iteration_bounds = array<i64: 2>, scalar_prefetch = 0 : i64, scratch_operands = 0 : i64, tpu.core_type = #tpu.core_type<tc>, window_params = [{transform_indices = @transform_0, window_bounds = array<i64: 1, 2, 120, 60>}, {pipeline_mode = #tpu.pipeline_mode<synchronous>, transform_indices = @transform_1, window_bounds = array<i64: 160, 120>}, {pipeline_mode = #tpu.pipeline_mode<synchronous>, transform_indices = @transform_2, window_bounds = array<i64: 160, 3>}, {pipeline_mode = #tpu.pipeline_mode<synchronous>, transform_indices = @transform_3, window_bounds = array<i64: 60, 400>}, {pipeline_mode = #tpu.pipeline_mode<synchronous>, transform_indices = @transform_4, window_bounds = array<i64: 160, 400>}, {pipeline_mode = #tpu.pipeline_mode<synchronous>, transform_indices = @transform_5, window_bounds = array<i64: 8, 160>}, {pipeline_mode = #tpu.pipeline_mode<synchronous>, transform_indices = @transform_6, window_bounds = array<i64: 400, 20>}, {pipeline_mode = #tpu.pipeline_mode<synchronous>, transform_indices = @transform_7, window_bounds = array<i64: 1, 20>}, {pipeline_mode = #tpu.pipeline_mode<synchronous>, transform_indices = @transform_8, window_bounds = array<i64: 10, 200>}, {pipeline_mode = #tpu.pipeline_mode<synchronous>, transform_indices = @transform_9, window_bounds = array<i64: 160, 8>}, {pipeline_mode = #tpu.pipeline_mode<synchronous>, transform_indices = @transform_10, window_bounds = array<i64: 160, 200>}, {pipeline_mode = #tpu.pipeline_mode<synchronous>, transform_indices = @transform_11, window_bounds = array<i64: 200, 60>}, {pipeline_mode = #tpu.pipeline_mode<synchronous>, transform_indices = @transform_12, window_bounds = array<i64: 3, 160, 60>}, {pipeline_mode = #tpu.pipeline_mode<synchronous>, transform_indices = @transform_13, window_bounds = array<i64: 3, 40, 160>}, {pipeline_mode = #tpu.pipeline_mode<synchronous>, transform_indices = @transform_14, window_bounds = array<i64: 3, 60, 120>}, {pipeline_mode = #tpu.pipeline_mode<synchronous>, transform_indices = @transform_15, window_bounds = array<i64: 40, 1>}, {transform_indices = @transform_16, window_bounds = array<i64: 40, 120>}, {transform_indices = @transform_17, window_bounds = array<i64: 8, 20>}]} {
    %c0 = arith.constant 0 : index
    %c0_0 = arith.constant 0 : index
    %0 = vector.load %arg2[%c0, %c0_0] : memref<160x120xf32, #tpu.memory_space<vmem>>, vector<160x120xf32>
    %c0_1 = arith.constant 0 : index
    %c0_2 = arith.constant 0 : index
    %1 = vector.load %arg3[%c0_1, %c0_2] : memref<160x3xf32, #tpu.memory_space<vmem>>, vector<160x1xf32>
    %c0_3 = arith.constant 0 : index
    %c1 = arith.constant 1 : index
    %2 = vector.load %arg3[%c0_3, %c1] : memref<160x3xf32, #tpu.memory_space<vmem>>, vector<160x1xf32>
    %c0_4 = arith.constant 0 : index
    %c2 = arith.constant 2 : index
    %3 = vector.load %arg3[%c0_4, %c2] : memref<160x3xf32, #tpu.memory_space<vmem>>, vector<160x1xf32>
    %c0_5 = arith.constant 0 : index
    %c0_6 = arith.constant 0 : index
    %c0_7 = arith.constant 0 : index
    %c0_8 = arith.constant 0 : index
    %4 = vector.load %arg1[%c0_5, %c0_6, %c0_7, %c0_8] : memref<1x2x120x60xf32, #tpu.memory_space<vmem>>, vector<1x1x120x60xf32>
    %5 = vector.shape_cast %4 : vector<1x1x120x60xf32> to vector<120x60xf32>
    %cst = arith.constant dense<0.000000e+00> : vector<160x60xf32>
    %6 = tpu.matmul %0, %5, %cst {dimension_numbers = #tpu.dot_dimension_numbers<[1], [0], [0], [1], [0, 0, 1, 1], [], []>} : vector<160x120xf32>, vector<120x60xf32>, vector<160x60xf32> -> vector<160x60xf32>
    %c0_9 = arith.constant 0 : index
    %c1_10 = arith.constant 1 : index
    %c0_11 = arith.constant 0 : index
    %c0_12 = arith.constant 0 : index
    %7 = vector.load %arg1[%c0_9, %c1_10, %c0_11, %c0_12] : memref<1x2x120x60xf32, #tpu.memory_space<vmem>>, vector<1x1x120x60xf32>
    %8 = vector.shape_cast %7 : vector<1x1x120x60xf32> to vector<120x60xf32>
    %cst_13 = arith.constant dense<0.000000e+00> : vector<160x60xf32>
    %9 = tpu.matmul %0, %8, %cst_13 {dimension_numbers = #tpu.dot_dimension_numbers<[1], [0], [0], [1], [0, 0, 1, 1], [], []>} : vector<160x120xf32>, vector<120x60xf32>, vector<160x60xf32> -> vector<160x60xf32>
    %10 = vector.broadcast %1 : vector<160x1xf32> to vector<160x60xf32>
    %11 = arith.addf %6, %10 : vector<160x60xf32>
    %cst_14 = arith.constant 0.000000e+00 : f32
    %12 = vector.broadcast %cst_14 : f32 to vector<160x60xf32>
    %13 = arith.maximumf %11, %12 : vector<160x60xf32>
    %14 = vector.broadcast %2 : vector<160x1xf32> to vector<160x60xf32>
    %15 = arith.mulf %13, %14 : vector<160x60xf32>
    %16 = vector.broadcast %3 : vector<160x1xf32> to vector<160x60xf32>
    %17 = arith.addf %15, %16 : vector<160x60xf32>
    %18 = vector.broadcast %1 : vector<160x1xf32> to vector<160x60xf32>
    %19 = arith.addf %9, %18 : vector<160x60xf32>
    %cst_15 = arith.constant 0.000000e+00 : f32
    %20 = vector.broadcast %cst_15 : f32 to vector<160x60xf32>
    %21 = arith.maximumf %19, %20 : vector<160x60xf32>
    %22 = vector.broadcast %2 : vector<160x1xf32> to vector<160x60xf32>
    %23 = arith.mulf %21, %22 : vector<160x60xf32>
    %24 = vector.broadcast %3 : vector<160x1xf32> to vector<160x60xf32>
    %25 = arith.addf %23, %24 : vector<160x60xf32>
    %26 = arith.maximumf %17, %25 : vector<160x60xf32>
    %c0_16 = arith.constant 0 : index
    %c0_17 = arith.constant 0 : index
    %27 = vector.load %arg4[%c0_16, %c0_17] : memref<60x400xf32, #tpu.memory_space<vmem>>, vector<60x400xf32>
    %cst_18 = arith.constant dense<0.000000e+00> : vector<160x400xf32>
    %28 = tpu.matmul %26, %27, %cst_18 {dimension_numbers = #tpu.dot_dimension_numbers<[1], [0], [0], [1], [0, 0, 1, 1], [], []>} : vector<160x60xf32>, vector<60x400xf32>, vector<160x400xf32> -> vector<160x400xf32>
    %c0_19 = arith.constant 0 : index
    %c0_20 = arith.constant 0 : index
    %29 = vector.load %arg5[%c0_19, %c0_20] : memref<160x400xf32, #tpu.memory_space<vmem>>, vector<160x400xf32>
    %30 = arith.mulf %28, %29 : vector<160x400xf32>
    %c0_21 = arith.constant 0 : index
    %c0_22 = arith.constant 0 : index
    %31 = vector.load %arg6[%c0_21, %c0_22] : memref<8x160xf32, #tpu.memory_space<vmem>>, vector<8x160xf32>
    %cst_23 = arith.constant dense<0.000000e+00> : vector<8x400xf32>
    %32 = tpu.matmul %31, %30, %cst_23 {dimension_numbers = #tpu.dot_dimension_numbers<[1], [0], [0], [1], [0, 0, 1, 1], [], []>} : vector<8x160xf32>, vector<160x400xf32>, vector<8x400xf32> -> vector<8x400xf32>
    %c0_24 = arith.constant 0 : index
    %c0_25 = arith.constant 0 : index
    %33 = vector.load %arg7[%c0_24, %c0_25] : memref<400x20xf32, #tpu.memory_space<vmem>>, vector<400x20xf32>
    %cst_26 = arith.constant dense<0.000000e+00> : vector<8x20xf32>
    %34 = tpu.matmul %32, %33, %cst_26 {dimension_numbers = #tpu.dot_dimension_numbers<[1], [0], [0], [1], [0, 0, 1, 1], [], []>} : vector<8x400xf32>, vector<400x20xf32>, vector<8x20xf32> -> vector<8x20xf32>
    %c0_27 = arith.constant 0 : index
    %c0_28 = arith.constant 0 : index
    %35 = vector.load %arg8[%c0_27, %c0_28] : memref<1x20xf32, #tpu.memory_space<vmem>>, vector<1x20xf32>
    %36 = vector.broadcast %35 : vector<1x20xf32> to vector<8x20xf32>
    %37 = arith.addf %34, %36 : vector<8x20xf32>
    %c0_29 = arith.constant 0 : index
    %c0_30 = arith.constant 0 : index
    %38 = vector.load %arg18[%c0_29, %c0_30] : memref<8x20xf32, #tpu.memory_space<vmem>>, vector<8x20xf32>
    tpu.vector_store %arg18[%c0_29, %c0_30], %37 {strides = array<i32>} : memref<8x20xf32, #tpu.memory_space<vmem>>, vector<8x20xf32>,
    %39 = vector.extract_strided_slice %37 {offsets = [0, 0], sizes = [8, 10], strides = [1, 1]} : vector<8x20xf32> to vector<8x10xf32>
    %c0_31 = arith.constant 0 : index
    %c0_32 = arith.constant 0 : index
    %40 = vector.load %arg9[%c0_31, %c0_32] : memref<10x200xf32, #tpu.memory_space<vmem>>, vector<10x200xf32>
    %cst_33 = arith.constant dense<0.000000e+00> : vector<8x200xf32>
    %41 = tpu.matmul %39, %40, %cst_33 {dimension_numbers = #tpu.dot_dimension_numbers<[1], [0], [0], [1], [0, 0, 1, 1], [], []>} : vector<8x10xf32>, vector<10x200xf32>, vector<8x200xf32> -> vector<8x200xf32>
    %c0_34 = arith.constant 0 : index
    %c0_35 = arith.constant 0 : index
    %42 = vector.load %arg10[%c0_34, %c0_35] : memref<160x8xf32, #tpu.memory_space<vmem>>, vector<160x8xf32>
    %cst_36 = arith.constant dense<0.000000e+00> : vector<160x200xf32>
    %43 = tpu.matmul %42, %41, %cst_36 {dimension_numbers = #tpu.dot_dimension_numbers<[1], [0], [0], [1], [0, 0, 1, 1], [], []>} : vector<160x8xf32>, vector<8x200xf32>, vector<160x200xf32> -> vector<160x200xf32>
    %c0_37 = arith.constant 0 : index
    %c0_38 = arith.constant 0 : index
    %44 = vector.load %arg11[%c0_37, %c0_38] : memref<160x200xf32, #tpu.memory_space<vmem>>, vector<160x200xf32>
    %45 = arith.mulf %43, %44 : vector<160x200xf32>
    %c0_39 = arith.constant 0 : index
    %c0_40 = arith.constant 0 : index
    %46 = vector.load %arg12[%c0_39, %c0_40] : memref<200x60xf32, #tpu.memory_space<vmem>>, vector<200x60xf32>
    %cst_41 = arith.constant dense<0.000000e+00> : vector<160x60xf32>
    %47 = tpu.matmul %45, %46, %cst_41 {dimension_numbers = #tpu.dot_dimension_numbers<[1], [0], [0], [1], [0, 0, 1, 1], [], []>} : vector<160x200xf32>, vector<200x60xf32>, vector<160x60xf32> -> vector<160x60xf32>
    %c0_42 = arith.constant 0 : index
    %c0_43 = arith.constant 0 : index
    %c0_44 = arith.constant 0 : index
    %48 = vector.load %arg13[%c0_42, %c0_43, %c0_44] : memref<3x160x60xf32, #tpu.memory_space<vmem>>, vector<1x160x60xf32>
    %49 = vector.shape_cast %48 : vector<1x160x60xf32> to vector<160x60xf32>
    %50 = arith.addf %47, %49 : vector<160x60xf32>
    %cst_45 = arith.constant 0.000000e+00 : f32
    %51 = vector.broadcast %cst_45 : f32 to vector<160x60xf32>
    %52 = arith.maximumf %50, %51 : vector<160x60xf32>
    %c1_46 = arith.constant 1 : index
    %c0_47 = arith.constant 0 : index
    %c0_48 = arith.constant 0 : index
    %53 = vector.load %arg13[%c1_46, %c0_47, %c0_48] : memref<3x160x60xf32, #tpu.memory_space<vmem>>, vector<1x160x60xf32>
    %54 = vector.shape_cast %53 : vector<1x160x60xf32> to vector<160x60xf32>
    %55 = arith.mulf %52, %54 : vector<160x60xf32>
    %c2_49 = arith.constant 2 : index
    %c0_50 = arith.constant 0 : index
    %c0_51 = arith.constant 0 : index
    %56 = vector.load %arg13[%c2_49, %c0_50, %c0_51] : memref<3x160x60xf32, #tpu.memory_space<vmem>>, vector<1x160x60xf32>
    %57 = vector.shape_cast %56 : vector<1x160x60xf32> to vector<160x60xf32>
    %58 = arith.addf %55, %57 : vector<160x60xf32>
    %c0_52 = arith.constant 0 : index
    %c0_53 = arith.constant 0 : index
    %c0_54 = arith.constant 0 : index
    %59 = vector.load %arg14[%c0_52, %c0_53, %c0_54] : memref<3x40x160xf32, #tpu.memory_space<vmem>>, vector<1x40x160xf32>
    %60 = vector.shape_cast %59 : vector<1x40x160xf32> to vector<40x160xf32>
    %cst_55 = arith.constant dense<0.000000e+00> : vector<40x60xf32>
    %61 = tpu.matmul %60, %58, %cst_55 {dimension_numbers = #tpu.dot_dimension_numbers<[1], [0], [0], [1], [0, 0, 1, 1], [], []>} : vector<40x160xf32>, vector<160x60xf32>, vector<40x60xf32> -> vector<40x60xf32>
    %c1_56 = arith.constant 1 : index
    %c0_57 = arith.constant 0 : index
    %c0_58 = arith.constant 0 : index
    %62 = vector.load %arg14[%c1_56, %c0_57, %c0_58] : memref<3x40x160xf32, #tpu.memory_space<vmem>>, vector<1x40x160xf32>
    %63 = vector.shape_cast %62 : vector<1x40x160xf32> to vector<40x160xf32>
    %cst_59 = arith.constant dense<0.000000e+00> : vector<40x60xf32>
    %64 = tpu.matmul %63, %58, %cst_59 {dimension_numbers = #tpu.dot_dimension_numbers<[1], [0], [0], [1], [0, 0, 1, 1], [], []>} : vector<40x160xf32>, vector<160x60xf32>, vector<40x60xf32> -> vector<40x60xf32>
    %c2_60 = arith.constant 2 : index
    %c0_61 = arith.constant 0 : index
    %c0_62 = arith.constant 0 : index
    %65 = vector.load %arg14[%c2_60, %c0_61, %c0_62] : memref<3x40x160xf32, #tpu.memory_space<vmem>>, vector<1x40x160xf32>
    %66 = vector.shape_cast %65 : vector<1x40x160xf32> to vector<40x160xf32>
    %cst_63 = arith.constant dense<0.000000e+00> : vector<40x60xf32>
    %67 = tpu.matmul %66, %58, %cst_63 {dimension_numbers = #tpu.dot_dimension_numbers<[1], [0], [0], [1], [0, 0, 1, 1], [], []>} : vector<40x160xf32>, vector<160x60xf32>, vector<40x60xf32> -> vector<40x60xf32>
    %c1_64 = arith.constant 1 : index
    %c0_65 = arith.constant 0 : index
    %c0_66 = arith.constant 0 : index
    %68 = vector.load %arg15[%c1_64, %c0_65, %c0_66] : memref<3x60x120xf32, #tpu.memory_space<vmem>>, vector<1x60x120xf32>
    %69 = vector.shape_cast %68 : vector<1x60x120xf32> to vector<60x120xf32>
    %cst_67 = arith.constant dense<0.000000e+00> : vector<40x120xf32>
    %70 = tpu.matmul %64, %69, %cst_67 {dimension_numbers = #tpu.dot_dimension_numbers<[1], [0], [0], [1], [0, 0, 1, 1], [], []>} : vector<40x60xf32>, vector<60x120xf32>, vector<40x120xf32> -> vector<40x120xf32>
    %c0_68 = arith.constant 0 : index
    %c0_69 = arith.constant 0 : index
    %c0_70 = arith.constant 0 : index
    %71 = vector.load %arg15[%c0_68, %c0_69, %c0_70] : memref<3x60x120xf32, #tpu.memory_space<vmem>>, vector<1x60x120xf32>
    %72 = vector.shape_cast %71 : vector<1x60x120xf32> to vector<60x120xf32>
    %cst_71 = arith.constant dense<0.000000e+00> : vector<40x120xf32>
    %73 = tpu.matmul %61, %72, %cst_71 {dimension_numbers = #tpu.dot_dimension_numbers<[1], [0], [0], [1], [0, 0, 1, 1], [], []>} : vector<40x60xf32>, vector<60x120xf32>, vector<40x120xf32> -> vector<40x120xf32>
    %74 = arith.addf %70, %73 : vector<40x120xf32>
    %c2_72 = arith.constant 2 : index
    %c0_73 = arith.constant 0 : index
    %c0_74 = arith.constant 0 : index
    %75 = vector.load %arg15[%c2_72, %c0_73, %c0_74] : memref<3x60x120xf32, #tpu.memory_space<vmem>>, vector<1x60x120xf32>
    %76 = vector.shape_cast %75 : vector<1x60x120xf32> to vector<60x120xf32>
    %cst_75 = arith.constant dense<0.000000e+00> : vector<40x120xf32>
    %77 = tpu.matmul %67, %76, %cst_75 {dimension_numbers = #tpu.dot_dimension_numbers<[1], [0], [0], [1], [0, 0, 1, 1], [], []>} : vector<40x60xf32>, vector<60x120xf32>, vector<40x120xf32> -> vector<40x120xf32>
    %78 = arith.addf %74, %77 : vector<40x120xf32>
    %c0_76 = arith.constant 0 : index
    %c0_77 = arith.constant 0 : index
    %79 = vector.load %arg16[%c0_76, %c0_77] : memref<40x1xf32, #tpu.memory_space<vmem>>, vector<40x1xf32>
    %80 = vector.broadcast %79 : vector<40x1xf32> to vector<40x120xf32>
    %81 = arith.addf %78, %80 : vector<40x120xf32>
    %c0_78 = arith.constant 0 : index
    %c0_79 = arith.constant 0 : index
    %82 = vector.load %arg17[%c0_78, %c0_79] : memref<40x120xf32, #tpu.memory_space<vmem>>, vector<40x120xf32>
    tpu.vector_store %arg17[%c0_78, %c0_79], %81 {strides = array<i32>} : memref<40x120xf32, #tpu.memory_space<vmem>>, vector<40x120xf32>,
    return
  }
  func.func @transform_0(%arg0: i32) -> (i32, i32, i32, i32) {
    %c0_i32 = arith.constant 0 : i32
    %c0_i32_0 = arith.constant 0 : i32
    %c0_i32_1 = arith.constant 0 : i32
    %c0_i32_2 = arith.constant 0 : i32
    return %arg0, %c0_i32, %c0_i32_0, %c0_i32_1 : i32, i32, i32, i32
  }
  func.func @transform_1(%arg0: i32) -> (i32, i32) {
    %c0_i32 = arith.constant 0 : i32
    %c0_i32_0 = arith.constant 0 : i32
    %c0_i32_1 = arith.constant 0 : i32
    return %c0_i32, %c0_i32_0 : i32, i32
  }
  func.func @transform_2(%arg0: i32) -> (i32, i32) {
    %c0_i32 = arith.constant 0 : i32
    %c0_i32_0 = arith.constant 0 : i32
    %c0_i32_1 = arith.constant 0 : i32
    return %c0_i32, %c0_i32_0 : i32, i32
  }
  func.func @transform_3(%arg0: i32) -> (i32, i32) {
    %c0_i32 = arith.constant 0 : i32
    %c0_i32_0 = arith.constant 0 : i32
    %c0_i32_1 = arith.constant 0 : i32
    return %c0_i32, %c0_i32_0 : i32, i32
  }
  func.func @transform_4(%arg0: i32) -> (i32, i32) {
    %c0_i32 = arith.constant 0 : i32
    %c0_i32_0 = arith.constant 0 : i32
    %c0_i32_1 = arith.constant 0 : i32
    return %c0_i32, %c0_i32_0 : i32, i32
  }
  func.func @transform_5(%arg0: i32) -> (i32, i32) {
    %c0_i32 = arith.constant 0 : i32
    %c0_i32_0 = arith.constant 0 : i32
    %c0_i32_1 = arith.constant 0 : i32
    return %c0_i32, %c0_i32_0 : i32, i32
  }
  func.func @transform_6(%arg0: i32) -> (i32, i32) {
    %c0_i32 = arith.constant 0 : i32
    %c0_i32_0 = arith.constant 0 : i32
    %c0_i32_1 = arith.constant 0 : i32
    return %c0_i32, %c0_i32_0 : i32, i32
  }
  func.func @transform_7(%arg0: i32) -> (i32, i32) {
    %c0_i32 = arith.constant 0 : i32
    %c0_i32_0 = arith.constant 0 : i32
    %c0_i32_1 = arith.constant 0 : i32
    return %c0_i32, %c0_i32_0 : i32, i32
  }
  func.func @transform_8(%arg0: i32) -> (i32, i32) {
    %c0_i32 = arith.constant 0 : i32
    %c0_i32_0 = arith.constant 0 : i32
    %c0_i32_1 = arith.constant 0 : i32
    return %c0_i32, %c0_i32_0 : i32, i32
  }
  func.func @transform_9(%arg0: i32) -> (i32, i32) {
    %c0_i32 = arith.constant 0 : i32
    %c0_i32_0 = arith.constant 0 : i32
    %c0_i32_1 = arith.constant 0 : i32
    return %c0_i32, %c0_i32_0 : i32, i32
  }
  func.func @transform_10(%arg0: i32) -> (i32, i32) {
    %c0_i32 = arith.constant 0 : i32
    %c0_i32_0 = arith.constant 0 : i32
    %c0_i32_1 = arith.constant 0 : i32
    return %c0_i32, %c0_i32_0 : i32, i32
  }
  func.func @transform_11(%arg0: i32) -> (i32, i32) {
    %c0_i32 = arith.constant 0 : i32
    %c0_i32_0 = arith.constant 0 : i32
    %c0_i32_1 = arith.constant 0 : i32
    return %c0_i32, %c0_i32_0 : i32, i32
  }
  func.func @transform_12(%arg0: i32) -> (i32, i32, i32) {
    %c0_i32 = arith.constant 0 : i32
    %c0_i32_0 = arith.constant 0 : i32
    %c0_i32_1 = arith.constant 0 : i32
    %c0_i32_2 = arith.constant 0 : i32
    return %c0_i32, %c0_i32_0, %c0_i32_1 : i32, i32, i32
  }
  func.func @transform_13(%arg0: i32) -> (i32, i32, i32) {
    %c0_i32 = arith.constant 0 : i32
    %c0_i32_0 = arith.constant 0 : i32
    %c0_i32_1 = arith.constant 0 : i32
    %c0_i32_2 = arith.constant 0 : i32
    return %c0_i32, %c0_i32_0, %c0_i32_1 : i32, i32, i32
  }
  func.func @transform_14(%arg0: i32) -> (i32, i32, i32) {
    %c0_i32 = arith.constant 0 : i32
    %c0_i32_0 = arith.constant 0 : i32
    %c0_i32_1 = arith.constant 0 : i32
    %c0_i32_2 = arith.constant 0 : i32
    return %c0_i32, %c0_i32_0, %c0_i32_1 : i32, i32, i32
  }
  func.func @transform_15(%arg0: i32) -> (i32, i32) {
    %c0_i32 = arith.constant 0 : i32
    %c0_i32_0 = arith.constant 0 : i32
    %c0_i32_1 = arith.constant 0 : i32
    return %c0_i32, %c0_i32_0 : i32, i32
  }
  func.func @transform_16(%arg0: i32) -> (i32, i32) {
    %c0_i32 = arith.constant 0 : i32
    %c0_i32_0 = arith.constant 0 : i32
    return %arg0, %c0_i32 : i32, i32
  }
  func.func @transform_17(%arg0: i32) -> (i32, i32) {
    %c0_i32 = arith.constant 0 : i32
    %c0_i32_0 = arith.constant 0 : i32
    return %arg0, %c0_i32 : i32, i32
  }
}

</mosaic_0001>

<llo_original>
// kernel: forward.1
$region0: #{forward.1}
  #allocation0 [shape = 'u32[]', space=smem, size = 0x4, offset = 0x4, fixed_abs, tag = 'smem constant byte address 0x4 - core index']
  #allocation1 [shape = 'u32[144,128]{1,0:T(1,128)}', space=vmem, size = 0x12000, scoped, tag = 'internal scratch']
  %s0 = inlined_call_operand.vmem [shape: f32[2,2,120,60], index: 0, kind: input, shape index: {}]
  %s1 = inlined_call_operand.vmem [shape: f32[160,120], index: 1, kind: input, shape index: {}]
  %s2 = inlined_call_operand.vmem [shape: f32[160,3], index: 2, kind: input, shape index: {}]
  %s3 = inlined_call_operand.vmem [shape: f32[60,400], index: 3, kind: input, shape index: {}]
  %s4 = inlined_call_operand.vmem [shape: f32[160,400], index: 4, kind: input, shape index: {}]
  %s5 = inlined_call_operand.vmem [shape: f32[8,160], index: 5, kind: input, shape index: {}]
  %s6 = inlined_call_operand.vmem [shape: f32[400,20], index: 6, kind: input, shape index: {}]
  %s7 = inlined_call_operand.vmem [shape: f32[1,20], index: 7, kind: input, shape index: {}]
  %s8 = inlined_call_operand.vmem [shape: f32[10,200], index: 8, kind: input, shape index: {}]
  %s9 = inlined_call_operand.vmem [shape: f32[160,8], index: 9, kind: input, shape index: {}]
  %s10 = inlined_call_operand.vmem [shape: f32[160,200], index: 10, kind: input, shape index: {}]
  %s11 = inlined_call_operand.vmem [shape: f32[200,60], index: 11, kind: input, shape index: {}]
  %s12 = inlined_call_operand.vmem [shape: f32[3,160,60], index: 12, kind: input, shape index: {}]
  %s13 = inlined_call_operand.vmem [shape: f32[3,40,160], index: 13, kind: input, shape index: {}]
  %s14 = inlined_call_operand.vmem [shape: f32[3,60,120], index: 14, kind: input, shape index: {}]
  %s15 = inlined_call_operand.vmem [shape: f32[40,1], index: 15, kind: input, shape index: {}]
  %s16 = inlined_call_operand.vmem [shape: f32[80,120], index: 16, kind: output, shape index: {0}]
  %s17 = inlined_call_operand.vmem [shape: f32[16,20], index: 17, kind: output, shape index: {1}]
  %18 = xla_tuple %s16, %s17
  %s19 = sld [smem:[#allocation0]]
  $region105: #{forward.1} parent=0
    _
  %s21 = ssub.s32 1, %s19
  %s22 = scalar_select 0, %s21, %s19
  loop: start=0, step=1, limit=4
  $region2: #{forward.1} parent=0 // loop_pre_header
    _
  $region3: #{forward.1} parent=0 // loop_header
    %s24 = sphi 0, %s28
    %p25 = scmp.ge.s32.totalorder %s24, 4
    %s34 = sphi 0, %s36
    %s37 = sphi 0, %s34
    %s38 = sphi 0, %s37
    %s54 = sphi 0, %s38
    %s58 = sphi 0, %s58
    %s60 = sphi 0, %s58
    %s61 = sphi 0, %s60
    %s75 = sphi 0, %s61
    %s79 = sphi 0, %s79
    %s81 = sphi 0, %s79
    %s82 = sphi 0, %s81
    %s96 = sphi 0, %s82
    %s100 = sphi 0, %s100
    %s102 = sphi 0, %s100
    %s103 = sphi 0, %s102
    %s117 = sphi 0, %s103
    %s121 = sphi 0, %s121
    %s123 = sphi 0, %s121
    %s124 = sphi 0, %s123
    %s138 = sphi 0, %s124
    %s142 = sphi 0, %s142
    %s144 = sphi 0, %s142
    %s145 = sphi 0, %s144
    %s159 = sphi 0, %s145
    %s163 = sphi 0, %s163
    %s165 = sphi 0, %s163
    %s166 = sphi 0, %s165
    %s180 = sphi 0, %s166
    %s184 = sphi 0, %s184
    %s186 = sphi 0, %s184
    %s187 = sphi 0, %s186
    %s201 = sphi 0, %s187
    %s205 = sphi 0, %s205
    %s207 = sphi 0, %s205
    %s208 = sphi 0, %s207
    %s222 = sphi 0, %s208
    %s226 = sphi 0, %s226
    %s228 = sphi 0, %s226
    %s229 = sphi 0, %s228
    %s243 = sphi 0, %s229
    %s247 = sphi 0, %s247
    %s249 = sphi 0, %s247
    %s250 = sphi 0, %s249
    %s264 = sphi 0, %s250
    %s268 = sphi 0, %s268
    %s270 = sphi 0, %s268
    %s271 = sphi 0, %s270
    %s285 = sphi 0, %s271
    %s289 = sphi 0, %s289
    %s291 = sphi 0, %s289
    %s292 = sphi 0, %s291
    %s306 = sphi 0, %s292
    %s310 = sphi 0, %s310
    %s312 = sphi 0, %s310
    %s313 = sphi 0, %s312
    %s327 = sphi 0, %s313
    %s331 = sphi 0, %s331
    %s333 = sphi 0, %s331
    %s334 = sphi 0, %s333
    %s348 = sphi 0, %s334
    %s352 = sphi 0, %s352
    %s354 = sphi 0, %s352
    %s355 = sphi 0, %s354
    %s369 = sphi 0, %s355
    %s375 = sphi 0, %s377
    %s378 = sphi 0, %s375
    %s379 = sphi 0, %s378
    %s395 = sphi 0, %s379
    %s401 = sphi 0, %s403
    %s404 = sphi 0, %s401
    %s405 = sphi 0, %s404
    %s421 = sphi 0, %s405
  $region4: #{forward.1} parent=0 // loop_header_branch
    %27 = sbr.rel (%p25) target = $region8
  $region5: #{forward.1} parent=0 // loop_body
    %s29 = ssub.s32 %s24, 1
    %s30 = ssub.s32 %s24, 2
    %s31 = sadd.s32 %s24, 1
    %s32 = ssub.s32 %s24, %s31
    %p33 = scmp.eq.s32.totalorder %s32, 0
    %s35 = sadd.s32 %s34, 1
    %s36 = scalar_select %p33, %s34, %s35
    %p39 = pneg %p33
    %p40 = scmp.eq.s32.totalorder %s24, 1
    %p41 = por %p39, %p40
    %p42 = scmp.ne.s32.totalorder %s34, %s37
    %p43 = scmp.eq.s32.totalorder %s24, 0
    %p44 = por %p42, %p43
    %p45 = scmp.ne.s32.totalorder %s34, %s37
    %p46 = scmp.eq.s32.totalorder %s29, 1
    %p47 = por %p45, %p46
    %p48 = scmp.ne.s32.totalorder %s37, %s38
    %p49 = scmp.eq.s32.totalorder %s29, 0
    %p50 = por %p48, %p49
    %p51 = scmp.ne.s32.totalorder %s37, %s38
    %p52 = scmp.eq.s32.totalorder %s30, 1
    %p53 = por %p51, %p52
    %p55 = scmp.ne.s32.totalorder %s38, %s54
    %p56 = scmp.eq.s32.totalorder %s30, 0
    %p57 = por %p55, %p56
    %s59 = sadd.s32 %s58, 1
    %p62 = scmp.eq.s32.totalorder %s24, 1
    %p63 = scmp.ne.s32.totalorder %s58, %s60
    %p64 = scmp.eq.s32.totalorder %s24, 0
    %p65 = por %p63, %p64
    %p66 = scmp.ne.s32.totalorder %s58, %s60
    %p67 = scmp.eq.s32.totalorder %s29, 1
    %p68 = por %p66, %p67
    %p69 = scmp.ne.s32.totalorder %s60, %s61
    %p70 = scmp.eq.s32.totalorder %s29, 0
    %p71 = por %p69, %p70
    %p72 = scmp.ne.s32.totalorder %s60, %s61
    %p73 = scmp.eq.s32.totalorder %s30, 1
    %p74 = por %p72, %p73
    %p76 = scmp.ne.s32.totalorder %s61, %s75
    %p77 = scmp.eq.s32.totalorder %s30, 0
    %p78 = por %p76, %p77
    %s80 = sadd.s32 %s79, 1
    %p83 = scmp.eq.s32.totalorder %s24, 1
    %p84 = scmp.ne.s32.totalorder %s79, %s81
    %p85 = scmp.eq.s32.totalorder %s24, 0
    %p86 = por %p84, %p85
    %p87 = scmp.ne.s32.totalorder %s79, %s81
    %p88 = scmp.eq.s32.totalorder %s29, 1
    %p89 = por %p87, %p88
    %p90 = scmp.ne.s32.totalorder %s81, %s82
    %p91 = scmp.eq.s32.totalorder %s29, 0
    %p92 = por %p90, %p91
    %p93 = scmp.ne.s32.totalorder %s81, %s82
    %p94 = scmp.eq.s32.totalorder %s30, 1
    %p95 = por %p93, %p94
    %p97 = scmp.ne.s32.totalorder %s82, %s96
    %p98 = scmp.eq.s32.totalorder %s30, 0
    %p99 = por %p97, %p98
    %s101 = sadd.s32 %s100, 1
    %p104 = scmp.eq.s32.totalorder %s24, 1
    %p105 = scmp.ne.s32.totalorder %s100, %s102
    %p106 = scmp.eq.s32.totalorder %s24, 0
    %p107 = por %p105, %p106
    %p108 = scmp.ne.s32.totalorder %s100, %s102
    %p109 = scmp.eq.s32.totalorder %s29, 1
    %p110 = por %p108, %p109
    %p111 = scmp.ne.s32.totalorder %s102, %s103
    %p112 = scmp.eq.s32.totalorder %s29, 0
    %p113 = por %p111, %p112
    %p114 = scmp.ne.s32.totalorder %s102, %s103
    %p115 = scmp.eq.s32.totalorder %s30, 1
    %p116 = por %p114, %p115
    %p118 = scmp.ne.s32.totalorder %s103, %s117
    %p119 = scmp.eq.s32.totalorder %s30, 0
    %p120 = por %p118, %p119
    %s122 = sadd.s32 %s121, 1
    %p125 = scmp.eq.s32.totalorder %s24, 1
    %p126 = scmp.ne.s32.totalorder %s121, %s123
    %p127 = scmp.eq.s32.totalorder %s24, 0
    %p128 = por %p126, %p127
    %p129 = scmp.ne.s32.totalorder %s121, %s123
    %p130 = scmp.eq.s32.totalorder %s29, 1
    %p131 = por %p129, %p130
    %p132 = scmp.ne.s32.totalorder %s123, %s124
    %p133 = scmp.eq.s32.totalorder %s29, 0
    %p134 = por %p132, %p133
    %p135 = scmp.ne.s32.totalorder %s123, %s124
    %p136 = scmp.eq.s32.totalorder %s30, 1
    %p137 = por %p135, %p136
    %p139 = scmp.ne.s32.totalorder %s124, %s138
    %p140 = scmp.eq.s32.totalorder %s30, 0
    %p141 = por %p139, %p140
    %s143 = sadd.s32 %s142, 1
    %p146 = scmp.eq.s32.totalorder %s24, 1
    %p147 = scmp.ne.s32.totalorder %s142, %s144
    %p148 = scmp.eq.s32.totalorder %s24, 0
    %p149 = por %p147, %p148
    %p150 = scmp.ne.s32.totalorder %s142, %s144
    %p151 = scmp.eq.s32.totalorder %s29, 1
    %p152 = por %p150, %p151
    %p153 = scmp.ne.s32.totalorder %s144, %s145
    %p154 = scmp.eq.s32.totalorder %s29, 0
    %p155 = por %p153, %p154
    %p156 = scmp.ne.s32.totalorder %s144, %s145
    %p157 = scmp.eq.s32.totalorder %s30, 1
    %p158 = por %p156, %p157
    %p160 = scmp.ne.s32.totalorder %s145, %s159
    %p161 = scmp.eq.s32.totalorder %s30, 0
    %p162 = por %p160, %p161
    %s164 = sadd.s32 %s163, 1
    %p167 = scmp.eq.s32.totalorder %s24, 1
    %p168 = scmp.ne.s32.totalorder %s163, %s165
    %p169 = scmp.eq.s32.totalorder %s24, 0
    %p170 = por %p168, %p169
    %p171 = scmp.ne.s32.totalorder %s163, %s165
    %p172 = scmp.eq.s32.totalorder %s29, 1
    %p173 = por %p171, %p172
    %p174 = scmp.ne.s32.totalorder %s165, %s166
    %p175 = scmp.eq.s32.totalorder %s29, 0
    %p176 = por %p174, %p175
    %p177 = scmp.ne.s32.totalorder %s165, %s166
    %p178 = scmp.eq.s32.totalorder %s30, 1
    %p179 = por %p177, %p178
    %p181 = scmp.ne.s32.totalorder %s166, %s180
    %p182 = scmp.eq.s32.totalorder %s30, 0
    %p183 = por %p181, %p182
    %s185 = sadd.s32 %s184, 1
    %p188 = scmp.eq.s32.totalorder %s24, 1
    %p189 = scmp.ne.s32.totalorder %s184, %s186
    %p190 = scmp.eq.s32.totalorder %s24, 0
    %p191 = por %p189, %p190
    %p192 = scmp.ne.s32.totalorder %s184, %s186
    %p193 = scmp.eq.s32.totalorder %s29, 1
    %p194 = por %p192, %p193
    %p195 = scmp.ne.s32.totalorder %s186, %s187
    %p196 = scmp.eq.s32.totalorder %s29, 0
    %p197 = por %p195, %p196
    %p198 = scmp.ne.s32.totalorder %s186, %s187
    %p199 = scmp.eq.s32.totalorder %s30, 1
    %p200 = por %p198, %p199
    %p202 = scmp.ne.s32.totalorder %s187, %s201
    %p203 = scmp.eq.s32.totalorder %s30, 0
    %p204 = por %p202, %p203
    %s206 = sadd.s32 %s205, 1
    %p209 = scmp.eq.s32.totalorder %s24, 1
    %p210 = scmp.ne.s32.totalorder %s205, %s207
    %p211 = scmp.eq.s32.totalorder %s24, 0
    %p212 = por %p210, %p211
    %p213 = scmp.ne.s32.totalorder %s205, %s207
    %p214 = scmp.eq.s32.totalorder %s29, 1
    %p215 = por %p213, %p214
    %p216 = scmp.ne.s32.totalorder %s207, %s208
    %p217 = scmp.eq.s32.totalorder %s29, 0
    %p218 = por %p216, %p217
    %p219 = scmp.ne.s32.totalorder %s207, %s208
    %p220 = scmp.eq.s32.totalorder %s30, 1
    %p221 = por %p219, %p220
    %p223 = scmp.ne.s32.totalorder %s208, %s222
    %p224 = scmp.eq.s32.totalorder %s30, 0
    %p225 = por %p223, %p224
    %s227 = sadd.s32 %s226, 1
    %p230 = scmp.eq.s32.totalorder %s24, 1
    %p231 = scmp.ne.s32.totalorder %s226, %s228
    %p232 = scmp.eq.s32.totalorder %s24, 0
    %p233 = por %p231, %p232
    %p234 = scmp.ne.s32.totalorder %s226, %s228
    %p235 = scmp.eq.s32.totalorder %s29, 1
    %p236 = por %p234, %p235
    %p237 = scmp.ne.s32.totalorder %s228, %s229
    %p238 = scmp.eq.s32.totalorder %s29, 0
    %p239 = por %p237, %p238
    %p240 = scmp.ne.s32.totalorder %s228, %s229
    %p241 = scmp.eq.s32.totalorder %s30, 1
    %p242 = por %p240, %p241
    %p244 = scmp.ne.s32.totalorder %s229, %s243
    %p245 = scmp.eq.s32.totalorder %s30, 0
    %p246 = por %p244, %p245
    %s248 = sadd.s32 %s247, 1
    %p251 = scmp.eq.s32.totalorder %s24, 1
    %p252 = scmp.ne.s32.totalorder %s247, %s249
    %p253 = scmp.eq.s32.totalorder %s24, 0
    %p254 = por %p252, %p253
    %p255 = scmp.ne.s32.totalorder %s247, %s249
    %p256 = scmp.eq.s32.totalorder %s29, 1
    %p257 = por %p255, %p256
    %p258 = scmp.ne.s32.totalorder %s249, %s250
    %p259 = scmp.eq.s32.totalorder %s29, 0
    %p260 = por %p258, %p259
    %p261 = scmp.ne.s32.totalorder %s249, %s250
    %p262 = scmp.eq.s32.totalorder %s30, 1
    %p263 = por %p261, %p262
    %p265 = scmp.ne.s32.totalorder %s250, %s264
    %p266 = scmp.eq.s32.totalorder %s30, 0
    %p267 = por %p265, %p266
    %s269 = sadd.s32 %s268, 1
    %p272 = scmp.eq.s32.totalorder %s24, 1
    %p273 = scmp.ne.s32.totalorder %s268, %s270
    %p274 = scmp.eq.s32.totalorder %s24, 0
    %p275 = por %p273, %p274
    %p276 = scmp.ne.s32.totalorder %s268, %s270
    %p277 = scmp.eq.s32.totalorder %s29, 1
    %p278 = por %p276, %p277
    %p279 = scmp.ne.s32.totalorder %s270, %s271
    %p280 = scmp.eq.s32.totalorder %s29, 0
    %p281 = por %p279, %p280
    %p282 = scmp.ne.s32.totalorder %s270, %s271
    %p283 = scmp.eq.s32.totalorder %s30, 1
    %p284 = por %p282, %p283
    %p286 = scmp.ne.s32.totalorder %s271, %s285
    %p287 = scmp.eq.s32.totalorder %s30, 0
    %p288 = por %p286, %p287
    %s290 = sadd.s32 %s289, 1
    %p293 = scmp.eq.s32.totalorder %s24, 1
    %p294 = scmp.ne.s32.totalorder %s289, %s291
    %p295 = scmp.eq.s32.totalorder %s24, 0
    %p296 = por %p294, %p295
    %p297 = scmp.ne.s32.totalorder %s289, %s291
    %p298 = scmp.eq.s32.totalorder %s29, 1
    %p299 = por %p297, %p298
    %p300 = scmp.ne.s32.totalorder %s291, %s292
    %p301 = scmp.eq.s32.totalorder %s29, 0
    %p302 = por %p300, %p301
    %p303 = scmp.ne.s32.totalorder %s291, %s292
    %p304 = scmp.eq.s32.totalorder %s30, 1
    %p305 = por %p303, %p304
    %p307 = scmp.ne.s32.totalorder %s292, %s306
    %p308 = scmp.eq.s32.totalorder %s30, 0
    %p309 = por %p307, %p308
    %s311 = sadd.s32 %s310, 1
    %p314 = scmp.eq.s32.totalorder %s24, 1
    %p315 = scmp.ne.s32.totalorder %s310, %s312
    %p316 = scmp.eq.s32.totalorder %s24, 0
    %p317 = por %p315, %p316
    %p318 = scmp.ne.s32.totalorder %s310, %s312
    %p319 = scmp.eq.s32.totalorder %s29, 1
    %p320 = por %p318, %p319
    %p321 = scmp.ne.s32.totalorder %s312, %s313
    %p322 = scmp.eq.s32.totalorder %s29, 0
    %p323 = por %p321, %p322
    %p324 = scmp.ne.s32.totalorder %s312, %s313
    %p325 = scmp.eq.s32.totalorder %s30, 1
    %p326 = por %p324, %p325
    %p328 = scmp.ne.s32.totalorder %s313, %s327
    %p329 = scmp.eq.s32.totalorder %s30, 0
    %p330 = por %p328, %p329
    %s332 = sadd.s32 %s331, 1
    %p335 = scmp.eq.s32.totalorder %s24, 1
    %p336 = scmp.ne.s32.totalorder %s331, %s333
    %p337 = scmp.eq.s32.totalorder %s24, 0
    %p338 = por %p336, %p337
    %p339 = scmp.ne.s32.totalorder %s331, %s333
    %p340 = scmp.eq.s32.totalorder %s29, 1
    %p341 = por %p339, %p340
    %p342 = scmp.ne.s32.totalorder %s333, %s334
    %p343 = scmp.eq.s32.totalorder %s29, 0
    %p344 = por %p342, %p343
    %p345 = scmp.ne.s32.totalorder %s333, %s334
    %p346 = scmp.eq.s32.totalorder %s30, 1
    %p347 = por %p345, %p346
    %p349 = scmp.ne.s32.totalorder %s334, %s348
    %p350 = scmp.eq.s32.totalorder %s30, 0
    %p351 = por %p349, %p350
    %s353 = sadd.s32 %s352, 1
    %p356 = scmp.eq.s32.totalorder %s24, 1
    %p357 = scmp.ne.s32.totalorder %s352, %s354
    %p358 = scmp.eq.s32.totalorder %s24, 0
    %p359 = por %p357, %p358
    %p360 = scmp.ne.s32.totalorder %s352, %s354
    %p361 = scmp.eq.s32.totalorder %s29, 1
    %p362 = por %p360, %p361
    %p363 = scmp.ne.s32.totalorder %s354, %s355
    %p364 = scmp.eq.s32.totalorder %s29, 0
    %p365 = por %p363, %p364
    %p366 = scmp.ne.s32.totalorder %s354, %s355
    %p367 = scmp.eq.s32.totalorder %s30, 1
    %p368 = por %p366, %p367
    %p370 = scmp.ne.s32.totalorder %s355, %s369
    %p371 = scmp.eq.s32.totalorder %s30, 0
    %p372 = por %p370, %p371
    %s373 = ssub.s32 %s24, %s31
    %p374 = scmp.eq.s32.totalorder %s373, 0
    %s376 = sadd.s32 %s375, 1
    %s377 = scalar_select %p374, %s375, %s376
    %p380 = pneg %p374
    %p381 = scmp.eq.s32.totalorder %s24, 1
    %p382 = por %p380, %p381
    %p383 = scmp.ne.s32.totalorder %s375, %s378
    %p384 = scmp.eq.s32.totalorder %s24, 0
    %p385 = por %p383, %p384
    %p386 = scmp.ne.s32.totalorder %s375, %s378
    %p387 = scmp.eq.s32.totalorder %s29, 1
    %p388 = por %p386, %p387
    %p389 = scmp.ne.s32.totalorder %s378, %s379
    %p390 = scmp.eq.s32.totalorder %s29, 0
    %p391 = por %p389, %p390
    %p392 = scmp.ne.s32.totalorder %s378, %s379
    %p393 = scmp.eq.s32.totalorder %s30, 1
    %p394 = por %p392, %p393
    %p396 = scmp.ne.s32.totalorder %s379, %s395
    %p397 = scmp.eq.s32.totalorder %s30, 0
    %p398 = por %p396, %p397
    %s399 = ssub.s32 %s24, %s31
    %p400 = scmp.eq.s32.totalorder %s399, 0
    %s402 = sadd.s32 %s401, 1
    %s403 = scalar_select %p400, %s401, %s402
    %p406 = pneg %p400
    %p407 = scmp.eq.s32.totalorder %s24, 1
    %p408 = por %p406, %p407
    %p409 = scmp.ne.s32.totalorder %s401, %s404
    %p410 = scmp.eq.s32.totalorder %s24, 0
    %p411 = por %p409, %p410
    %p412 = scmp.ne.s32.totalorder %s401, %s404
    %p413 = scmp.eq.s32.totalorder %s29, 1
    %p414 = por %p412, %p413
    %p415 = scmp.ne.s32.totalorder %s404, %s405
    %p416 = scmp.eq.s32.totalorder %s29, 0
    %p417 = por %p415, %p416
    %p418 = scmp.ne.s32.totalorder %s404, %s405
    %p419 = scmp.eq.s32.totalorder %s30, 1
    %p420 = por %p418, %p419
    %p422 = scmp.ne.s32.totalorder %s405, %s421
    %p423 = scmp.eq.s32.totalorder %s30, 0
    %p424 = por %p422, %p423
    %p425 = scmp.le.s32.totalorder 1, %s24
    %p426 = scmp.lt.s32.totalorder %s24, 3
    %p427 = pnand %p425, %p426
    %p428 = pneg %p427
    // Predicated region
    $region9: #{forward.1} parent=5 // pred_check
      _
    $region10: #{forward.1} parent=5 // pred_check_branch
      %430 = sbr.rel (%p427) target = $region12
    $region11: #{forward.1} parent=5 // pred_region
      %s431 = ssub.s32 %s24, 1
      // Predicated region
      $region13: #{forward.1} parent=11 // pred_check
        %p432 = pneg %p71
      $region14: #{forward.1} parent=11 // pred_check_branch
        %434 = sbr.rel (%p432) target = $region16
      $region15: #{forward.1} parent=11 // pred_region
        _
      $region16: #{forward.1} parent=11 // pred_fallthru
        _
      // Predicated region
      $region17: #{forward.1} parent=11 // pred_check
        %p435 = pneg %p92
      $region18: #{forward.1} parent=11 // pred_check_branch
        %437 = sbr.rel (%p435) target = $region20
      $region19: #{forward.1} parent=11 // pred_region
        _
      $region20: #{forward.1} parent=11 // pred_fallthru
        _
      // Predicated region
      $region21: #{forward.1} parent=11 // pred_check
        %p438 = pneg %p113
      $region22: #{forward.1} parent=11 // pred_check_branch
        %440 = sbr.rel (%p438) target = $region24
      $region23: #{forward.1} parent=11 // pred_region
        _
      $region24: #{forward.1} parent=11 // pred_fallthru
        _
      // Predicated region
      $region25: #{forward.1} parent=11 // pred_check
        %p441 = pneg %p134
      $region26: #{forward.1} parent=11 // pred_check_branch
        %443 = sbr.rel (%p441) target = $region28
      $region27: #{forward.1} parent=11 // pred_region
        _
      $region28: #{forward.1} parent=11 // pred_fallthru
        _
      // Predicated region
      $region29: #{forward.1} parent=11 // pred_check
        %p444 = pneg %p155
      $region30: #{forward.1} parent=11 // pred_check_branch
        %446 = sbr.rel (%p444) target = $region32
      $region31: #{forward.1} parent=11 // pred_region
        _
      $region32: #{forward.1} parent=11 // pred_fallthru
        _
      // Predicated region
      $region33: #{forward.1} parent=11 // pred_check
        %p447 = pneg %p176
      $region34: #{forward.1} parent=11 // pred_check_branch
        %449 = sbr.rel (%p447) target = $region36
      $region35: #{forward.1} parent=11 // pred_region
        _
      $region36: #{forward.1} parent=11 // pred_fallthru
        _
      // Predicated region
      $region37: #{forward.1} parent=11 // pred_check
        %p450 = pneg %p197
      $region38: #{forward.1} parent=11 // pred_check_branch
        %452 = sbr.rel (%p450) target = $region40
      $region39: #{forward.1} parent=11 // pred_region
        _
      $region40: #{forward.1} parent=11 // pred_fallthru
        _
      // Predicated region
      $region41: #{forward.1} parent=11 // pred_check
        %p453 = pneg %p218
      $region42: #{forward.1} parent=11 // pred_check_branch
        %455 = sbr.rel (%p453) target = $region44
      $region43: #{forward.1} parent=11 // pred_region
        _
      $region44: #{forward.1} parent=11 // pred_fallthru
        _
      // Predicated region
      $region45: #{forward.1} parent=11 // pred_check
        %p456 = pneg %p239
      $region46: #{forward.1} parent=11 // pred_check_branch
        %458 = sbr.rel (%p456) target = $region48
      $region47: #{forward.1} parent=11 // pred_region
        _
      $region48: #{forward.1} parent=11 // pred_fallthru
        _
      // Predicated region
      $region49: #{forward.1} parent=11 // pred_check
        %p459 = pneg %p260
      $region50: #{forward.1} parent=11 // pred_check_branch
        %461 = sbr.rel (%p459) target = $region52
      $region51: #{forward.1} parent=11 // pred_region
        _
      $region52: #{forward.1} parent=11 // pred_fallthru
        _
      // Predicated region
      $region53: #{forward.1} parent=11 // pred_check
        %p462 = pneg %p281
      $region54: #{forward.1} parent=11 // pred_check_branch
        %464 = sbr.rel (%p462) target = $region56
      $region55: #{forward.1} parent=11 // pred_region
        _
      $region56: #{forward.1} parent=11 // pred_fallthru
        _
      // Predicated region
      $region57: #{forward.1} parent=11 // pred_check
        %p465 = pneg %p302
      $region58: #{forward.1} parent=11 // pred_check_branch
        %467 = sbr.rel (%p465) target = $region60
      $region59: #{forward.1} parent=11 // pred_region
        _
      $region60: #{forward.1} parent=11 // pred_fallthru
        _
      // Predicated region
      $region61: #{forward.1} parent=11 // pred_check
        %p468 = pneg %p323
      $region62: #{forward.1} parent=11 // pred_check_branch
        %470 = sbr.rel (%p468) target = $region64
      $region63: #{forward.1} parent=11 // pred_region
        _
      $region64: #{forward.1} parent=11 // pred_fallthru
        _
      // Predicated region
      $region65: #{forward.1} parent=11 // pred_check
        %p471 = pneg %p344
      $region66: #{forward.1} parent=11 // pred_check_branch
        %473 = sbr.rel (%p471) target = $region68
      $region67: #{forward.1} parent=11 // pred_region
        _
      $region68: #{forward.1} parent=11 // pred_fallthru
        _
      // Predicated region
      $region69: #{forward.1} parent=11 // pred_check
        %p474 = pneg %p365
      $region70: #{forward.1} parent=11 // pred_check_branch
        %476 = sbr.rel (%p474) target = $region72
      $region71: #{forward.1} parent=11 // pred_region
        _
      $region72: #{forward.1} parent=11 // pred_fallthru
        _
    $region12: #{forward.1} parent=5 // pred_fallthru
      _
    %p477 = scmp.lt.s32.totalorder %s24, 2
    // Predicated region
    $region73: #{forward.1} parent=5 // pred_check
      %p478 = pneg %p477
    $region74: #{forward.1} parent=5 // pred_check_branch
      %480 = sbr.rel (%p478) target = $region76
    $region75: #{forward.1} parent=5 // pred_region
      // Predicated region
      $region77: #{forward.1} parent=75 // pred_check
        %p481 = pneg %p44
      $region78: #{forward.1} parent=75 // pred_check_branch
        %483 = sbr.rel (%p481) target = $region80
      $region79: #{forward.1} parent=75 // pred_region
        %p484 = scmp.lt.s32.totalorder %s24, 1
        %s485 = scalar_select %p484, %s24, 1
        %s486 = smul.addr %s485, 30
        %s487 = smul.addr %s486, 8
        %s488 = scalar_lea.vmem %s0, %s487
      $region80: #{forward.1} parent=75 // pred_fallthru
        _
    $region76: #{forward.1} parent=5 // pred_fallthru
      _
    %p489 = scmp.le.s32.totalorder 1, %s24
    %p490 = scmp.lt.s32.totalorder %s24, 3
    %p491 = pnand %p489, %p490
    %p492 = pneg %p491
    // Predicated region
    $region81: #{forward.1} parent=5 // pred_check
      _
    $region82: #{forward.1} parent=5 // pred_check_branch
      %494 = sbr.rel (%p491) target = $region84
    $region83: #{forward.1} parent=5 // pred_region
      %s495 = ssub.s32 %s24, 1
      %p496 = scmp.lt.s32.totalorder %s29, 1
      %s497 = scalar_select %p496, %s29, 1
      %s498 = smul.addr %s497, 30
      %s499 = smul.addr %s498, 8
      %s500 = scalar_lea.vmem %s0, %s499
      %p501 = pneg %p50
      %p502 = pneg %p47
      %p503 = pneg %p71
      %p504 = pneg %p68
      %p505 = pneg %p92
      %p506 = pneg %p89
      %p507 = pneg %p113
      %p508 = pneg %p110
      %p509 = pneg %p134
      %p510 = pneg %p131
      %p511 = pneg %p155
      %p512 = pneg %p152
      %p513 = pneg %p176
      %p514 = pneg %p173
      %p515 = pneg %p197
      %p516 = pneg %p194
      %p517 = pneg %p218
      %p518 = pneg %p215
      %p519 = pneg %p239
      %p520 = pneg %p236
      %p521 = pneg %p260
      %p522 = pneg %p257
      %p523 = pneg %p281
      %p524 = pneg %p278
      %p525 = pneg %p302
      %p526 = pneg %p299
      %p527 = pneg %p323
      %p528 = pneg %p320
      %p529 = pneg %p344
      %p530 = pneg %p341
      %p531 = pneg %p365
      %p532 = pneg %p362
      %p533 = pneg %p391
      %p534 = pneg %p388
      %s535 = smul.u32 5, %s29
      %p536 = scmp.lt.s32.totalorder %s535, 9
      %s537 = scalar_select %p536, %s535, 9
      %s538 = smul.addr %s537, 8
      %s539 = scalar_lea.vmem %s16, %s538
      %p540 = pneg %p417
      %p541 = pneg %p414
      %p542 = scmp.lt.s32.totalorder %s29, 1
      %s543 = scalar_select %p542, %s29, 1
      %s544 = smul.addr %s543, 8
      %s545 = scalar_lea.vmem %s17, %s544
      %p546 = scmp.lt.s32.totalorder %s29, 1
      %s547 = scalar_select %p546, %s29, 1
      %s548 = smul.addr %s547, 30
      %s549 = smul.addr %s548, 8
      %s550 = scalar_lea.vmem %s0, %s549
      %s551 = smul.u32 5, %s29
      %p552 = scmp.lt.s32.totalorder %s551, 9
      %s553 = scalar_select %p552, %s551, 9
      %s554 = smul.addr %s553, 8
      %s555 = scalar_lea.vmem %s16, %s554
      %s556 = smul.u32 5, %s29
      %p557 = scmp.lt.s32.totalorder %s29, 1
      %s558 = scalar_select %p557, %s29, 1
      %s559 = smul.addr %s558, 8
      %s560 = scalar_lea.vmem %s17, %s559
      %v561 = vld [vmem:[%s1] sm:$0xff]
      %v562 = vld [vmem:[%s1 + $0x8] sm:$0xff]
      %v563 = vld [vmem:[%s1 + $0x10] sm:$0xff]
      %v564 = vld [vmem:[%s1 + $0x18] sm:$0xff]
      %v565 = vld [vmem:[%s1 + $0x20] sm:$0xff]
      %v566 = vld [vmem:[%s1 + $0x28] sm:$0xff]
      %v567 = vld [vmem:[%s1 + $0x30] sm:$0xff]
      %v568 = vld [vmem:[%s1 + $0x38] sm:$0xff]
      %v569 = vld [vmem:[%s1 + $0x40] sm:$0xff]
      %v570 = vld [vmem:[%s1 + $0x48] sm:$0xff]
      %v571 = vld [vmem:[%s1 + $0x50] sm:$0xff]
      %v572 = vld [vmem:[%s1 + $0x58] sm:$0xff]
      %v573 = vld [vmem:[%s1 + $0x60] sm:$0xff]
      %v574 = vld [vmem:[%s1 + $0x68] sm:$0xff]
      %v575 = vld [vmem:[%s1 + $0x70] sm:$0xff]
      %v576 = vld [vmem:[%s1 + $0x78] sm:$0xff]
      %v577 = vld [vmem:[%s1 + $0x80] sm:$0xff]
      %v578 = vld [vmem:[%s1 + $0x88] sm:$0xff]
      %v579 = vld [vmem:[%s1 + $0x90] sm:$0xff]
      %v580 = vld [vmem:[%s1 + $0x98] sm:$0xff]
      %v581 = vld [vmem:[%s2] sm:$0xff]
      %v582 = vld [vmem:[%s2 + $0x8] sm:$0xff]
      %v583 = vld [vmem:[%s2 + $0x10] sm:$0xff]
      %v584 = vld [vmem:[%s2 + $0x18] sm:$0xff]
      %v585 = vld [vmem:[%s2 + $0x20] sm:$0xff]
      %v586 = vld [vmem:[%s2 + $0x28] sm:$0xff]
      %v587 = vld [vmem:[%s2 + $0x30] sm:$0xff]
      %v588 = vld [vmem:[%s2 + $0x38] sm:$0xff]
      %v589 = vld [vmem:[%s2 + $0x40] sm:$0xff]
      %v590 = vld [vmem:[%s2 + $0x48] sm:$0xff]
      %v591 = vld [vmem:[%s2 + $0x50] sm:$0xff]
      %v592 = vld [vmem:[%s2 + $0x58] sm:$0xff]
      %v593 = vld [vmem:[%s2 + $0x60] sm:$0xff]
      %v594 = vld [vmem:[%s2 + $0x68] sm:$0xff]
      %v595 = vld [vmem:[%s2 + $0x70] sm:$0xff]
      %v596 = vld [vmem:[%s2 + $0x78] sm:$0xff]
      %v597 = vld [vmem:[%s2 + $0x80] sm:$0xff]
      %v598 = vld [vmem:[%s2 + $0x88] sm:$0xff]
      %v599 = vld [vmem:[%s2 + $0x90] sm:$0xff]
      %v600 = vld [vmem:[%s2 + $0x98] sm:$0xff]
      %v601 = vld [vmem:[%s550] sm:$0xff]
      %v602 = vld [vmem:[%s550 + $0x8] sm:$0xff]
      %v603 = vld [vmem:[%s550 + $0x10] sm:$0xff]
      %v604 = vld [vmem:[%s550 + $0x18] sm:$0xff]
      %v605 = vld [vmem:[%s550 + $0x20] sm:$0xff]
      %v606 = vld [vmem:[%s550 + $0x28] sm:$0xff]
      %v607 = vld [vmem:[%s550 + $0x30] sm:$0xff]
      %v608 = vld [vmem:[%s550 + $0x38] sm:$0xff]
      %v609 = vld [vmem:[%s550 + $0x40] sm:$0xff]
      %v610 = vld [vmem:[%s550 + $0x48] sm:$0xff]
      %v611 = vld [vmem:[%s550 + $0x50] sm:$0xff]
      %v612 = vld [vmem:[%s550 + $0x58] sm:$0xff]
      %v613 = vld [vmem:[%s550 + $0x60] sm:$0xff]
      %v614 = vld [vmem:[%s550 + $0x68] sm:$0xff]
      %v615 = vld [vmem:[%s550 + $0x70] sm:$0xff]
      %s616 = scalar_lea.vmem %s550, 120
      %v617 = vld [vmem:[%s616] sm:$0xff]
      %v618 = vld [vmem:[%s616 + $0x8] sm:$0xff]
      %v619 = vld [vmem:[%s616 + $0x10] sm:$0xff]
      %v620 = vld [vmem:[%s616 + $0x18] sm:$0xff]
      %v621 = vld [vmem:[%s616 + $0x20] sm:$0xff]
      %v622 = vld [vmem:[%s616 + $0x28] sm:$0xff]
      %v623 = vld [vmem:[%s616 + $0x30] sm:$0xff]
      %v624 = vld [vmem:[%s616 + $0x38] sm:$0xff]
      %v625 = vld [vmem:[%s616 + $0x40] sm:$0xff]
      %v626 = vld [vmem:[%s616 + $0x48] sm:$0xff]
      %v627 = vld [vmem:[%s616 + $0x50] sm:$0xff]
      %v628 = vld [vmem:[%s616 + $0x58] sm:$0xff]
      %v629 = vld [vmem:[%s616 + $0x60] sm:$0xff]
      %v630 = vld [vmem:[%s616 + $0x68] sm:$0xff]
      %v631 = vld [vmem:[%s616 + $0x70] sm:$0xff]
      %633 = vset.pattern.permute.xlu0 0
      %634 = vperm.xlu0 %633, %v581
      %v635 = vpop.permute.xlu0 %634
      %638 = vset.pattern.permute.xlu0 0
      %639 = vperm.xlu0 %638, %v582
      %v640 = vpop.permute.xlu0 %639
      %643 = vset.pattern.permute.xlu0 0
      %644 = vperm.xlu0 %643, %v583
      %v645 = vpop.permute.xlu0 %644
      %648 = vset.pattern.permute.xlu0 0
      %649 = vperm.xlu0 %648, %v584
      %v650 = vpop.permute.xlu0 %649
      %653 = vset.pattern.permute.xlu0 0
      %654 = vperm.xlu0 %653, %v585
      %v655 = vpop.permute.xlu0 %654
      %658 = vset.pattern.permute.xlu0 0
      %659 = vperm.xlu0 %658, %v586
      %v660 = vpop.permute.xlu0 %659
      %663 = vset.pattern.permute.xlu0 0
      %664 = vperm.xlu0 %663, %v587
      %v665 = vpop.permute.xlu0 %664
      %668 = vset.pattern.permute.xlu0 0
      %669 = vperm.xlu0 %668, %v588
      %v670 = vpop.permute.xlu0 %669
      %673 = vset.pattern.permute.xlu0 0
      %674 = vperm.xlu0 %673, %v589
      %v675 = vpop.permute.xlu0 %674
      %678 = vset.pattern.permute.xlu0 0
      %679 = vperm.xlu0 %678, %v590
      %v680 = vpop.permute.xlu0 %679
      %683 = vset.pattern.permute.xlu0 0
      %684 = vperm.xlu0 %683, %v591
      %v685 = vpop.permute.xlu0 %684
      %688 = vset.pattern.permute.xlu0 0
      %689 = vperm.xlu0 %688, %v592
      %v690 = vpop.permute.xlu0 %689
      %693 = vset.pattern.permute.xlu0 0
      %694 = vperm.xlu0 %693, %v593
      %v695 = vpop.permute.xlu0 %694
      %698 = vset.pattern.permute.xlu0 0
      %699 = vperm.xlu0 %698, %v594
      %v700 = vpop.permute.xlu0 %699
      %703 = vset.pattern.permute.xlu0 0
      %704 = vperm.xlu0 %703, %v595
      %v705 = vpop.permute.xlu0 %704
      %708 = vset.pattern.permute.xlu0 0
      %709 = vperm.xlu0 %708, %v596
      %v710 = vpop.permute.xlu0 %709
      %713 = vset.pattern.permute.xlu0 0
      %714 = vperm.xlu0 %713, %v597
      %v715 = vpop.permute.xlu0 %714
      %718 = vset.pattern.permute.xlu0 0
      %719 = vperm.xlu0 %718, %v598
      %v720 = vpop.permute.xlu0 %719
      %723 = vset.pattern.permute.xlu0 0
      %724 = vperm.xlu0 %723, %v599
      %v725 = vpop.permute.xlu0 %724
      %728 = vset.pattern.permute.xlu0 0
      %729 = vperm.xlu0 %728, %v600
      %v730 = vpop.permute.xlu0 %729
      %vm732 = vcmask 982016
      %v734 = vsel %vm732, %v561, 0
      %v737 = vsel %vm732, %v562, 0
      %v740 = vsel %vm732, %v563, 0
      %v743 = vsel %vm732, %v564, 0
      %v746 = vsel %vm732, %v565, 0
      %v749 = vsel %vm732, %v566, 0
      %v752 = vsel %vm732, %v567, 0
      %v755 = vsel %vm732, %v568, 0
      %v758 = vsel %vm732, %v569, 0
      %v761 = vsel %vm732, %v570, 0
      %v764 = vsel %vm732, %v571, 0
      %v767 = vsel %vm732, %v572, 0
      %v770 = vsel %vm732, %v573, 0
      %v773 = vsel %vm732, %v574, 0
      %v776 = vsel %vm732, %v575, 0
      %v779 = vsel %vm732, %v576, 0
      %v782 = vsel %vm732, %v577, 0
      %v785 = vsel %vm732, %v578, 0
      %v788 = vsel %vm732, %v579, 0
      %v791 = vsel %vm732, %v580, 0
      %793 = vmatprep.subr.mxu0 0.0
      %794 = vmatpush1.msra.mxu0 %v601
      %795 = vmatprep.subr.mxu0 0.0
      %796 = vmatpush1.msra.mxu0 %v602
      %797 = vmatprep.subr.mxu0 0.0
      %798 = vmatpush1.msra.mxu0 %v603
      %799 = vmatprep.subr.mxu0 0.0
      %800 = vmatpush1.msra.mxu0 %v604
      %801 = vmatprep.subr.mxu0 0.0
      %802 = vmatpush1.msra.mxu0 %v605
      %803 = vmatprep.subr.mxu0 0.0
      %804 = vmatpush1.msra.mxu0 %v606
      %805 = vmatprep.subr.mxu0 0.0
      %806 = vmatpush1.msra.mxu0 %v607
      %807 = vmatprep.subr.mxu0 0.0
      %808 = vmatpush1.msra.mxu0 %v608
      %809 = vmatprep.subr.mxu0 0.0
      %810 = vmatpush1.msra.mxu0 %v609
      %811 = vmatprep.subr.mxu0 0.0
      %812 = vmatpush1.msra.mxu0 %v610
      %813 = vmatprep.subr.mxu0 0.0
      %814 = vmatpush1.msra.mxu0 %v611
      %815 = vmatprep.subr.mxu0 0.0
      %816 = vmatpush1.msra.mxu0 %v612
      %817 = vmatprep.subr.mxu0 0.0
      %818 = vmatpush1.msra.mxu0 %v613
      %819 = vmatprep.subr.mxu0 0.0
      %820 = vmatpush1.msra.mxu0 %v614
      %821 = vmatprep.subr.mxu0 0.0
      %822 = vmatpush1.msra.mxu0 %v615
      %823 = vmatprep.subr.mxu0 0.0
      %824 = vmatpush1.msra.mxu0 0.0
      %825 = vmatprep.subr.mxu0 0.0
      %826 = vmatpush1.msra.mxu0 0.0
      %827 = vmatprep.subr.mxu0 0.0
      %828 = vmatpush1.msra.mxu0 0.0
      %829 = vmatprep.subr.mxu0 0.0
      %830 = vmatpush1.msra.mxu0 0.0
      %831 = vmatprep.subr.mxu0 0.0
      %832 = vmatpush1.msra.mxu0 0.0
      %833 = vmatprep.subr.mxu0 0.0
      %834 = vmatpush1.msra.mxu0 0.0
      %835 = vmatprep.subr.mxu0 0.0
      %836 = vmatpush1.msra.mxu0 0.0
      %837 = vmatprep.subr.mxu0 0.0
      %838 = vmatpush1.msra.mxu0 0.0
      %839 = vmatprep.subr.mxu0 0.0
      %840 = vmatpush1.msra.mxu0 0.0
      %841 = vmatprep.subr.mxu0 0.0
      %842 = vmatpush1.msra.mxu0 0.0
      %843 = vmatprep.subr.mxu0 0.0
      %844 = vmatpush1.msra.mxu0 0.0
      %845 = vmatprep.subr.mxu0 0.0
      %846 = vmatpush1.msra.mxu0 0.0
      %847 = vmatprep.subr.mxu0 0.0
      %848 = vmatpush1.msra.mxu0 0.0
      %849 = vmatprep.subr.mxu0 0.0
      %850 = vmatpush1.msra.mxu0 0.0
      %851 = vmatprep.subr.mxu0 0.0
      %852 = vmatpush1.msra.mxu0 0.0
      %853 = vmatprep.subr.mxu0 0.0
      %854 = vmatpush1.msra.mxu0 0.0
      %855 = vmatprep.subr.mxu0 0.0
      %856 = vmatpush1.msra.mxu0 0.0
      %857 = vmatprep.mubr.f32.mxu0 0.0
      %858 = vmatmul.mubr.f32.gmra.mrb[0].mxu0 %v734
      %v859 = vpop.f32.mrb[0].mxu0
      %v860 = vadd.f32 %v635, %v859
      %v861 = vpop.f32.mrb[0].mxu0
      %862 = vmatprep.mubr.f32.mxu0 0.0
      %863 = vmatmul.mubr.f32.gmra.mrb[0].mxu0 %v737
      %v864 = vpop.f32.mrb[0].mxu0
      %v865 = vadd.f32 %v640, %v864
      %v866 = vpop.f32.mrb[0].mxu0
      %867 = vmatprep.mubr.f32.mxu0 0.0
      %868 = vmatmul.mubr.f32.gmra.mrb[0].mxu0 %v740
      %v869 = vpop.f32.mrb[0].mxu0
      %v870 = vadd.f32 %v645, %v869
      %v871 = vpop.f32.mrb[0].mxu0
      %872 = vmatprep.mubr.f32.mxu0 0.0
      %873 = vmatmul.mubr.f32.gmra.mrb[0].mxu0 %v743
      %v874 = vpop.f32.mrb[0].mxu0
      %v875 = vadd.f32 %v650, %v874
      %v876 = vpop.f32.mrb[0].mxu0
      %877 = vmatprep.mubr.f32.mxu0 0.0
      %878 = vmatmul.mubr.f32.gmra.mrb[0].mxu0 %v746
      %v879 = vpop.f32.mrb[0].mxu0
      %v880 = vadd.f32 %v655, %v879
      %v881 = vpop.f32.mrb[0].mxu0
      %882 = vmatprep.mubr.f32.mxu0 0.0
      %883 = vmatmul.mubr.f32.gmra.mrb[0].mxu0 %v749
      %v884 = vpop.f32.mrb[0].mxu0
      %v885 = vadd.f32 %v660, %v884
      %v886 = vpop.f32.mrb[0].mxu0
      %887 = vmatprep.mubr.f32.mxu0 0.0
      %888 = vmatmul.mubr.f32.gmra.mrb[0].mxu0 %v752
      %v889 = vpop.f32.mrb[0].mxu0
      %v890 = vadd.f32 %v665, %v889
      %v891 = vpop.f32.mrb[0].mxu0
      %892 = vmatprep.mubr.f32.mxu0 0.0
      %893 = vmatmul.mubr.f32.gmra.mrb[0].mxu0 %v755
      %v894 = vpop.f32.mrb[0].mxu0
      %v895 = vadd.f32 %v670, %v894
      %v896 = vpop.f32.mrb[0].mxu0
      %897 = vmatprep.mubr.f32.mxu0 0.0
      %898 = vmatmul.mubr.f32.gmra.mrb[0].mxu0 %v758
      %v899 = vpop.f32.mrb[0].mxu0
      %v900 = vadd.f32 %v675, %v899
      %v901 = vpop.f32.mrb[0].mxu0
      %902 = vmatprep.mubr.f32.mxu0 0.0
      %903 = vmatmul.mubr.f32.gmra.mrb[0].mxu0 %v761
      %v904 = vpop.f32.mrb[0].mxu0
      %v905 = vadd.f32 %v680, %v904
      %v906 = vpop.f32.mrb[0].mxu0
      %907 = vmatprep.mubr.f32.mxu0 0.0
      %908 = vmatmul.mubr.f32.gmra.mrb[0].mxu0 %v764
      %v909 = vpop.f32.mrb[0].mxu0
      %v910 = vadd.f32 %v685, %v909
      %v911 = vpop.f32.mrb[0].mxu0
      %912 = vmatprep.mubr.f32.mxu0 0.0
      %913 = vmatmul.mubr.f32.gmra.mrb[0].mxu0 %v767
      %v914 = vpop.f32.mrb[0].mxu0
      %v915 = vadd.f32 %v690, %v914
      %v916 = vpop.f32.mrb[0].mxu0
      %917 = vmatprep.mubr.f32.mxu0 0.0
      %918 = vmatmul.mubr.f32.gmra.mrb[0].mxu0 %v770
      %v919 = vpop.f32.mrb[0].mxu0
      %v920 = vadd.f32 %v695, %v919
      %v921 = vpop.f32.mrb[0].mxu0
      %922 = vmatprep.mubr.f32.mxu0 0.0
      %923 = vmatmul.mubr.f32.gmra.mrb[0].mxu0 %v773
      %v924 = vpop.f32.mrb[0].mxu0
      %v925 = vadd.f32 %v700, %v924
      %v926 = vpop.f32.mrb[0].mxu0
      %927 = vmatprep.mubr.f32.mxu0 0.0
      %928 = vmatmul.mubr.f32.gmra.mrb[0].mxu0 %v776
      %v929 = vpop.f32.mrb[0].mxu0
      %v930 = vadd.f32 %v705, %v929
      %v931 = vpop.f32.mrb[0].mxu0
      %932 = vmatprep.mubr.f32.mxu0 0.0
      %933 = vmatmul.mubr.f32.gmra.mrb[0].mxu0 %v779
      %v934 = vpop.f32.mrb[0].mxu0
      %v935 = vadd.f32 %v710, %v934
      %v936 = vpop.f32.mrb[0].mxu0
      %937 = vmatprep.mubr.f32.mxu0 0.0
      %938 = vmatmul.mubr.f32.gmra.mrb[0].mxu0 %v782
      %v939 = vpop.f32.mrb[0].mxu0
      %v940 = vadd.f32 %v715, %v939
      %v941 = vpop.f32.mrb[0].mxu0
      %942 = vmatprep.mubr.f32.mxu0 0.0
      %943 = vmatmul.mubr.f32.gmra.mrb[0].mxu0 %v785
      %v944 = vpop.f32.mrb[0].mxu0
      %v945 = vadd.f32 %v720, %v944
      %v946 = vpop.f32.mrb[0].mxu0
      %947 = vmatprep.mubr.f32.mxu0 0.0
      %948 = vmatmul.mubr.f32.gmra.mrb[0].mxu0 %v788
      %v949 = vpop.f32.mrb[0].mxu0
      %v950 = vadd.f32 %v725, %v949
      %v951 = vpop.f32.mrb[0].mxu0
      %952 = vmatprep.mubr.f32.mxu0 0.0
      %953 = vmatmul.mubr.f32.gmra.mrb[0].mxu0 %v791
      %v954 = vpop.f32.mrb[0].mxu0
      %v955 = vadd.f32 %v730, %v954
      %v956 = vpop.f32.mrb[0].mxu0
      %957 = vdwg.mxu0
      %v958 = vmax.f32 %v860, 0.0
      %v959 = vmax.f32 %v865, 0.0
      %v960 = vmax.f32 %v870, 0.0
      %v961 = vmax.f32 %v875, 0.0
      %v962 = vmax.f32 %v880, 0.0
      %v963 = vmax.f32 %v885, 0.0
      %v964 = vmax.f32 %v890, 0.0
      %v965 = vmax.f32 %v895, 0.0
      %v966 = vmax.f32 %v900, 0.0
      %v967 = vmax.f32 %v905, 0.0
      %v968 = vmax.f32 %v910, 0.0
      %v969 = vmax.f32 %v915, 0.0
      %v970 = vmax.f32 %v920, 0.0
      %v971 = vmax.f32 %v925, 0.0
      %v972 = vmax.f32 %v930, 0.0
      %v973 = vmax.f32 %v935, 0.0
      %v974 = vmax.f32 %v940, 0.0
      %v975 = vmax.f32 %v945, 0.0
      %v976 = vmax.f32 %v950, 0.0
      %v977 = vmax.f32 %v955, 0.0
      %978 = vset.pattern.permute.xlu0 1
      %979 = vperm.xlu0 %978, %v581
      %v980 = vpop.permute.xlu0 %979
      %982 = vset.pattern.permute.xlu0 1
      %983 = vperm.xlu0 %982, %v582
      %v984 = vpop.permute.xlu0 %983
      %986 = vset.pattern.permute.xlu0 1
      %987 = vperm.xlu0 %986, %v583
      %v988 = vpop.permute.xlu0 %987
      %990 = vset.pattern.permute.xlu0 1
      %991 = vperm.xlu0 %990, %v584
      %v992 = vpop.permute.xlu0 %991
      %994 = vset.pattern.permute.xlu0 1
      %995 = vperm.xlu0 %994, %v585
      %v996 = vpop.permute.xlu0 %995
      %998 = vset.pattern.permute.xlu0 1
      %999 = vperm.xlu0 %998, %v586
      %v1000 = vpop.permute.xlu0 %999
      %1002 = vset.pattern.permute.xlu0 1
      %1003 = vperm.xlu0 %1002, %v587
      %v1004 = vpop.permute.xlu0 %1003
      %1006 = vset.pattern.permute.xlu0 1
      %1007 = vperm.xlu0 %1006, %v588
      %v1008 = vpop.permute.xlu0 %1007
      %1010 = vset.pattern.permute.xlu0 1
      %1011 = vperm.xlu0 %1010, %v589
      %v1012 = vpop.permute.xlu0 %1011
      %1014 = vset.pattern.permute.xlu0 1
      %1015 = vperm.xlu0 %1014, %v590
      %v1016 = vpop.permute.xlu0 %1015
      %1018 = vset.pattern.permute.xlu0 1
      %1019 = vperm.xlu0 %1018, %v591
      %v1020 = vpop.permute.xlu0 %1019
      %1022 = vset.pattern.permute.xlu0 1
      %1023 = vperm.xlu0 %1022, %v592
      %v1024 = vpop.permute.xlu0 %1023
      %1026 = vset.pattern.permute.xlu0 1
      %1027 = vperm.xlu0 %1026, %v593
      %v1028 = vpop.permute.xlu0 %1027
      %1030 = vset.pattern.permute.xlu0 1
      %1031 = vperm.xlu0 %1030, %v594
      %v1032 = vpop.permute.xlu0 %1031
      %1034 = vset.pattern.permute.xlu0 1
      %1035 = vperm.xlu0 %1034, %v595
      %v1036 = vpop.permute.xlu0 %1035
      %1038 = vset.pattern.permute.xlu0 1
      %1039 = vperm.xlu0 %1038, %v596
      %v1040 = vpop.permute.xlu0 %1039
      %1042 = vset.pattern.permute.xlu0 1
      %1043 = vperm.xlu0 %1042, %v597
      %v1044 = vpop.permute.xlu0 %1043
      %1046 = vset.pattern.permute.xlu0 1
      %1047 = vperm.xlu0 %1046, %v598
      %v1048 = vpop.permute.xlu0 %1047
      %1050 = vset.pattern.permute.xlu0 1
      %1051 = vperm.xlu0 %1050, %v599
      %v1052 = vpop.permute.xlu0 %1051
      %1054 = vset.pattern.permute.xlu0 1
      %1055 = vperm.xlu0 %1054, %v600
      %v1056 = vpop.permute.xlu0 %1055
      %v1058 = vmul.f32 %v958, %v980
      %v1059 = vmul.f32 %v959, %v984
      %v1060 = vmul.f32 %v960, %v988
      %v1061 = vmul.f32 %v961, %v992
      %v1062 = vmul.f32 %v962, %v996
      %v1063 = vmul.f32 %v963, %v1000
      %v1064 = vmul.f32 %v964, %v1004
      %v1065 = vmul.f32 %v965, %v1008
      %v1066 = vmul.f32 %v966, %v1012
      %v1067 = vmul.f32 %v967, %v1016
      %v1068 = vmul.f32 %v968, %v1020
      %v1069 = vmul.f32 %v969, %v1024
      %v1070 = vmul.f32 %v970, %v1028
      %v1071 = vmul.f32 %v971, %v1032
      %v1072 = vmul.f32 %v972, %v1036
      %v1073 = vmul.f32 %v973, %v1040
      %v1074 = vmul.f32 %v974, %v1044
      %v1075 = vmul.f32 %v975, %v1048
      %v1076 = vmul.f32 %v976, %v1052
      %v1077 = vmul.f32 %v977, %v1056
      %1078 = vset.pattern.permute.xlu0 2
      %1079 = vperm.xlu0 %1078, %v581
      %v1080 = vpop.permute.xlu0 %1079
      %1082 = vset.pattern.permute.xlu0 2
      %1083 = vperm.xlu0 %1082, %v582
      %v1084 = vpop.permute.xlu0 %1083
      %1086 = vset.pattern.permute.xlu0 2
      %1087 = vperm.xlu0 %1086, %v583
      %v1088 = vpop.permute.xlu0 %1087
      %1090 = vset.pattern.permute.xlu0 2
      %1091 = vperm.xlu0 %1090, %v584
      %v1092 = vpop.permute.xlu0 %1091
      %1094 = vset.pattern.permute.xlu0 2
      %1095 = vperm.xlu0 %1094, %v585
      %v1096 = vpop.permute.xlu0 %1095
      %1098 = vset.pattern.permute.xlu0 2
      %1099 = vperm.xlu0 %1098, %v586
      %v1100 = vpop.permute.xlu0 %1099
      %1102 = vset.pattern.permute.xlu0 2
      %1103 = vperm.xlu0 %1102, %v587
      %v1104 = vpop.permute.xlu0 %1103
      %1106 = vset.pattern.permute.xlu0 2
      %1107 = vperm.xlu0 %1106, %v588
      %v1108 = vpop.permute.xlu0 %1107
      %1110 = vset.pattern.permute.xlu0 2
      %1111 = vperm.xlu0 %1110, %v589
      %v1112 = vpop.permute.xlu0 %1111
      %1114 = vset.pattern.permute.xlu0 2
      %1115 = vperm.xlu0 %1114, %v590
      %v1116 = vpop.permute.xlu0 %1115
      %1118 = vset.pattern.permute.xlu0 2
      %1119 = vperm.xlu0 %1118, %v591
      %v1120 = vpop.permute.xlu0 %1119
      %1122 = vset.pattern.permute.xlu0 2
      %1123 = vperm.xlu0 %1122, %v592
      %v1124 = vpop.permute.xlu0 %1123
      %1126 = vset.pattern.permute.xlu0 2
      %1127 = vperm.xlu0 %1126, %v593
      %v1128 = vpop.permute.xlu0 %1127
      %1130 = vset.pattern.permute.xlu0 2
      %1131 = vperm.xlu0 %1130, %v594
      %v1132 = vpop.permute.xlu0 %1131
      %1134 = vset.pattern.permute.xlu0 2
      %1135 = vperm.xlu0 %1134, %v595
      %v1136 = vpop.permute.xlu0 %1135
      %1138 = vset.pattern.permute.xlu0 2
      %1139 = vperm.xlu0 %1138, %v596
      %v1140 = vpop.permute.xlu0 %1139
      %1142 = vset.pattern.permute.xlu0 2
      %1143 = vperm.xlu0 %1142, %v597
      %v1144 = vpop.permute.xlu0 %1143
      %1146 = vset.pattern.permute.xlu0 2
      %1147 = vperm.xlu0 %1146, %v598
      %v1148 = vpop.permute.xlu0 %1147
      %1150 = vset.pattern.permute.xlu0 2
      %1151 = vperm.xlu0 %1150, %v599
      %v1152 = vpop.permute.xlu0 %1151
      %1154 = vset.pattern.permute.xlu0 2
      %1155 = vperm.xlu0 %1154, %v600
      %v1156 = vpop.permute.xlu0 %1155
      %v1158 = vadd.f32 %v1058, %v1080
      %v1159 = vadd.f32 %v1059, %v1084
      %v1160 = vadd.f32 %v1060, %v1088
      %v1161 = vadd.f32 %v1061, %v1092
      %v1162 = vadd.f32 %v1062, %v1096
      %v1163 = vadd.f32 %v1063, %v1100
      %v1164 = vadd.f32 %v1064, %v1104
      %v1165 = vadd.f32 %v1065, %v1108
      %v1166 = vadd.f32 %v1066, %v1112
      %v1167 = vadd.f32 %v1067, %v1116
      %v1168 = vadd.f32 %v1068, %v1120
      %v1169 = vadd.f32 %v1069, %v1124
      %v1170 = vadd.f32 %v1070, %v1128
      %v1171 = vadd.f32 %v1071, %v1132
      %v1172 = vadd.f32 %v1072, %v1136
      %v1173 = vadd.f32 %v1073, %v1140
      %v1174 = vadd.f32 %v1074, %v1144
      %v1175 = vadd.f32 %v1075, %v1148
      %v1176 = vadd.f32 %v1076, %v1152
      %v1177 = vadd.f32 %v1077, %v1156
      %1178 = vmatprep.subr.mxu0 0.0
      %1179 = vmatpush1.msra.mxu0 %v617
      %1180 = vmatprep.subr.mxu0 0.0
      %1181 = vmatpush1.msra.mxu0 %v618
      %1182 = vmatprep.subr.mxu0 0.0
      %1183 = vmatpush1.msra.mxu0 %v619
      %1184 = vmatprep.subr.mxu0 0.0
      %1185 = vmatpush1.msra.mxu0 %v620
      %1186 = vmatprep.subr.mxu0 0.0
      %1187 = vmatpush1.msra.mxu0 %v621
      %1188 = vmatprep.subr.mxu0 0.0
      %1189 = vmatpush1.msra.mxu0 %v622
      %1190 = vmatprep.subr.mxu0 0.0
      %1191 = vmatpush1.msra.mxu0 %v623
      %1192 = vmatprep.subr.mxu0 0.0
      %1193 = vmatpush1.msra.mxu0 %v624
      %1194 = vmatprep.subr.mxu0 0.0
      %1195 = vmatpush1.msra.mxu0 %v625
      %1196 = vmatprep.subr.mxu0 0.0
      %1197 = vmatpush1.msra.mxu0 %v626
      %1198 = vmatprep.subr.mxu0 0.0
      %1199 = vmatpush1.msra.mxu0 %v627
      %1200 = vmatprep.subr.mxu0 0.0
      %1201 = vmatpush1.msra.mxu0 %v628
      %1202 = vmatprep.subr.mxu0 0.0
      %1203 = vmatpush1.msra.mxu0 %v629
      %1204 = vmatprep.subr.mxu0 0.0
      %1205 = vmatpush1.msra.mxu0 %v630
      %1206 = vmatprep.subr.mxu0 0.0
      %1207 = vmatpush1.msra.mxu0 %v631
      %1208 = vmatprep.subr.mxu0 0.0
      %1209 = vmatpush1.msra.mxu0 0.0
      %1210 = vmatprep.subr.mxu0 0.0
      %1211 = vmatpush1.msra.mxu0 0.0
      %1212 = vmatprep.subr.mxu0 0.0
      %1213 = vmatpush1.msra.mxu0 0.0
      %1214 = vmatprep.subr.mxu0 0.0
      %1215 = vmatpush1.msra.mxu0 0.0
      %1216 = vmatprep.subr.mxu0 0.0
      %1217 = vmatpush1.msra.mxu0 0.0
      %1218 = vmatprep.subr.mxu0 0.0
      %1219 = vmatpush1.msra.mxu0 0.0
      %1220 = vmatprep.subr.mxu0 0.0
      %1221 = vmatpush1.msra.mxu0 0.0
      %1222 = vmatprep.subr.mxu0 0.0
      %1223 = vmatpush1.msra.mxu0 0.0
      %1224 = vmatprep.subr.mxu0 0.0
      %1225 = vmatpush1.msra.mxu0 0.0
      %1226 = vmatprep.subr.mxu0 0.0
      %1227 = vmatpush1.msra.mxu0 0.0
      %1228 = vmatprep.subr.mxu0 0.0
      %1229 = vmatpush1.msra.mxu0 0.0
      %1230 = vmatprep.subr.mxu0 0.0
      %1231 = vmatpush1.msra.mxu0 0.0
      %1232 = vmatprep.subr.mxu0 0.0
      %1233 = vmatpush1.msra.mxu0 0.0
      %1234 = vmatprep.subr.mxu0 0.0
      %1235 = vmatpush1.msra.mxu0 0.0
      %1236 = vmatprep.subr.mxu0 0.0
      %1237 = vmatpush1.msra.mxu0 0.0
      %1238 = vmatprep.subr.mxu0 0.0
      %1239 = vmatpush1.msra.mxu0 0.0
      %1240 = vmatprep.subr.mxu0 0.0
      %1241 = vmatpush1.msra.mxu0 0.0
      %1242 = vmatprep.mubr.f32.mxu0 0.0
      %1243 = vmatmul.mubr.f32.gmra.mrb[0].mxu0 %v734
      %v1244 = vpop.f32.mrb[0].mxu0
      %v1245 = vadd.f32 %v635, %v1244
      %v1246 = vpop.f32.mrb[0].mxu0
      %1247 = vmatprep.mubr.f32.mxu0 0.0
      %1248 = vmatmul.mubr.f32.gmra.mrb[0].mxu0 %v737
      %v1249 = vpop.f32.mrb[0].mxu0
      %v1250 = vadd.f32 %v640, %v1249
      %v1251 = vpop.f32.mrb[0].mxu0
      %1252 = vmatprep.mubr.f32.mxu0 0.0
      %1253 = vmatmul.mubr.f32.gmra.mrb[0].mxu0 %v740
      %v1254 = vpop.f32.mrb[0].mxu0
      %v1255 = vadd.f32 %v645, %v1254
      %v1256 = vpop.f32.mrb[0].mxu0
      %1257 = vmatprep.mubr.f32.mxu0 0.0
      %1258 = vmatmul.mubr.f32.gmra.mrb[0].mxu0 %v743
      %v1259 = vpop.f32.mrb[0].mxu0
      %v1260 = vadd.f32 %v650, %v1259
      %v1261 = vpop.f32.mrb[0].mxu0
      %1262 = vmatprep.mubr.f32.mxu0 0.0
      %1263 = vmatmul.mubr.f32.gmra.mrb[0].mxu0 %v746
      %v1264 = vpop.f32.mrb[0].mxu0
      %v1265 = vadd.f32 %v655, %v1264
      %v1266 = vpop.f32.mrb[0].mxu0
      %1267 = vmatprep.mubr.f32.mxu0 0.0
      %1268 = vmatmul.mubr.f32.gmra.mrb[0].mxu0 %v749
      %v1269 = vpop.f32.mrb[0].mxu0
      %v1270 = vadd.f32 %v660, %v1269
      %v1271 = vpop.f32.mrb[0].mxu0
      %1272 = vmatprep.mubr.f32.mxu0 0.0
      %1273 = vmatmul.mubr.f32.gmra.mrb[0].mxu0 %v752
      %v1274 = vpop.f32.mrb[0].mxu0
      %v1275 = vadd.f32 %v665, %v1274
      %v1276 = vpop.f32.mrb[0].mxu0
      %1277 = vmatprep.mubr.f32.mxu0 0.0
      %1278 = vmatmul.mubr.f32.gmra.mrb[0].mxu0 %v755
      %v1279 = vpop.f32.mrb[0].mxu0
      %v1280 = vadd.f32 %v670, %v1279
      %v1281 = vpop.f32.mrb[0].mxu0
      %1282 = vmatprep.mubr.f32.mxu0 0.0
      %1283 = vmatmul.mubr.f32.gmra.mrb[0].mxu0 %v758
      %v1284 = vpop.f32.mrb[0].mxu0
      %v1285 = vadd.f32 %v675, %v1284
      %v1286 = vpop.f32.mrb[0].mxu0
      %1287 = vmatprep.mubr.f32.mxu0 0.0
      %1288 = vmatmul.mubr.f32.gmra.mrb[0].mxu0 %v761
      %v1289 = vpop.f32.mrb[0].mxu0
      %v1290 = vadd.f32 %v680, %v1289
      %v1291 = vpop.f32.mrb[0].mxu0
      %1292 = vmatprep.mubr.f32.mxu0 0.0
      %1293 = vmatmul.mubr.f32.gmra.mrb[0].mxu0 %v764
      %v1294 = vpop.f32.mrb[0].mxu0
      %v1295 = vadd.f32 %v685, %v1294
      %v1296 = vpop.f32.mrb[0].mxu0
      %1297 = vmatprep.mubr.f32.mxu0 0.0
      %1298 = vmatmul.mubr.f32.gmra.mrb[0].mxu0 %v767
      %v1299 = vpop.f32.mrb[0].mxu0
      %v1300 = vadd.f32 %v690, %v1299
      %v1301 = vpop.f32.mrb[0].mxu0
      %1302 = vmatprep.mubr.f32.mxu0 0.0
      %1303 = vmatmul.mubr.f32.gmra.mrb[0].mxu0 %v770
      %v1304 = vpop.f32.mrb[0].mxu0
      %v1305 = vadd.f32 %v695, %v1304
      %v1306 = vpop.f32.mrb[0].mxu0
      %1307 = vmatprep.mubr.f32.mxu0 0.0
      %1308 = vmatmul.mubr.f32.gmra.mrb[0].mxu0 %v773
      %v1309 = vpop.f32.mrb[0].mxu0
      %v1310 = vadd.f32 %v700, %v1309
      %v1311 = vpop.f32.mrb[0].mxu0
      %1312 = vmatprep.mubr.f32.mxu0 0.0
      %1313 = vmatmul.mubr.f32.gmra.mrb[0].mxu0 %v776
      %v1314 = vpop.f32.mrb[0].mxu0
      %v1315 = vadd.f32 %v705, %v1314
      %v1316 = vpop.f32.mrb[0].mxu0
      %1317 = vmatprep.mubr.f32.mxu0 0.0
      %1318 = vmatmul.mubr.f32.gmra.mrb[0].mxu0 %v779
      %v1319 = vpop.f32.mrb[0].mxu0
      %v1320 = vadd.f32 %v710, %v1319
      %v1321 = vpop.f32.mrb[0].mxu0
      %1322 = vmatprep.mubr.f32.mxu0 0.0
      %1323 = vmatmul.mubr.f32.gmra.mrb[0].mxu0 %v782
      %v1324 = vpop.f32.mrb[0].mxu0
      %v1325 = vadd.f32 %v715, %v1324
      %v1326 = vpop.f32.mrb[0].mxu0
      %1327 = vmatprep.mubr.f32.mxu0 0.0
      %1328 = vmatmul.mubr.f32.gmra.mrb[0].mxu0 %v785
      %v1329 = vpop.f32.mrb[0].mxu0
      %v1330 = vadd.f32 %v720, %v1329
      %v1331 = vpop.f32.mrb[0].mxu0
      %1332 = vmatprep.mubr.f32.mxu0 0.0
      %1333 = vmatmul.mubr.f32.gmra.mrb[0].mxu0 %v788
      %v1334 = vpop.f32.mrb[0].mxu0
      %v1335 = vadd.f32 %v725, %v1334
      %v1336 = vpop.f32.mrb[0].mxu0
      %1337 = vmatprep.mubr.f32.mxu0 0.0
      %1338 = vmatmul.mubr.f32.gmra.mrb[0].mxu0 %v791
      %v1339 = vpop.f32.mrb[0].mxu0
      %v1340 = vadd.f32 %v730, %v1339
      %v1341 = vpop.f32.mrb[0].mxu0
      %1342 = vdwg.mxu0
      %v1343 = vmax.f32 %v1245, 0.0
      %v1344 = vmax.f32 %v1250, 0.0
      %v1345 = vmax.f32 %v1255, 0.0
      %v1346 = vmax.f32 %v1260, 0.0
      %v1347 = vmax.f32 %v1265, 0.0
      %v1348 = vmax.f32 %v1270, 0.0
      %v1349 = vmax.f32 %v1275, 0.0
      %v1350 = vmax.f32 %v1280, 0.0
      %v1351 = vmax.f32 %v1285, 0.0
      %v1352 = vmax.f32 %v1290, 0.0
      %v1353 = vmax.f32 %v1295, 0.0
      %v1354 = vmax.f32 %v1300, 0.0
      %v1355 = vmax.f32 %v1305, 0.0
      %v1356 = vmax.f32 %v1310, 0.0
      %v1357 = vmax.f32 %v1315, 0.0
      %v1358 = vmax.f32 %v1320, 0.0
      %v1359 = vmax.f32 %v1325, 0.0
      %v1360 = vmax.f32 %v1330, 0.0
      %v1361 = vmax.f32 %v1335, 0.0
      %v1362 = vmax.f32 %v1340, 0.0
      %v1363 = vmul.f32 %v1343, %v980
      %v1364 = vmul.f32 %v1344, %v984
      %v1365 = vmul.f32 %v1345, %v988
      %v1366 = vmul.f32 %v1346, %v992
      %v1367 = vmul.f32 %v1347, %v996
      %v1368 = vmul.f32 %v1348, %v1000
      %v1369 = vmul.f32 %v1349, %v1004
      %v1370 = vmul.f32 %v1350, %v1008
      %v1371 = vmul.f32 %v1351, %v1012
      %v1372 = vmul.f32 %v1352, %v1016
      %v1373 = vmul.f32 %v1353, %v1020
      %v1374 = vmul.f32 %v1354, %v1024
      %v1375 = vmul.f32 %v1355, %v1028
      %v1376 = vmul.f32 %v1356, %v1032
      %v1377 = vmul.f32 %v1357, %v1036
      %v1378 = vmul.f32 %v1358, %v1040
      %v1379 = vmul.f32 %v1359, %v1044
      %v1380 = vmul.f32 %v1360, %v1048
      %v1381 = vmul.f32 %v1361, %v1052
      %v1382 = vmul.f32 %v1362, %v1056
      %v1383 = vadd.f32 %v1363, %v1080
      %v1384 = vadd.f32 %v1364, %v1084
      %v1385 = vadd.f32 %v1365, %v1088
      %v1386 = vadd.f32 %v1366, %v1092
      %v1387 = vadd.f32 %v1367, %v1096
      %v1388 = vadd.f32 %v1368, %v1100
      %v1389 = vadd.f32 %v1369, %v1104
      %v1390 = vadd.f32 %v1370, %v1108
      %v1391 = vadd.f32 %v1371, %v1112
      %v1392 = vadd.f32 %v1372, %v1116
      %v1393 = vadd.f32 %v1373, %v1120
      %v1394 = vadd.f32 %v1374, %v1124
      %v1395 = vadd.f32 %v1375, %v1128
      %v1396 = vadd.f32 %v1376, %v1132
      %v1397 = vadd.f32 %v1377, %v1136
      %v1398 = vadd.f32 %v1378, %v1140
      %v1399 = vadd.f32 %v1379, %v1144
      %v1400 = vadd.f32 %v1380, %v1148
      %v1401 = vadd.f32 %v1381, %v1152
      %v1402 = vadd.f32 %v1382, %v1156
      %v1403 = vmax.f32 %v1158, %v1383
      %v1404 = vmax.f32 %v1159, %v1384
      %v1405 = vmax.f32 %v1160, %v1385
      %v1406 = vmax.f32 %v1161, %v1386
      %v1407 = vmax.f32 %v1162, %v1387
      %v1408 = vmax.f32 %v1163, %v1388
      %v1409 = vmax.f32 %v1164, %v1389
      %v1410 = vmax.f32 %v1165, %v1390
      %v1411 = vmax.f32 %v1166, %v1391
      %v1412 = vmax.f32 %v1167, %v1392
      %v1413 = vmax.f32 %v1168, %v1393
      %v1414 = vmax.f32 %v1169, %v1394
      %v1415 = vmax.f32 %v1170, %v1395
      %v1416 = vmax.f32 %v1171, %v1396
      %v1417 = vmax.f32 %v1172, %v1397
      %v1418 = vmax.f32 %v1173, %v1398
      %v1419 = vmax.f32 %v1174, %v1399
      %v1420 = vmax.f32 %v1175, %v1400
      %v1421 = vmax.f32 %v1176, %v1401
      %v1422 = vmax.f32 %v1177, %v1402
      %v1423 = vld [vmem:[%s3] sm:$0xff]
      %v1424 = vld [vmem:[%s3 + $0x8] sm:$0xff]
      %v1425 = vld [vmem:[%s3 + $0x10] sm:$0xff]
      %v1426 = vld [vmem:[%s3 + $0x18] sm:$0xff]
      %v1427 = vld [vmem:[%s3 + $0x20] sm:$0xff]
      %v1428 = vld [vmem:[%s3 + $0x28] sm:$0xff]
      %v1429 = vld [vmem:[%s3 + $0x30] sm:$0xff]
      %v1430 = vld [vmem:[%s3 + $0x38] sm:$0xff]
      %v1431 = vld [vmem:[%s3 + $0x40] sm:$0xff]
      %v1432 = vld [vmem:[%s3 + $0x48] sm:$0xff]
      %v1433 = vld [vmem:[%s3 + $0x50] sm:$0xff]
      %v1434 = vld [vmem:[%s3 + $0x58] sm:$0xff]
      %v1435 = vld [vmem:[%s3 + $0x60] sm:$0xff]
      %v1436 = vld [vmem:[%s3 + $0x68] sm:$0xff]
      %v1437 = vld [vmem:[%s3 + $0x70] sm:$0xff]
      %v1438 = vld [vmem:[%s3 + $0x78] sm:$0xff]
      %v1439 = vld [vmem:[%s3 + $0x80] sm:$0xff]
      %v1440 = vld [vmem:[%s3 + $0x88] sm:$0xff]
      %v1441 = vld [vmem:[%s3 + $0x90] sm:$0xff]
      %v1442 = vld [vmem:[%s3 + $0x98] sm:$0xff]
      %v1443 = vld [vmem:[%s3 + $0xa0] sm:$0xff]
      %v1444 = vld [vmem:[%s3 + $0xa8] sm:$0xff]
      %v1445 = vld [vmem:[%s3 + $0xb0] sm:$0xff]
      %v1446 = vld [vmem:[%s3 + $0xb8] sm:$0xff]
      %v1447 = vld [vmem:[%s3 + $0xc0] sm:$0xff]
      %v1448 = vld [vmem:[%s3 + $0xc8] sm:$0xff]
      %v1449 = vld [vmem:[%s3 + $0xd0] sm:$0xff]
      %v1450 = vld [vmem:[%s3 + $0xd8] sm:$0xff]
      %v1451 = vld [vmem:[%s3 + $0xe0] sm:$0xf]
      %v1452 = vld [vmem:[%s3 + $0xe8] sm:$0xf]
      %v1453 = vld [vmem:[%s3 + $0xf0] sm:$0xf]
      %v1454 = vld [vmem:[%s3 + $0xf8] sm:$0xf]
      %vm1455 = vcmask 490496
      %v1457 = vsel %vm1455, %v1403, 0
      %v1460 = vsel %vm1455, %v1404, 0
      %v1463 = vsel %vm1455, %v1405, 0
      %v1466 = vsel %vm1455, %v1406, 0
      %v1469 = vsel %vm1455, %v1407, 0
      %v1472 = vsel %vm1455, %v1408, 0
      %v1475 = vsel %vm1455, %v1409, 0
      %v1478 = vsel %vm1455, %v1410, 0
      %v1481 = vsel %vm1455, %v1411, 0
      %v1484 = vsel %vm1455, %v1412, 0
      %v1487 = vsel %vm1455, %v1413, 0
      %v1490 = vsel %vm1455, %v1414, 0
      %v1493 = vsel %vm1455, %v1415, 0
      %v1496 = vsel %vm1455, %v1416, 0
      %v1499 = vsel %vm1455, %v1417, 0
      %v1502 = vsel %vm1455, %v1418, 0
      %v1505 = vsel %vm1455, %v1419, 0
      %v1508 = vsel %vm1455, %v1420, 0
      %v1511 = vsel %vm1455, %v1421, 0
      %v1514 = vsel %vm1455, %v1422, 0
      %vm1516 = vcmask 1043456
      %v1518 = vsel %vm1516, %v1451, 0
      %v1521 = vsel %vm1516, %v1452, 0
      %v1524 = vsel %vm1516, %v1453, 0
      %v1527 = vsel %vm1516, %v1454, 0
      %1529 = vmatprep.subr.mxu0 %v1424
      %1530 = vmatpush1.msra.mxu0 %v1423
      %1531 = vmatprep.subr.mxu0 %v1428
      %1532 = vmatpush1.msra.mxu0 %v1427
      %1533 = vmatprep.subr.mxu0 %v1432
      %1534 = vmatpush1.msra.mxu0 %v1431
      %1535 = vmatprep.subr.mxu0 %v1436
      %1536 = vmatpush1.msra.mxu0 %v1435
      %1537 = vmatprep.subr.mxu0 %v1440
      %1538 = vmatpush1.msra.mxu0 %v1439
      %1539 = vmatprep.subr.mxu0 %v1444
      %1540 = vmatpush1.msra.mxu0 %v1443
      %1541 = vmatprep.subr.mxu0 %v1448
      %1542 = vmatpush1.msra.mxu0 %v1447
      %1543 = vmatprep.subr.mxu0 %v1521
      %1544 = vmatpush1.msra.mxu0 %v1518
      %1545 = vmatprep.subr.mxu0 0.0
      %1546 = vmatpush1.msra.mxu0 0.0
      %1547 = vmatprep.subr.mxu0 0.0
      %1548 = vmatpush1.msra.mxu0 0.0
      %1549 = vmatprep.subr.mxu0 0.0
      %1550 = vmatpush1.msra.mxu0 0.0
      %1551 = vmatprep.subr.mxu0 0.0
      %1552 = vmatpush1.msra.mxu0 0.0
      %1553 = vmatprep.subr.mxu0 0.0
      %1554 = vmatpush1.msra.mxu0 0.0
      %1555 = vmatprep.subr.mxu0 0.0
      %1556 = vmatpush1.msra.mxu0 0.0
      %1557 = vmatprep.subr.mxu0 0.0
      %1558 = vmatpush1.msra.mxu0 0.0
      %1559 = vmatprep.subr.mxu0 0.0
      %1560 = vmatpush1.msra.mxu0 0.0
      %1561 = vmatprep.subr.mxu0 0.0
      %1562 = vmatpush1.msra.mxu0 0.0
      %1563 = vmatprep.subr.mxu0 0.0
      %1564 = vmatpush1.msra.mxu0 0.0
      %1565 = vmatprep.subr.mxu0 0.0
      %1566 = vmatpush1.msra.mxu0 0.0
      %1567 = vmatprep.subr.mxu0 0.0
      %1568 = vmatpush1.msra.mxu0 0.0
      %1569 = vmatprep.subr.mxu0 0.0
      %1570 = vmatpush1.msra.mxu0 0.0
      %1571 = vmatprep.subr.mxu0 0.0
      %1572 = vmatpush1.msra.mxu0 0.0
      %1573 = vmatprep.subr.mxu0 0.0
      %1574 = vmatpush1.msra.mxu0 0.0
      %1575 = vmatprep.subr.mxu0 0.0
      %1576 = vmatpush1.msra.mxu0 0.0
      %1577 = vmatprep.subr.mxu0 0.0
      %1578 = vmatpush1.msra.mxu0 0.0
      %1579 = vmatprep.subr.mxu0 0.0
      %1580 = vmatpush1.msra.mxu0 0.0
      %1581 = vmatprep.subr.mxu0 0.0
      %1582 = vmatpush1.msra.mxu0 0.0
      %1583 = vmatprep.subr.mxu0 0.0
      %1584 = vmatpush1.msra.mxu0 0.0
      %1585 = vmatprep.subr.mxu0 0.0
      %1586 = vmatpush1.msra.mxu0 0.0
      %1587 = vmatprep.subr.mxu0 0.0
      %1588 = vmatpush1.msra.mxu0 0.0
      %1589 = vmatprep.subr.mxu0 0.0
      %1590 = vmatpush1.msra.mxu0 0.0
      %1591 = vmatprep.subr.mxu0 0.0
      %1592 = vmatpush1.msra.mxu0 0.0
      %1593 = vmatprep.mubr.f32.mxu0 0.0
      %1594 = vmatmul.mubr.f32.gmra.mrb[0].mxu0 %v1457
      %v1595 = vpop.f32.mrb[0].mxu0
      %v1596 = vadd.f32 0.0, %v1595
      %v1597 = vpop.f32.mrb[0].mxu0
      %v1598 = vadd.f32 0.0, %v1597
      %1599 = vmatprep.mubr.f32.mxu0 0.0
      %1600 = vmatmul.mubr.f32.gmra.mrb[0].mxu0 %v1460
      %v1601 = vpop.f32.mrb[0].mxu0
      %v1602 = vadd.f32 0.0, %v1601
      %v1603 = vpop.f32.mrb[0].mxu0
      %v1604 = vadd.f32 0.0, %v1603
      %1605 = vmatprep.mubr.f32.mxu0 0.0
      %1606 = vmatmul.mubr.f32.gmra.mrb[0].mxu0 %v1463
      %v1607 = vpop.f32.mrb[0].mxu0
      %v1608 = vadd.f32 0.0, %v1607
      %v1609 = vpop.f32.mrb[0].mxu0
      %v1610 = vadd.f32 0.0, %v1609
      %1611 = vmatprep.mubr.f32.mxu0 0.0
      %1612 = vmatmul.mubr.f32.gmra.mrb[0].mxu0 %v1466
      %v1613 = vpop.f32.mrb[0].mxu0
      %v1614 = vadd.f32 0.0, %v1613
      %v1615 = vpop.f32.mrb[0].mxu0
      %v1616 = vadd.f32 0.0, %v1615
      %1617 = vmatprep.mubr.f32.mxu0 0.0
      %1618 = vmatmul.mubr.f32.gmra.mrb[0].mxu0 %v1469
      %v1619 = vpop.f32.mrb[0].mxu0
      %v1620 = vadd.f32 0.0, %v1619
      %v1621 = vpop.f32.mrb[0].mxu0
      %v1622 = vadd.f32 0.0, %v1621
      %1623 = vmatprep.mubr.f32.mxu0 0.0
      %1624 = vmatmul.mubr.f32.gmra.mrb[0].mxu0 %v1472
      %v1625 = vpop.f32.mrb[0].mxu0
      %v1626 = vadd.f32 0.0, %v1625
      %v1627 = vpop.f32.mrb[0].mxu0
      %v1628 = vadd.f32 0.0, %v1627
      %1629 = vmatprep.mubr.f32.mxu0 0.0
      %1630 = vmatmul.mubr.f32.gmra.mrb[0].mxu0 %v1475
      %v1631 = vpop.f32.mrb[0].mxu0
      %v1632 = vadd.f32 0.0, %v1631
      %v1633 = vpop.f32.mrb[0].mxu0
      %v1634 = vadd.f32 0.0, %v1633
      %1635 = vmatprep.mubr.f32.mxu0 0.0
      %1636 = vmatmul.mubr.f32.gmra.mrb[0].mxu0 %v1478
      %v1637 = vpop.f32.mrb[0].mxu0
      %v1638 = vadd.f32 0.0, %v1637
      %v1639 = vpop.f32.mrb[0].mxu0
      %v1640 = vadd.f32 0.0, %v1639
      %1641 = vmatprep.mubr.f32.mxu0 0.0
      %1642 = vmatmul.mubr.f32.gmra.mrb[0].mxu0 %v1481
      %v1643 = vpop.f32.mrb[0].mxu0
      %v1644 = vadd.f32 0.0, %v1643
      %v1645 = vpop.f32.mrb[0].mxu0
      %v1646 = vadd.f32 0.0, %v1645
      %1647 = vmatprep.mubr.f32.mxu0 0.0
      %1648 = vmatmul.mubr.f32.gmra.mrb[0].mxu0 %v1484
      %v1649 = vpop.f32.mrb[0].mxu0
      %v1650 = vadd.f32 0.0, %v1649
      %v1651 = vpop.f32.mrb[0].mxu0
      %v1652 = vadd.f32 0.0, %v1651
      %1653 = vmatprep.mubr.f32.mxu0 0.0
      %1654 = vmatmul.mubr.f32.gmra.mrb[0].mxu0 %v1487
      %v1655 = vpop.f32.mrb[0].mxu0
      %v1656 = vadd.f32 0.0, %v1655
      %v1657 = vpop.f32.mrb[0].mxu0
      %v1658 = vadd.f32 0.0, %v1657
      %1659 = vmatprep.mubr.f32.mxu0 0.0
      %1660 = vmatmul.mubr.f32.gmra.mrb[0].mxu0 %v1490
      %v1661 = vpop.f32.mrb[0].mxu0
      %v1662 = vadd.f32 0.0, %v1661
      %v1663 = vpop.f32.mrb[0].mxu0
      %v1664 = vadd.f32 0.0, %v1663
      %1665 = vmatprep.mubr.f32.mxu0 0.0
      %1666 = vmatmul.mubr.f32.gmra.mrb[0].mxu0 %v1493
      %v1667 = vpop.f32.mrb[0].mxu0
      %v1668 = vadd.f32 0.0, %v1667
      %v1669 = vpop.f32.mrb[0].mxu0
      %v1670 = vadd.f32 0.0, %v1669
      %1671 = vmatprep.mubr.f32.mxu0 0.0
      %1672 = vmatmul.mubr.f32.gmra.mrb[0].mxu0 %v1496
      %v1673 = vpop.f32.mrb[0].mxu0
      %v1674 = vadd.f32 0.0, %v1673
      %v1675 = vpop.f32.mrb[0].mxu0
      %v1676 = vadd.f32 0.0, %v1675
      %1677 = vmatprep.mubr.f32.mxu0 0.0
      %1678 = vmatmul.mubr.f32.gmra.mrb[0].mxu0 %v1499
      %v1679 = vpop.f32.mrb[0].mxu0
      %v1680 = vadd.f32 0.0, %v1679
      %v1681 = vpop.f32.mrb[0].mxu0
      %v1682 = vadd.f32 0.0, %v1681
      %1683 = vmatprep.mubr.f32.mxu0 0.0
      %1684 = vmatmul.mubr.f32.gmra.mrb[0].mxu0 %v1502
      %v1685 = vpop.f32.mrb[0].mxu0
      %v1686 = vadd.f32 0.0, %v1685
      %v1687 = vpop.f32.mrb[0].mxu0
      %v1688 = vadd.f32 0.0, %v1687
      %1689 = vmatprep.mubr.f32.mxu0 0.0
      %1690 = vmatmul.mubr.f32.gmra.mrb[0].mxu0 %v1505
      %v1691 = vpop.f32.mrb[0].mxu0
      %v1692 = vadd.f32 0.0, %v1691
      %v1693 = vpop.f32.mrb[0].mxu0
      %v1694 = vadd.f32 0.0, %v1693
      %1695 = vmatprep.mubr.f32.mxu0 0.0
      %1696 = vmatmul.mubr.f32.gmra.mrb[0].mxu0 %v1508
      %v1697 = vpop.f32.mrb[0].mxu0
      %v1698 = vadd.f32 0.0, %v1697
      %v1699 = vpop.f32.mrb[0].mxu0
      %v1700 = vadd.f32 0.0, %v1699
      %1701 = vmatprep.mubr.f32.mxu0 0.0
      %1702 = vmatmul.mubr.f32.gmra.mrb[0].mxu0 %v1511
      %v1703 = vpop.f32.mrb[0].mxu0
      %v1704 = vadd.f32 0.0, %v1703
      %v1705 = vpop.f32.mrb[0].mxu0
      %v1706 = vadd.f32 0.0, %v1705
      %1707 = vmatprep.mubr.f32.mxu0 0.0
      %1708 = vmatmul.mubr.f32.gmra.mrb[0].mxu0 %v1514
      %v1709 = vpop.f32.mrb[0].mxu0
      %v1710 = vadd.f32 0.0, %v1709
      %v1711 = vpop.f32.mrb[0].mxu0
      %v1712 = vadd.f32 0.0, %v1711
      %1713 = vdwg.mxu0
      %1714 = vmatprep.subr.mxu0 %v1426
      %1715 = vmatpush1.msra.mxu0 %v1425
      %1716 = vmatprep.subr.mxu0 %v1430
      %1717 = vmatpush1.msra.mxu0 %v1429
      %1718 = vmatprep.subr.mxu0 %v1434
      %1719 = vmatpush1.msra.mxu0 %v1433
      %1720 = vmatprep.subr.mxu0 %v1438
      %1721 = vmatpush1.msra.mxu0 %v1437
      %1722 = vmatprep.subr.mxu0 %v1442
      %1723 = vmatpush1.msra.mxu0 %v1441
      %1724 = vmatprep.subr.mxu0 %v1446
      %1725 = vmatpush1.msra.mxu0 %v1445
      %1726 = vmatprep.subr.mxu0 %v1450
      %1727 = vmatpush1.msra.mxu0 %v1449
      %1728 = vmatprep.subr.mxu0 %v1527
      %1729 = vmatpush1.msra.mxu0 %v1524
      %1730 = vmatprep.subr.mxu0 0.0
      %1731 = vmatpush1.msra.mxu0 0.0
      %1732 = vmatprep.subr.mxu0 0.0
      %1733 = vmatpush1.msra.mxu0 0.0
      %1734 = vmatprep.subr.mxu0 0.0
      %1735 = vmatpush1.msra.mxu0 0.0
      %1736 = vmatprep.subr.mxu0 0.0
      %1737 = vmatpush1.msra.mxu0 0.0
      %1738 = vmatprep.subr.mxu0 0.0
      %1739 = vmatpush1.msra.mxu0 0.0
      %1740 = vmatprep.subr.mxu0 0.0
      %1741 = vmatpush1.msra.mxu0 0.0
      %1742 = vmatprep.subr.mxu0 0.0
      %1743 = vmatpush1.msra.mxu0 0.0
      %1744 = vmatprep.subr.mxu0 0.0
      %1745 = vmatpush1.msra.mxu0 0.0
      %1746 = vmatprep.subr.mxu0 0.0
      %1747 = vmatpush1.msra.mxu0 0.0
      %1748 = vmatprep.subr.mxu0 0.0
      %1749 = vmatpush1.msra.mxu0 0.0
      %1750 = vmatprep.subr.mxu0 0.0
      %1751 = vmatpush1.msra.mxu0 0.0
      %1752 = vmatprep.subr.mxu0 0.0
      %1753 = vmatpush1.msra.mxu0 0.0
      %1754 = vmatprep.subr.mxu0 0.0
      %1755 = vmatpush1.msra.mxu0 0.0
      %1756 = vmatprep.subr.mxu0 0.0
      %1757 = vmatpush1.msra.mxu0 0.0
      %1758 = vmatprep.subr.mxu0 0.0
      %1759 = vmatpush1.msra.mxu0 0.0
      %1760 = vmatprep.subr.mxu0 0.0
      %1761 = vmatpush1.msra.mxu0 0.0
      %1762 = vmatprep.subr.mxu0 0.0
      %1763 = vmatpush1.msra.mxu0 0.0
      %1764 = vmatprep.subr.mxu0 0.0
      %1765 = vmatpush1.msra.mxu0 0.0
      %1766 = vmatprep.subr.mxu0 0.0
      %1767 = vmatpush1.msra.mxu0 0.0
      %1768 = vmatprep.subr.mxu0 0.0
      %1769 = vmatpush1.msra.mxu0 0.0
      %1770 = vmatprep.subr.mxu0 0.0
      %1771 = vmatpush1.msra.mxu0 0.0
      %1772 = vmatprep.subr.mxu0 0.0
      %1773 = vmatpush1.msra.mxu0 0.0
      %1774 = vmatprep.subr.mxu0 0.0
      %1775 = vmatpush1.msra.mxu0 0.0
      %1776 = vmatprep.subr.mxu0 0.0
      %1777 = vmatpush1.msra.mxu0 0.0
      %1778 = vmatprep.mubr.f32.mxu0 0.0
      %1779 = vmatmul.mubr.f32.gmra.mrb[0].mxu0 %v1457
      %v1780 = vpop.f32.mrb[0].mxu0
      %v1781 = vadd.f32 0.0, %v1780
      %v1782 = vpop.f32.mrb[0].mxu0
      %v1783 = vadd.f32 0.0, %v1782
      %1784 = vmatprep.mubr.f32.mxu0 0.0
      %1785 = vmatmul.mubr.f32.gmra.mrb[0].mxu0 %v1460
      %v1786 = vpop.f32.mrb[0].mxu0
      %v1787 = vadd.f32 0.0, %v1786
      %v1788 = vpop.f32.mrb[0].mxu0
      %v1789 = vadd.f32 0.0, %v1788
      %1790 = vmatprep.mubr.f32.mxu0 0.0
      %1791 = vmatmul.mubr.f32.gmra.mrb[0].mxu0 %v1463
      %v1792 = vpop.f32.mrb[0].mxu0
      %v1793 = vadd.f32 0.0, %v1792
      %v1794 = vpop.f32.mrb[0].mxu0
      %v1795 = vadd.f32 0.0, %v1794
      %1796 = vmatprep.mubr.f32.mxu0 0.0
      %1797 = vmatmul.mubr.f32.gmra.mrb[0].mxu0 %v1466
      %v1798 = vpop.f32.mrb[0].mxu0
      %v1799 = vadd.f32 0.0, %v1798
      %v1800 = vpop.f32.mrb[0].mxu0
      %v1801 = vadd.f32 0.0, %v1800
      %1802 = vmatprep.mubr.f32.mxu0 0.0
      %1803 = vmatmul.mubr.f32.gmra.mrb[0].mxu0 %v1469
      %v1804 = vpop.f32.mrb[0].mxu0
      %v1805 = vadd.f32 0.0, %v1804
      %v1806 = vpop.f32.mrb[0].mxu0
      %v1807 = vadd.f32 0.0, %v1806
      %1808 = vmatprep.mubr.f32.mxu0 0.0
      %1809 = vmatmul.mubr.f32.gmra.mrb[0].mxu0 %v1472
      %v1810 = vpop.f32.mrb[0].mxu0
      %v1811 = vadd.f32 0.0, %v1810
      %v1812 = vpop.f32.mrb[0].mxu0
      %v1813 = vadd.f32 0.0, %v1812
      %1814 = vmatprep.mubr.f32.mxu0 0.0
      %1815 = vmatmul.mubr.f32.gmra.mrb[0].mxu0 %v1475
      %v1816 = vpop.f32.mrb[0].mxu0
      %v1817 = vadd.f32 0.0, %v1816
      %v1818 = vpop.f32.mrb[0].mxu0
      %v1819 = vadd.f32 0.0, %v1818
      %1820 = vmatprep.mubr.f32.mxu0 0.0
      %1821 = vmatmul.mubr.f32.gmra.mrb[0].mxu0 %v1478
      %v1822 = vpop.f32.mrb[0].mxu0
      %v1823 = vadd.f32 0.0, %v1822
      %v1824 = vpop.f32.mrb[0].mxu0
      %v1825 = vadd.f32 0.0, %v1824
      %1826 = vmatprep.mubr.f32.mxu0 0.0
      %1827 = vmatmul.mubr.f32.gmra.mrb[0].mxu0 %v1481
      %v1828 = vpop.f32.mrb[0].mxu0
      %v1829 = vadd.f32 0.0, %v1828
      %v1830 = vpop.f32.mrb[0].mxu0
      %v1831 = vadd.f32 0.0, %v1830
      %1832 = vmatprep.mubr.f32.mxu0 0.0
      %1833 = vmatmul.mubr.f32.gmra.mrb[0].mxu0 %v1484
      %v1834 = vpop.f32.mrb[0].mxu0
      %v1835 = vadd.f32 0.0, %v1834
      %v1836 = vpop.f32.mrb[0].mxu0
      %v1837 = vadd.f32 0.0, %v1836
      %1838 = vmatprep.mubr.f32.mxu0 0.0
      %1839 = vmatmul.mubr.f32.gmra.mrb[0].mxu0 %v1487
      %v1840 = vpop.f32.mrb[0].mxu0
      %v1841 = vadd.f32 0.0, %v1840
      %v1842 = vpop.f32.mrb[0].mxu0
      %v1843 = vadd.f32 0.0, %v1842
      %1844 = vmatprep.mubr.f32.mxu0 0.0
      %1845 = vmatmul.mubr.f32.gmra.mrb[0].mxu0 %v1490
      %v1846 = vpop.f32.mrb[0].mxu0
      %v1847 = vadd.f32 0.0, %v1846
      %v1848 = vpop.f32.mrb[0].mxu0
      %v1849 = vadd.f32 0.0, %v1848
      %1850 = vmatprep.mubr.f32.mxu0 0.0
      %1851 = vmatmul.mubr.f32.gmra.mrb[0].mxu0 %v1493
      %v1852 = vpop.f32.mrb[0].mxu0
      %v1853 = vadd.f32 0.0, %v1852
      %v1854 = vpop.f32.mrb[0].mxu0
      %v1855 = vadd.f32 0.0, %v1854
      %1856 = vmatprep.mubr.f32.mxu0 0.0
      %1857 = vmatmul.mubr.f32.gmra.mrb[0].mxu0 %v1496
      %v1858 = vpop.f32.mrb[0].mxu0
      %v1859 = vadd.f32 0.0, %v1858
      %v1860 = vpop.f32.mrb[0].mxu0
      %v1861 = vadd.f32 0.0, %v1860
      %1862 = vmatprep.mubr.f32.mxu0 0.0
      %1863 = vmatmul.mubr.f32.gmra.mrb[0].mxu0 %v1499
      %v1864 = vpop.f32.mrb[0].mxu0
      %v1865 = vadd.f32 0.0, %v1864
      %v1866 = vpop.f32.mrb[0].mxu0
      %v1867 = vadd.f32 0.0, %v1866
      %1868 = vmatprep.mubr.f32.mxu0 0.0
      %1869 = vmatmul.mubr.f32.gmra.mrb[0].mxu0 %v1502
      %v1870 = vpop.f32.mrb[0].mxu0
      %v1871 = vadd.f32 0.0, %v1870
      %v1872 = vpop.f32.mrb[0].mxu0
      %v1873 = vadd.f32 0.0, %v1872
      %1874 = vmatprep.mubr.f32.mxu0 0.0
      %1875 = vmatmul.mubr.f32.gmra.mrb[0].mxu0 %v1505
      %v1876 = vpop.f32.mrb[0].mxu0
      %v1877 = vadd.f32 0.0, %v1876
      %v1878 = vpop.f32.mrb[0].mxu0
      %v1879 = vadd.f32 0.0, %v1878
      %1880 = vmatprep.mubr.f32.mxu0 0.0
      %1881 = vmatmul.mubr.f32.gmra.mrb[0].mxu0 %v1508
      %v1882 = vpop.f32.mrb[0].mxu0
      %v1883 = vadd.f32 0.0, %v1882
      %v1884 = vpop.f32.mrb[0].mxu0
      %v1885 = vadd.f32 0.0, %v1884
      %1886 = vmatprep.mubr.f32.mxu0 0.0
      %1887 = vmatmul.mubr.f32.gmra.mrb[0].mxu0 %v1511
      %v1888 = vpop.f32.mrb[0].mxu0
      %v1889 = vadd.f32 0.0, %v1888
      %v1890 = vpop.f32.mrb[0].mxu0
      %v1891 = vadd.f32 0.0, %v1890
      %1892 = vmatprep.mubr.f32.mxu0 0.0
      %1893 = vmatmul.mubr.f32.gmra.mrb[0].mxu0 %v1514
      %v1894 = vpop.f32.mrb[0].mxu0
      %v1895 = vadd.f32 0.0, %v1894
      %v1896 = vpop.f32.mrb[0].mxu0
      %v1897 = vadd.f32 0.0, %v1896
      %1898 = vdwg.mxu0
      %v1899 = vld [vmem:[%s4] sm:$0xff]
      %v1900 = vld [vmem:[%s4 + $0x8] sm:$0xff]
      %v1901 = vld [vmem:[%s4 + $0x10] sm:$0xff]
      %v1902 = vld [vmem:[%s4 + $0x18] sm:$0xff]
      %v1903 = vld [vmem:[%s4 + $0x20] sm:$0xff]
      %v1904 = vld [vmem:[%s4 + $0x28] sm:$0xff]
      %v1905 = vld [vmem:[%s4 + $0x30] sm:$0xff]
      %v1906 = vld [vmem:[%s4 + $0x38] sm:$0xff]
      %v1907 = vld [vmem:[%s4 + $0x40] sm:$0xff]
      %v1908 = vld [vmem:[%s4 + $0x48] sm:$0xff]
      %v1909 = vld [vmem:[%s4 + $0x50] sm:$0xff]
      %v1910 = vld [vmem:[%s4 + $0x58] sm:$0xff]
      %v1911 = vld [vmem:[%s4 + $0x60] sm:$0xff]
      %v1912 = vld [vmem:[%s4 + $0x68] sm:$0xff]
      %v1913 = vld [vmem:[%s4 + $0x70] sm:$0xff]
      %v1914 = vld [vmem:[%s4 + $0x78] sm:$0xff]
      %v1915 = vld [vmem:[%s4 + $0x80] sm:$0xff]
      %v1916 = vld [vmem:[%s4 + $0x88] sm:$0xff]
      %v1917 = vld [vmem:[%s4 + $0x90] sm:$0xff]
      %v1918 = vld [vmem:[%s4 + $0x98] sm:$0xff]
      %v1919 = vld [vmem:[%s4 + $0xa0] sm:$0xff]
      %v1920 = vld [vmem:[%s4 + $0xa8] sm:$0xff]
      %v1921 = vld [vmem:[%s4 + $0xb0] sm:$0xff]
      %v1922 = vld [vmem:[%s4 + $0xb8] sm:$0xff]
      %v1923 = vld [vmem:[%s4 + $0xc0] sm:$0xff]
      %v1924 = vld [vmem:[%s4 + $0xc8] sm:$0xff]
      %v1925 = vld [vmem:[%s4 + $0xd0] sm:$0xff]
      %v1926 = vld [vmem:[%s4 + $0xd8] sm:$0xff]
      %v1927 = vld [vmem:[%s4 + $0xe0] sm:$0xff]
      %v1928 = vld [vmem:[%s4 + $0xe8] sm:$0xff]
      %v1929 = vld [vmem:[%s4 + $0xf0] sm:$0xff]
      %v1930 = vld [vmem:[%s4 + $0xf8] sm:$0xff]
      %v1931 = vld [vmem:[%s4 + $0x100] sm:$0xff]
      %v1932 = vld [vmem:[%s4 + $0x108] sm:$0xff]
      %v1933 = vld [vmem:[%s4 + $0x110] sm:$0xff]
      %v1934 = vld [vmem:[%s4 + $0x118] sm:$0xff]
      %v1935 = vld [vmem:[%s4 + $0x120] sm:$0xff]
      %v1936 = vld [vmem:[%s4 + $0x128] sm:$0xff]
      %v1937 = vld [vmem:[%s4 + $0x130] sm:$0xff]
      %v1938 = vld [vmem:[%s4 + $0x138] sm:$0xff]
      %v1939 = vld [vmem:[%s4 + $0x140] sm:$0xff]
      %v1940 = vld [vmem:[%s4 + $0x148] sm:$0xff]
      %v1941 = vld [vmem:[%s4 + $0x150] sm:$0xff]
      %v1942 = vld [vmem:[%s4 + $0x158] sm:$0xff]
      %v1943 = vld [vmem:[%s4 + $0x160] sm:$0xff]
      %v1944 = vld [vmem:[%s4 + $0x168] sm:$0xff]
      %v1945 = vld [vmem:[%s4 + $0x170] sm:$0xff]
      %v1946 = vld [vmem:[%s4 + $0x178] sm:$0xff]
      %v1947 = vld [vmem:[%s4 + $0x180] sm:$0xff]
      %v1948 = vld [vmem:[%s4 + $0x188] sm:$0xff]
      %v1949 = vld [vmem:[%s4 + $0x190] sm:$0xff]
      %v1950 = vld [vmem:[%s4 + $0x198] sm:$0xff]
      %v1951 = vld [vmem:[%s4 + $0x1a0] sm:$0xff]
      %v1952 = vld [vmem:[%s4 + $0x1a8] sm:$0xff]
      %v1953 = vld [vmem:[%s4 + $0x1b0] sm:$0xff]
      %v1954 = vld [vmem:[%s4 + $0x1b8] sm:$0xff]
      %v1955 = vld [vmem:[%s4 + $0x1c0] sm:$0xff]
      %v1956 = vld [vmem:[%s4 + $0x1c8] sm:$0xff]
      %v1957 = vld [vmem:[%s4 + $0x1d0] sm:$0xff]
      %v1958 = vld [vmem:[%s4 + $0x1d8] sm:$0xff]
      %v1959 = vld [vmem:[%s4 + $0x1e0] sm:$0xff]
      %v1960 = vld [vmem:[%s4 + $0x1e8] sm:$0xff]
      %v1961 = vld [vmem:[%s4 + $0x1f0] sm:$0xff]
      %v1962 = vld [vmem:[%s4 + $0x1f8] sm:$0xff]
      %v1963 = vld [vmem:[%s4 + $0x200] sm:$0xff]
      %v1964 = vld [vmem:[%s4 + $0x208] sm:$0xff]
      %v1965 = vld [vmem:[%s4 + $0x210] sm:$0xff]
      %v1966 = vld [vmem:[%s4 + $0x218] sm:$0xff]
      %v1967 = vld [vmem:[%s4 + $0x220] sm:$0xff]
      %v1968 = vld [vmem:[%s4 + $0x228] sm:$0xff]
      %v1969 = vld [vmem:[%s4 + $0x230] sm:$0xff]
      %v1970 = vld [vmem:[%s4 + $0x238] sm:$0xff]
      %v1971 = vld [vmem:[%s4 + $0x240] sm:$0xff]
      %v1972 = vld [vmem:[%s4 + $0x248] sm:$0xff]
      %v1973 = vld [vmem:[%s4 + $0x250] sm:$0xff]
      %v1974 = vld [vmem:[%s4 + $0x258] sm:$0xff]
      %v1975 = vld [vmem:[%s4 + $0x260] sm:$0xff]
      %v1976 = vld [vmem:[%s4 + $0x268] sm:$0xff]
      %v1977 = vld [vmem:[%s4 + $0x270] sm:$0xff]
      %v1978 = vld [vmem:[%s4 + $0x278] sm:$0xff]
      %v1979 = vmul.f32 %v1596, %v1899
      %v1980 = vmul.f32 %v1598, %v1900
      %v1981 = vmul.f32 %v1781, %v1901
      %v1982 = vmul.f32 %v1783, %v1902
      %v1983 = vmul.f32 %v1602, %v1903
      %v1984 = vmul.f32 %v1604, %v1904
      %v1985 = vmul.f32 %v1787, %v1905
      %v1986 = vmul.f32 %v1789, %v1906
      %v1987 = vmul.f32 %v1608, %v1907
      %v1988 = vmul.f32 %v1610, %v1908
      %v1989 = vmul.f32 %v1793, %v1909
      %v1990 = vmul.f32 %v1795, %v1910
      %v1991 = vmul.f32 %v1614, %v1911
      %v1992 = vmul.f32 %v1616, %v1912
      %v1993 = vmul.f32 %v1799, %v1913
      %v1994 = vmul.f32 %v1801, %v1914
      %v1995 = vmul.f32 %v1620, %v1915
      %v1996 = vmul.f32 %v1622, %v1916
      %v1997 = vmul.f32 %v1805, %v1917
      %v1998 = vmul.f32 %v1807, %v1918
      %v1999 = vmul.f32 %v1626, %v1919
      %v2000 = vmul.f32 %v1628, %v1920
      %v2001 = vmul.f32 %v1811, %v1921
      %v2002 = vmul.f32 %v1813, %v1922
      %v2003 = vmul.f32 %v1632, %v1923
      %v2004 = vmul.f32 %v1634, %v1924
      %v2005 = vmul.f32 %v1817, %v1925
      %v2006 = vmul.f32 %v1819, %v1926
      %v2007 = vmul.f32 %v1638, %v1927
      %v2008 = vmul.f32 %v1640, %v1928
      %v2009 = vmul.f32 %v1823, %v1929
      %v2010 = vmul.f32 %v1825, %v1930
      %v2011 = vmul.f32 %v1644, %v1931
      %v2012 = vmul.f32 %v1646, %v1932
      %v2013 = vmul.f32 %v1829, %v1933
      %v2014 = vmul.f32 %v1831, %v1934
      %v2015 = vmul.f32 %v1650, %v1935
      %v2016 = vmul.f32 %v1652, %v1936
      %v2017 = vmul.f32 %v1835, %v1937
      %v2018 = vmul.f32 %v1837, %v1938
      %v2019 = vmul.f32 %v1656, %v1939
      %v2020 = vmul.f32 %v1658, %v1940
      %v2021 = vmul.f32 %v1841, %v1941
      %v2022 = vmul.f32 %v1843, %v1942
      %v2023 = vmul.f32 %v1662, %v1943
      %v2024 = vmul.f32 %v1664, %v1944
      %v2025 = vmul.f32 %v1847, %v1945
      %v2026 = vmul.f32 %v1849, %v1946
      %v2027 = vmul.f32 %v1668, %v1947
      %v2028 = vmul.f32 %v1670, %v1948
      %v2029 = vmul.f32 %v1853, %v1949
      %v2030 = vmul.f32 %v1855, %v1950
      %v2031 = vmul.f32 %v1674, %v1951
      %v2032 = vmul.f32 %v1676, %v1952
      %v2033 = vmul.f32 %v1859, %v1953
      %v2034 = vmul.f32 %v1861, %v1954
      %v2035 = vmul.f32 %v1680, %v1955
      %v2036 = vmul.f32 %v1682, %v1956
      %v2037 = vmul.f32 %v1865, %v1957
      %v2038 = vmul.f32 %v1867, %v1958
      %v2039 = vmul.f32 %v1686, %v1959
      %v2040 = vmul.f32 %v1688, %v1960
      %v2041 = vmul.f32 %v1871, %v1961
      %v2042 = vmul.f32 %v1873, %v1962
      %v2043 = vmul.f32 %v1692, %v1963
      %v2044 = vmul.f32 %v1694, %v1964
      %v2045 = vmul.f32 %v1877, %v1965
      %v2046 = vmul.f32 %v1879, %v1966
      %v2047 = vmul.f32 %v1698, %v1967
      %v2048 = vmul.f32 %v1700, %v1968
      %v2049 = vmul.f32 %v1883, %v1969
      %v2050 = vmul.f32 %v1885, %v1970
      %v2051 = vmul.f32 %v1704, %v1971
      %v2052 = vmul.f32 %v1706, %v1972
      %v2053 = vmul.f32 %v1889, %v1973
      %v2054 = vmul.f32 %v1891, %v1974
      %v2055 = vmul.f32 %v1710, %v1975
      %v2056 = vmul.f32 %v1712, %v1976
      %v2057 = vmul.f32 %v1895, %v1977
      %v2058 = vmul.f32 %v1897, %v1978
      %v2059 = vld [vmem:[%s5] sm:$0xff]
      %v2060 = vld [vmem:[%s5 + $0x8] sm:$0xff]
      %vm2061 = vcmask 261120
      %v2063 = vsel %vm2061, %v2060, 0
      %2065 = vmatprep.subr.mxu0 %v1980
      %2066 = vmatpush1.msra.mxu0 %v1979
      %2067 = vmatprep.subr.mxu0 %v1984
      %2068 = vmatpush1.msra.mxu0 %v1983
      %2069 = vmatprep.subr.mxu0 %v1988
      %2070 = vmatpush1.msra.mxu0 %v1987
      %2071 = vmatprep.subr.mxu0 %v1992
      %2072 = vmatpush1.msra.mxu0 %v1991
      %2073 = vmatprep.subr.mxu0 %v1996
      %2074 = vmatpush1.msra.mxu0 %v1995
      %2075 = vmatprep.subr.mxu0 %v2000
      %2076 = vmatpush1.msra.mxu0 %v1999
      %2077 = vmatprep.subr.mxu0 %v2004
      %2078 = vmatpush1.msra.mxu0 %v2003
      %2079 = vmatprep.subr.mxu0 %v2008
      %2080 = vmatpush1.msra.mxu0 %v2007
      %2081 = vmatprep.subr.mxu0 %v2012
      %2082 = vmatpush1.msra.mxu0 %v2011
      %2083 = vmatprep.subr.mxu0 %v2016
      %2084 = vmatpush1.msra.mxu0 %v2015
      %2085 = vmatprep.subr.mxu0 %v2020
      %2086 = vmatpush1.msra.mxu0 %v2019
      %2087 = vmatprep.subr.mxu0 %v2024
      %2088 = vmatpush1.msra.mxu0 %v2023
      %2089 = vmatprep.subr.mxu0 %v2028
      %2090 = vmatpush1.msra.mxu0 %v2027
      %2091 = vmatprep.subr.mxu0 %v2032
      %2092 = vmatpush1.msra.mxu0 %v2031
      %2093 = vmatprep.subr.mxu0 %v2036
      %2094 = vmatpush1.msra.mxu0 %v2035
      %2095 = vmatprep.subr.mxu0 %v2040
      %2096 = vmatpush1.msra.mxu0 %v2039
      %2097 = vmatprep.subr.mxu0 %v2044
      %2098 = vmatpush1.msra.mxu0 %v2043
      %2099 = vmatprep.subr.mxu0 %v2048
      %2100 = vmatpush1.msra.mxu0 %v2047
      %2101 = vmatprep.subr.mxu0 %v2052
      %2102 = vmatpush1.msra.mxu0 %v2051
      %2103 = vmatprep.subr.mxu0 %v2056
      %2104 = vmatpush1.msra.mxu0 %v2055
      %2105 = vmatprep.subr.mxu0 0.0
      %2106 = vmatpush1.msra.mxu0 0.0
      %2107 = vmatprep.subr.mxu0 0.0
      %2108 = vmatpush1.msra.mxu0 0.0
      %2109 = vmatprep.subr.mxu0 0.0
      %2110 = vmatpush1.msra.mxu0 0.0
      %2111 = vmatprep.subr.mxu0 0.0
      %2112 = vmatpush1.msra.mxu0 0.0
      %2113 = vmatprep.subr.mxu0 0.0
      %2114 = vmatpush1.msra.mxu0 0.0
      %2115 = vmatprep.subr.mxu0 0.0
      %2116 = vmatpush1.msra.mxu0 0.0
      %2117 = vmatprep.subr.mxu0 0.0
      %2118 = vmatpush1.msra.mxu0 0.0
      %2119 = vmatprep.subr.mxu0 0.0
      %2120 = vmatpush1.msra.mxu0 0.0
      %2121 = vmatprep.subr.mxu0 0.0
      %2122 = vmatpush1.msra.mxu0 0.0
      %2123 = vmatprep.subr.mxu0 0.0
      %2124 = vmatpush1.msra.mxu0 0.0
      %2125 = vmatprep.subr.mxu0 0.0
      %2126 = vmatpush1.msra.mxu0 0.0
      %2127 = vmatprep.subr.mxu0 0.0
      %2128 = vmatpush1.msra.mxu0 0.0
      %2129 = vmatprep.mubr.f32.mxu0 %v2063
      %2130 = vmatmul.mubr.f32.gmra.mrb[0].mxu0 %v2059
      %v2131 = vpop.f32.mrb[0].mxu0
      %v2132 = vadd.f32 0.0, %v2131
      %v2133 = vpop.f32.mrb[0].mxu0
      %v2134 = vadd.f32 0.0, %v2133
      %2135 = vdwg.mxu0
      %2136 = vmatprep.subr.mxu0 %v1982
      %2137 = vmatpush1.msra.mxu0 %v1981
      %2138 = vmatprep.subr.mxu0 %v1986
      %2139 = vmatpush1.msra.mxu0 %v1985
      %2140 = vmatprep.subr.mxu0 %v1990
      %2141 = vmatpush1.msra.mxu0 %v1989
      %2142 = vmatprep.subr.mxu0 %v1994
      %2143 = vmatpush1.msra.mxu0 %v1993
      %2144 = vmatprep.subr.mxu0 %v1998
      %2145 = vmatpush1.msra.mxu0 %v1997
      %2146 = vmatprep.subr.mxu0 %v2002
      %2147 = vmatpush1.msra.mxu0 %v2001
      %2148 = vmatprep.subr.mxu0 %v2006
      %2149 = vmatpush1.msra.mxu0 %v2005
      %2150 = vmatprep.subr.mxu0 %v2010
      %2151 = vmatpush1.msra.mxu0 %v2009
      %2152 = vmatprep.subr.mxu0 %v2014
      %2153 = vmatpush1.msra.mxu0 %v2013
      %2154 = vmatprep.subr.mxu0 %v2018
      %2155 = vmatpush1.msra.mxu0 %v2017
      %2156 = vmatprep.subr.mxu0 %v2022
      %2157 = vmatpush1.msra.mxu0 %v2021
      %2158 = vmatprep.subr.mxu0 %v2026
      %2159 = vmatpush1.msra.mxu0 %v2025
      %2160 = vmatprep.subr.mxu0 %v2030
      %2161 = vmatpush1.msra.mxu0 %v2029
      %2162 = vmatprep.subr.mxu0 %v2034
      %2163 = vmatpush1.msra.mxu0 %v2033
      %2164 = vmatprep.subr.mxu0 %v2038
      %2165 = vmatpush1.msra.mxu0 %v2037
      %2166 = vmatprep.subr.mxu0 %v2042
      %2167 = vmatpush1.msra.mxu0 %v2041
      %2168 = vmatprep.subr.mxu0 %v2046
      %2169 = vmatpush1.msra.mxu0 %v2045
      %2170 = vmatprep.subr.mxu0 %v2050
      %2171 = vmatpush1.msra.mxu0 %v2049
      %2172 = vmatprep.subr.mxu0 %v2054
      %2173 = vmatpush1.msra.mxu0 %v2053
      %2174 = vmatprep.subr.mxu0 %v2058
      %2175 = vmatpush1.msra.mxu0 %v2057
      %2176 = vmatprep.subr.mxu0 0.0
      %2177 = vmatpush1.msra.mxu0 0.0
      %2178 = vmatprep.subr.mxu0 0.0
      %2179 = vmatpush1.msra.mxu0 0.0
      %2180 = vmatprep.subr.mxu0 0.0
      %2181 = vmatpush1.msra.mxu0 0.0
      %2182 = vmatprep.subr.mxu0 0.0
      %2183 = vmatpush1.msra.mxu0 0.0
      %2184 = vmatprep.subr.mxu0 0.0
      %2185 = vmatpush1.msra.mxu0 0.0
      %2186 = vmatprep.subr.mxu0 0.0
      %2187 = vmatpush1.msra.mxu0 0.0
      %2188 = vmatprep.subr.mxu0 0.0
      %2189 = vmatpush1.msra.mxu0 0.0
      %2190 = vmatprep.subr.mxu0 0.0
      %2191 = vmatpush1.msra.mxu0 0.0
      %2192 = vmatprep.subr.mxu0 0.0
      %2193 = vmatpush1.msra.mxu0 0.0
      %2194 = vmatprep.subr.mxu0 0.0
      %2195 = vmatpush1.msra.mxu0 0.0
      %2196 = vmatprep.subr.mxu0 0.0
      %2197 = vmatpush1.msra.mxu0 0.0
      %2198 = vmatprep.subr.mxu0 0.0
      %2199 = vmatpush1.msra.mxu0 0.0
      %2200 = vmatprep.mubr.f32.mxu0 %v2063
      %2201 = vmatmul.mubr.f32.gmra.mrb[0].mxu0 %v2059
      %v2202 = vpop.f32.mrb[0].mxu0
      %v2203 = vadd.f32 0.0, %v2202
      %v2204 = vpop.f32.mrb[0].mxu0
      %v2205 = vadd.f32 0.0, %v2204
      %2206 = vdwg.mxu0
      %v2207 = vld [vmem:[%s6] sm:$0xff]
      %v2208 = vld [vmem:[%s6 + $0x8] sm:$0xff]
      %v2209 = vld [vmem:[%s6 + $0x10] sm:$0xff]
      %v2210 = vld [vmem:[%s6 + $0x18] sm:$0xff]
      %v2211 = vld [vmem:[%s6 + $0x20] sm:$0xff]
      %v2212 = vld [vmem:[%s6 + $0x28] sm:$0xff]
      %v2213 = vld [vmem:[%s6 + $0x30] sm:$0xff]
      %v2214 = vld [vmem:[%s6 + $0x38] sm:$0xff]
      %v2215 = vld [vmem:[%s6 + $0x40] sm:$0xff]
      %v2216 = vld [vmem:[%s6 + $0x48] sm:$0xff]
      %v2217 = vld [vmem:[%s6 + $0x50] sm:$0xff]
      %v2218 = vld [vmem:[%s6 + $0x58] sm:$0xff]
      %v2219 = vld [vmem:[%s6 + $0x60] sm:$0xff]
      %v2220 = vld [vmem:[%s6 + $0x68] sm:$0xff]
      %v2221 = vld [vmem:[%s6 + $0x70] sm:$0xff]
      %v2222 = vld [vmem:[%s6 + $0x78] sm:$0xff]
      %v2223 = vld [vmem:[%s6 + $0x80] sm:$0xff]
      %v2224 = vld [vmem:[%s6 + $0x88] sm:$0xff]
      %v2225 = vld [vmem:[%s6 + $0x90] sm:$0xff]
      %v2226 = vld [vmem:[%s6 + $0x98] sm:$0xff]
      %v2227 = vld [vmem:[%s6 + $0xa0] sm:$0xff]
      %v2228 = vld [vmem:[%s6 + $0xa8] sm:$0xff]
      %v2229 = vld [vmem:[%s6 + $0xb0] sm:$0xff]
      %v2230 = vld [vmem:[%s6 + $0xb8] sm:$0xff]
      %v2231 = vld [vmem:[%s6 + $0xc0] sm:$0xff]
      %v2232 = vld [vmem:[%s6 + $0xc8] sm:$0xff]
      %v2233 = vld [vmem:[%s6 + $0xd0] sm:$0xff]
      %v2234 = vld [vmem:[%s6 + $0xd8] sm:$0xff]
      %v2235 = vld [vmem:[%s6 + $0xe0] sm:$0xff]
      %v2236 = vld [vmem:[%s6 + $0xe8] sm:$0xff]
      %v2237 = vld [vmem:[%s6 + $0xf0] sm:$0xff]
      %v2238 = vld [vmem:[%s6 + $0xf8] sm:$0xff]
      %v2239 = vld [vmem:[%s6 + $0x100] sm:$0xff]
      %v2240 = vld [vmem:[%s6 + $0x108] sm:$0xff]
      %v2241 = vld [vmem:[%s6 + $0x110] sm:$0xff]
      %v2242 = vld [vmem:[%s6 + $0x118] sm:$0xff]
      %v2243 = vld [vmem:[%s6 + $0x120] sm:$0xff]
      %v2244 = vld [vmem:[%s6 + $0x128] sm:$0xff]
      %v2245 = vld [vmem:[%s6 + $0x130] sm:$0xff]
      %v2246 = vld [vmem:[%s6 + $0x138] sm:$0xff]
      %v2247 = vld [vmem:[%s6 + $0x140] sm:$0xff]
      %v2248 = vld [vmem:[%s6 + $0x148] sm:$0xff]
      %v2249 = vld [vmem:[%s6 + $0x150] sm:$0xff]
      %v2250 = vld [vmem:[%s6 + $0x158] sm:$0xff]
      %v2251 = vld [vmem:[%s6 + $0x160] sm:$0xff]
      %v2252 = vld [vmem:[%s6 + $0x168] sm:$0xff]
      %v2253 = vld [vmem:[%s6 + $0x170] sm:$0xff]
      %v2254 = vld [vmem:[%s6 + $0x178] sm:$0xff]
      %v2255 = vld [vmem:[%s6 + $0x180] sm:$0xff]
      %v2256 = vld [vmem:[%s6 + $0x188] sm:$0xff]
      %v2257 = vld [vmem:[%s7] sm:$0x1]
      %v2259 = vlaneseq
      %v2260 = vshrl.u32 %v2259, 7
      %v2261 = vsub.s32 0, %v2260
      %v2262 = vrot.slane %v2257, %v2261
      %vm2264 = vcmask 130048
      %v2266 = vsel %vm2264, %v2205, 0
      %2268 = vmatprep.subr.mxu0 0.0
      %2269 = vmatpush1.msra.mxu0 %v2207
      %2270 = vmatprep.subr.mxu0 0.0
      %2271 = vmatpush1.msra.mxu0 %v2208
      %2272 = vmatprep.subr.mxu0 0.0
      %2273 = vmatpush1.msra.mxu0 %v2209
      %2274 = vmatprep.subr.mxu0 0.0
      %2275 = vmatpush1.msra.mxu0 %v2210
      %2276 = vmatprep.subr.mxu0 0.0
      %2277 = vmatpush1.msra.mxu0 %v2211
      %2278 = vmatprep.subr.mxu0 0.0
      %2279 = vmatpush1.msra.mxu0 %v2212
      %2280 = vmatprep.subr.mxu0 0.0
      %2281 = vmatpush1.msra.mxu0 %v2213
      %2282 = vmatprep.subr.mxu0 0.0
      %2283 = vmatpush1.msra.mxu0 %v2214
      %2284 = vmatprep.subr.mxu0 0.0
      %2285 = vmatpush1.msra.mxu0 %v2215
      %2286 = vmatprep.subr.mxu0 0.0
      %2287 = vmatpush1.msra.mxu0 %v2216
      %2288 = vmatprep.subr.mxu0 0.0
      %2289 = vmatpush1.msra.mxu0 %v2217
      %2290 = vmatprep.subr.mxu0 0.0
      %2291 = vmatpush1.msra.mxu0 %v2218
      %2292 = vmatprep.subr.mxu0 0.0
      %2293 = vmatpush1.msra.mxu0 %v2219
      %2294 = vmatprep.subr.mxu0 0.0
      %2295 = vmatpush1.msra.mxu0 %v2220
      %2296 = vmatprep.subr.mxu0 0.0
      %2297 = vmatpush1.msra.mxu0 %v2221
      %2298 = vmatprep.subr.mxu0 0.0
      %2299 = vmatpush1.msra.mxu0 %v2222
      %2300 = vmatprep.subr.mxu0 0.0
      %2301 = vmatpush1.msra.mxu0 %v2223
      %2302 = vmatprep.subr.mxu0 0.0
      %2303 = vmatpush1.msra.mxu0 %v2224
      %2304 = vmatprep.subr.mxu0 0.0
      %2305 = vmatpush1.msra.mxu0 %v2225
      %2306 = vmatprep.subr.mxu0 0.0
      %2307 = vmatpush1.msra.mxu0 %v2226
      %2308 = vmatprep.subr.mxu0 0.0
      %2309 = vmatpush1.msra.mxu0 %v2227
      %2310 = vmatprep.subr.mxu0 0.0
      %2311 = vmatpush1.msra.mxu0 %v2228
      %2312 = vmatprep.subr.mxu0 0.0
      %2313 = vmatpush1.msra.mxu0 %v2229
      %2314 = vmatprep.subr.mxu0 0.0
      %2315 = vmatpush1.msra.mxu0 %v2230
      %2316 = vmatprep.subr.mxu0 0.0
      %2317 = vmatpush1.msra.mxu0 %v2231
      %2318 = vmatprep.subr.mxu0 0.0
      %2319 = vmatpush1.msra.mxu0 %v2232
      %2320 = vmatprep.subr.mxu0 0.0
      %2321 = vmatpush1.msra.mxu0 %v2233
      %2322 = vmatprep.subr.mxu0 0.0
      %2323 = vmatpush1.msra.mxu0 %v2234
      %2324 = vmatprep.subr.mxu0 0.0
      %2325 = vmatpush1.msra.mxu0 %v2235
      %2326 = vmatprep.subr.mxu0 0.0
      %2327 = vmatpush1.msra.mxu0 %v2236
      %2328 = vmatprep.subr.mxu0 0.0
      %2329 = vmatpush1.msra.mxu0 %v2237
      %2330 = vmatprep.subr.mxu0 0.0
      %2331 = vmatpush1.msra.mxu0 %v2238
      %2332 = vmatprep.mubr.f32.mxu0 %v2134
      %2333 = vmatmul.mubr.f32.gmra.mrb[0].mxu0 %v2132
      %v2334 = vpop.f32.mrb[0].mxu0
      %v2335 = vadd.f32 %v2262, %v2334
      %v2336 = vpop.f32.mrb[0].mxu0
      %2337 = vdwg.mxu0
      %2338 = vmatprep.subr.mxu0 0.0
      %2339 = vmatpush1.msra.mxu0 %v2239
      %2340 = vmatprep.subr.mxu0 0.0
      %2341 = vmatpush1.msra.mxu0 %v2240
      %2342 = vmatprep.subr.mxu0 0.0
      %2343 = vmatpush1.msra.mxu0 %v2241
      %2344 = vmatprep.subr.mxu0 0.0
      %2345 = vmatpush1.msra.mxu0 %v2242
      %2346 = vmatprep.subr.mxu0 0.0
      %2347 = vmatpush1.msra.mxu0 %v2243
      %2348 = vmatprep.subr.mxu0 0.0
      %2349 = vmatpush1.msra.mxu0 %v2244
      %2350 = vmatprep.subr.mxu0 0.0
      %2351 = vmatpush1.msra.mxu0 %v2245
      %2352 = vmatprep.subr.mxu0 0.0
      %2353 = vmatpush1.msra.mxu0 %v2246
      %2354 = vmatprep.subr.mxu0 0.0
      %2355 = vmatpush1.msra.mxu0 %v2247
      %2356 = vmatprep.subr.mxu0 0.0
      %2357 = vmatpush1.msra.mxu0 %v2248
      %2358 = vmatprep.subr.mxu0 0.0
      %2359 = vmatpush1.msra.mxu0 %v2249
      %2360 = vmatprep.subr.mxu0 0.0
      %2361 = vmatpush1.msra.mxu0 %v2250
      %2362 = vmatprep.subr.mxu0 0.0
      %2363 = vmatpush1.msra.mxu0 %v2251
      %2364 = vmatprep.subr.mxu0 0.0
      %2365 = vmatpush1.msra.mxu0 %v2252
      %2366 = vmatprep.subr.mxu0 0.0
      %2367 = vmatpush1.msra.mxu0 %v2253
      %2368 = vmatprep.subr.mxu0 0.0
      %2369 = vmatpush1.msra.mxu0 %v2254
      %2370 = vmatprep.subr.mxu0 0.0
      %2371 = vmatpush1.msra.mxu0 %v2255
      %2372 = vmatprep.subr.mxu0 0.0
      %2373 = vmatpush1.msra.mxu0 %v2256
      %2374 = vmatprep.subr.mxu0 0.0
      %2375 = vmatpush1.msra.mxu0 0.0
      %2376 = vmatprep.subr.mxu0 0.0
      %2377 = vmatpush1.msra.mxu0 0.0
      %2378 = vmatprep.subr.mxu0 0.0
      %2379 = vmatpush1.msra.mxu0 0.0
      %2380 = vmatprep.subr.mxu0 0.0
      %2381 = vmatpush1.msra.mxu0 0.0
      %2382 = vmatprep.subr.mxu0 0.0
      %2383 = vmatpush1.msra.mxu0 0.0
      %2384 = vmatprep.subr.mxu0 0.0
      %2385 = vmatpush1.msra.mxu0 0.0
      %2386 = vmatprep.subr.mxu0 0.0
      %2387 = vmatpush1.msra.mxu0 0.0
      %2388 = vmatprep.subr.mxu0 0.0
      %2389 = vmatpush1.msra.mxu0 0.0
      %2390 = vmatprep.subr.mxu0 0.0
      %2391 = vmatpush1.msra.mxu0 0.0
      %2392 = vmatprep.subr.mxu0 0.0
      %2393 = vmatpush1.msra.mxu0 0.0
      %2394 = vmatprep.subr.mxu0 0.0
      %2395 = vmatpush1.msra.mxu0 0.0
      %2396 = vmatprep.subr.mxu0 0.0
      %2397 = vmatpush1.msra.mxu0 0.0
      %2398 = vmatprep.subr.mxu0 0.0
      %2399 = vmatpush1.msra.mxu0 0.0
      %2400 = vmatprep.subr.mxu0 0.0
      %2401 = vmatpush1.msra.mxu0 0.0
      %2402 = vmatprep.mubr.f32.mxu0 %v2266
      %2403 = vmatmul.mubr.f32.gmra.mrb[0].mxu0 %v2203
      %v2404 = vpop.f32.mrb[0].mxu0
      %v2405 = vadd.f32 %v2335, %v2404
      %v2406 = vpop.f32.mrb[0].mxu0
      %2407 = vdwg.mxu0
      %vm2408 = vcmask 162816
      %2409 = vst.msk [vmem:[%s560] sm:$0xff] %vm2408, %v2405
      %v2410 = vld [vmem:[%s8] sm:$0xff]
      %v2411 = vld [vmem:[%s8 + $0x8] sm:$0xff]
      %v2412 = vld [vmem:[%s8 + $0x10] sm:$0x3]
      %v2413 = vld [vmem:[%s8 + $0x18] sm:$0x3]
      %vm2414 = vcmask 80896
      %v2416 = vsel %vm2414, %v2405, 0
      %vm2418 = vcmask 1041408
      %v2420 = vsel %vm2418, %v2412, 0
      %v2423 = vsel %vm2418, %v2413, 0
      %2425 = vmatprep.subr.mxu0 %v2411
      %2426 = vmatpush1.msra.mxu0 %v2410
      %2427 = vmatprep.subr.mxu0 %v2423
      %2428 = vmatpush1.msra.mxu0 %v2420
      %2429 = vmatprep.subr.mxu0 0.0
      %2430 = vmatpush1.msra.mxu0 0.0
      %2431 = vmatprep.subr.mxu0 0.0
      %2432 = vmatpush1.msra.mxu0 0.0
      %2433 = vmatprep.subr.mxu0 0.0
      %2434 = vmatpush1.msra.mxu0 0.0
      %2435 = vmatprep.subr.mxu0 0.0
      %2436 = vmatpush1.msra.mxu0 0.0
      %2437 = vmatprep.subr.mxu0 0.0
      %2438 = vmatpush1.msra.mxu0 0.0
      %2439 = vmatprep.subr.mxu0 0.0
      %2440 = vmatpush1.msra.mxu0 0.0
      %2441 = vmatprep.subr.mxu0 0.0
      %2442 = vmatpush1.msra.mxu0 0.0
      %2443 = vmatprep.subr.mxu0 0.0
      %2444 = vmatpush1.msra.mxu0 0.0
      %2445 = vmatprep.subr.mxu0 0.0
      %2446 = vmatpush1.msra.mxu0 0.0
      %2447 = vmatprep.subr.mxu0 0.0
      %2448 = vmatpush1.msra.mxu0 0.0
      %2449 = vmatprep.subr.mxu0 0.0
      %2450 = vmatpush1.msra.mxu0 0.0
      %2451 = vmatprep.subr.mxu0 0.0
      %2452 = vmatpush1.msra.mxu0 0.0
      %2453 = vmatprep.subr.mxu0 0.0
      %2454 = vmatpush1.msra.mxu0 0.0
      %2455 = vmatprep.subr.mxu0 0.0
      %2456 = vmatpush1.msra.mxu0 0.0
      %2457 = vmatprep.subr.mxu0 0.0
      %2458 = vmatpush1.msra.mxu0 0.0
      %2459 = vmatprep.subr.mxu0 0.0
      %2460 = vmatpush1.msra.mxu0 0.0
      %2461 = vmatprep.subr.mxu0 0.0
      %2462 = vmatpush1.msra.mxu0 0.0
      %2463 = vmatprep.subr.mxu0 0.0
      %2464 = vmatpush1.msra.mxu0 0.0
      %2465 = vmatprep.subr.mxu0 0.0
      %2466 = vmatpush1.msra.mxu0 0.0
      %2467 = vmatprep.subr.mxu0 0.0
      %2468 = vmatpush1.msra.mxu0 0.0
      %2469 = vmatprep.subr.mxu0 0.0
      %2470 = vmatpush1.msra.mxu0 0.0
      %2471 = vmatprep.subr.mxu0 0.0
      %2472 = vmatpush1.msra.mxu0 0.0
      %2473 = vmatprep.subr.mxu0 0.0
      %2474 = vmatpush1.msra.mxu0 0.0
      %2475 = vmatprep.subr.mxu0 0.0
      %2476 = vmatpush1.msra.mxu0 0.0
      %2477 = vmatprep.subr.mxu0 0.0
      %2478 = vmatpush1.msra.mxu0 0.0
      %2479 = vmatprep.subr.mxu0 0.0
      %2480 = vmatpush1.msra.mxu0 0.0
      %2481 = vmatprep.subr.mxu0 0.0
      %2482 = vmatpush1.msra.mxu0 0.0
      %2483 = vmatprep.subr.mxu0 0.0
      %2484 = vmatpush1.msra.mxu0 0.0
      %2485 = vmatprep.subr.mxu0 0.0
      %2486 = vmatpush1.msra.mxu0 0.0
      %2487 = vmatprep.subr.mxu0 0.0
      %2488 = vmatpush1.msra.mxu0 0.0
      %2489 = vmatprep.mubr.f32.mxu0 0.0
      %2490 = vmatmul.mubr.f32.gmra.mrb[0].mxu0 %v2416
      %v2491 = vpop.f32.mrb[0].mxu0
      %v2492 = vadd.f32 0.0, %v2491
      %v2493 = vpop.f32.mrb[0].mxu0
      %v2494 = vadd.f32 0.0, %v2493
      %2495 = vdwg.mxu0
      %v2496 = vld [vmem:[%s9] sm:$0xff]
      %v2497 = vld [vmem:[%s9 + $0x8] sm:$0xff]
      %v2498 = vld [vmem:[%s9 + $0x10] sm:$0xff]
      %v2499 = vld [vmem:[%s9 + $0x18] sm:$0xff]
      %v2500 = vld [vmem:[%s9 + $0x20] sm:$0xff]
      %v2501 = vld [vmem:[%s9 + $0x28] sm:$0xff]
      %v2502 = vld [vmem:[%s9 + $0x30] sm:$0xff]
      %v2503 = vld [vmem:[%s9 + $0x38] sm:$0xff]
      %v2504 = vld [vmem:[%s9 + $0x40] sm:$0xff]
      %v2505 = vld [vmem:[%s9 + $0x48] sm:$0xff]
      %v2506 = vld [vmem:[%s9 + $0x50] sm:$0xff]
      %v2507 = vld [vmem:[%s9 + $0x58] sm:$0xff]
      %v2508 = vld [vmem:[%s9 + $0x60] sm:$0xff]
      %v2509 = vld [vmem:[%s9 + $0x68] sm:$0xff]
      %v2510 = vld [vmem:[%s9 + $0x70] sm:$0xff]
      %v2511 = vld [vmem:[%s9 + $0x78] sm:$0xff]
      %v2512 = vld [vmem:[%s9 + $0x80] sm:$0xff]
      %v2513 = vld [vmem:[%s9 + $0x88] sm:$0xff]
      %v2514 = vld [vmem:[%s9 + $0x90] sm:$0xff]
      %v2515 = vld [vmem:[%s9 + $0x98] sm:$0xff]
      %vm2516 = vcmask 64512
      %v2518 = vsel %vm2516, %v2496, 0
      %v2521 = vsel %vm2516, %v2497, 0
      %v2524 = vsel %vm2516, %v2498, 0
      %v2527 = vsel %vm2516, %v2499, 0
      %v2530 = vsel %vm2516, %v2500, 0
      %v2533 = vsel %vm2516, %v2501, 0
      %v2536 = vsel %vm2516, %v2502, 0
      %v2539 = vsel %vm2516, %v2503, 0
      %v2542 = vsel %vm2516, %v2504, 0
      %v2545 = vsel %vm2516, %v2505, 0
      %v2548 = vsel %vm2516, %v2506, 0
      %v2551 = vsel %vm2516, %v2507, 0
      %v2554 = vsel %vm2516, %v2508, 0
      %v2557 = vsel %vm2516, %v2509, 0
      %v2560 = vsel %vm2516, %v2510, 0
      %v2563 = vsel %vm2516, %v2511, 0
      %v2566 = vsel %vm2516, %v2512, 0
      %v2569 = vsel %vm2516, %v2513, 0
      %v2572 = vsel %vm2516, %v2514, 0
      %v2575 = vsel %vm2516, %v2515, 0
      %2577 = vmatprep.subr.mxu0 %v2494
      %2578 = vmatpush1.msra.mxu0 %v2492
      %2579 = vmatprep.subr.mxu0 0.0
      %2580 = vmatpush1.msra.mxu0 0.0
      %2581 = vmatprep.subr.mxu0 0.0
      %2582 = vmatpush1.msra.mxu0 0.0
      %2583 = vmatprep.subr.mxu0 0.0
      %2584 = vmatpush1.msra.mxu0 0.0
      %2585 = vmatprep.subr.mxu0 0.0
      %2586 = vmatpush1.msra.mxu0 0.0
      %2587 = vmatprep.subr.mxu0 0.0
      %2588 = vmatpush1.msra.mxu0 0.0
      %2589 = vmatprep.subr.mxu0 0.0
      %2590 = vmatpush1.msra.mxu0 0.0
      %2591 = vmatprep.subr.mxu0 0.0
      %2592 = vmatpush1.msra.mxu0 0.0
      %2593 = vmatprep.subr.mxu0 0.0
      %2594 = vmatpush1.msra.mxu0 0.0
      %2595 = vmatprep.subr.mxu0 0.0
      %2596 = vmatpush1.msra.mxu0 0.0
      %2597 = vmatprep.subr.mxu0 0.0
      %2598 = vmatpush1.msra.mxu0 0.0
      %2599 = vmatprep.subr.mxu0 0.0
      %2600 = vmatpush1.msra.mxu0 0.0
      %2601 = vmatprep.subr.mxu0 0.0
      %2602 = vmatpush1.msra.mxu0 0.0
      %2603 = vmatprep.subr.mxu0 0.0
      %2604 = vmatpush1.msra.mxu0 0.0
      %2605 = vmatprep.subr.mxu0 0.0
      %2606 = vmatpush1.msra.mxu0 0.0
      %2607 = vmatprep.subr.mxu0 0.0
      %2608 = vmatpush1.msra.mxu0 0.0
      %2609 = vmatprep.subr.mxu0 0.0
      %2610 = vmatpush1.msra.mxu0 0.0
      %2611 = vmatprep.subr.mxu0 0.0
      %2612 = vmatpush1.msra.mxu0 0.0
      %2613 = vmatprep.subr.mxu0 0.0
      %2614 = vmatpush1.msra.mxu0 0.0
      %2615 = vmatprep.subr.mxu0 0.0
      %2616 = vmatpush1.msra.mxu0 0.0
      %2617 = vmatprep.subr.mxu0 0.0
      %2618 = vmatpush1.msra.mxu0 0.0
      %2619 = vmatprep.subr.mxu0 0.0
      %2620 = vmatpush1.msra.mxu0 0.0
      %2621 = vmatprep.subr.mxu0 0.0
      %2622 = vmatpush1.msra.mxu0 0.0
      %2623 = vmatprep.subr.mxu0 0.0
      %2624 = vmatpush1.msra.mxu0 0.0
      %2625 = vmatprep.subr.mxu0 0.0
      %2626 = vmatpush1.msra.mxu0 0.0
      %2627 = vmatprep.subr.mxu0 0.0
      %2628 = vmatpush1.msra.mxu0 0.0
      %2629 = vmatprep.subr.mxu0 0.0
      %2630 = vmatpush1.msra.mxu0 0.0
      %2631 = vmatprep.subr.mxu0 0.0
      %2632 = vmatpush1.msra.mxu0 0.0
      %2633 = vmatprep.subr.mxu0 0.0
      %2634 = vmatpush1.msra.mxu0 0.0
      %2635 = vmatprep.subr.mxu0 0.0
      %2636 = vmatpush1.msra.mxu0 0.0
      %2637 = vmatprep.subr.mxu0 0.0
      %2638 = vmatpush1.msra.mxu0 0.0
      %2639 = vmatprep.subr.mxu0 0.0
      %2640 = vmatpush1.msra.mxu0 0.0
      %2641 = vmatprep.mubr.f32.mxu0 0.0
      %2642 = vmatmul.mubr.f32.gmra.mrb[0].mxu0 %v2518
      %v2643 = vpop.f32.mrb[0].mxu0
      %v2644 = vadd.f32 0.0, %v2643
      %v2645 = vpop.f32.mrb[0].mxu0
      %v2646 = vadd.f32 0.0, %v2645
      %2647 = vmatprep.mubr.f32.mxu0 0.0
      %2648 = vmatmul.mubr.f32.gmra.mrb[0].mxu0 %v2521
      %v2649 = vpop.f32.mrb[0].mxu0
      %v2650 = vadd.f32 0.0, %v2649
      %v2651 = vpop.f32.mrb[0].mxu0
      %v2652 = vadd.f32 0.0, %v2651
      %2653 = vmatprep.mubr.f32.mxu0 0.0
      %2654 = vmatmul.mubr.f32.gmra.mrb[0].mxu0 %v2524
      %v2655 = vpop.f32.mrb[0].mxu0
      %v2656 = vadd.f32 0.0, %v2655
      %v2657 = vpop.f32.mrb[0].mxu0
      %v2658 = vadd.f32 0.0, %v2657
      %2659 = vmatprep.mubr.f32.mxu0 0.0
      %2660 = vmatmul.mubr.f32.gmra.mrb[0].mxu0 %v2527
      %v2661 = vpop.f32.mrb[0].mxu0
      %v2662 = vadd.f32 0.0, %v2661
      %v2663 = vpop.f32.mrb[0].mxu0
      %v2664 = vadd.f32 0.0, %v2663
      %2665 = vmatprep.mubr.f32.mxu0 0.0
      %2666 = vmatmul.mubr.f32.gmra.mrb[0].mxu0 %v2530
      %v2667 = vpop.f32.mrb[0].mxu0
      %v2668 = vadd.f32 0.0, %v2667
      %v2669 = vpop.f32.mrb[0].mxu0
      %v2670 = vadd.f32 0.0, %v2669
      %2671 = vmatprep.mubr.f32.mxu0 0.0
      %2672 = vmatmul.mubr.f32.gmra.mrb[0].mxu0 %v2533
      %v2673 = vpop.f32.mrb[0].mxu0
      %v2674 = vadd.f32 0.0, %v2673
      %v2675 = vpop.f32.mrb[0].mxu0
      %v2676 = vadd.f32 0.0, %v2675
      %2677 = vmatprep.mubr.f32.mxu0 0.0
      %2678 = vmatmul.mubr.f32.gmra.mrb[0].mxu0 %v2536
      %v2679 = vpop.f32.mrb[0].mxu0
      %v2680 = vadd.f32 0.0, %v2679
      %v2681 = vpop.f32.mrb[0].mxu0
      %v2682 = vadd.f32 0.0, %v2681
      %2683 = vmatprep.mubr.f32.mxu0 0.0
      %2684 = vmatmul.mubr.f32.gmra.mrb[0].mxu0 %v2539
      %v2685 = vpop.f32.mrb[0].mxu0
      %v2686 = vadd.f32 0.0, %v2685
      %v2687 = vpop.f32.mrb[0].mxu0
      %v2688 = vadd.f32 0.0, %v2687
      %2689 = vmatprep.mubr.f32.mxu0 0.0
      %2690 = vmatmul.mubr.f32.gmra.mrb[0].mxu0 %v2542
      %v2691 = vpop.f32.mrb[0].mxu0
      %v2692 = vadd.f32 0.0, %v2691
      %v2693 = vpop.f32.mrb[0].mxu0
      %v2694 = vadd.f32 0.0, %v2693
      %2695 = vmatprep.mubr.f32.mxu0 0.0
      %2696 = vmatmul.mubr.f32.gmra.mrb[0].mxu0 %v2545
      %v2697 = vpop.f32.mrb[0].mxu0
      %v2698 = vadd.f32 0.0, %v2697
      %v2699 = vpop.f32.mrb[0].mxu0
      %v2700 = vadd.f32 0.0, %v2699
      %2701 = vmatprep.mubr.f32.mxu0 0.0
      %2702 = vmatmul.mubr.f32.gmra.mrb[0].mxu0 %v2548
      %v2703 = vpop.f32.mrb[0].mxu0
      %v2704 = vadd.f32 0.0, %v2703
      %v2705 = vpop.f32.mrb[0].mxu0
      %v2706 = vadd.f32 0.0, %v2705
      %2707 = vmatprep.mubr.f32.mxu0 0.0
      %2708 = vmatmul.mubr.f32.gmra.mrb[0].mxu0 %v2551
      %v2709 = vpop.f32.mrb[0].mxu0
      %v2710 = vadd.f32 0.0, %v2709
      %v2711 = vpop.f32.mrb[0].mxu0
      %v2712 = vadd.f32 0.0, %v2711
      %2713 = vmatprep.mubr.f32.mxu0 0.0
      %2714 = vmatmul.mubr.f32.gmra.mrb[0].mxu0 %v2554
      %v2715 = vpop.f32.mrb[0].mxu0
      %v2716 = vadd.f32 0.0, %v2715
      %v2717 = vpop.f32.mrb[0].mxu0
      %v2718 = vadd.f32 0.0, %v2717
      %2719 = vmatprep.mubr.f32.mxu0 0.0
      %2720 = vmatmul.mubr.f32.gmra.mrb[0].mxu0 %v2557
      %v2721 = vpop.f32.mrb[0].mxu0
      %v2722 = vadd.f32 0.0, %v2721
      %v2723 = vpop.f32.mrb[0].mxu0
      %v2724 = vadd.f32 0.0, %v2723
      %2725 = vmatprep.mubr.f32.mxu0 0.0
      %2726 = vmatmul.mubr.f32.gmra.mrb[0].mxu0 %v2560
      %v2727 = vpop.f32.mrb[0].mxu0
      %v2728 = vadd.f32 0.0, %v2727
      %v2729 = vpop.f32.mrb[0].mxu0
      %v2730 = vadd.f32 0.0, %v2729
      %2731 = vmatprep.mubr.f32.mxu0 0.0
      %2732 = vmatmul.mubr.f32.gmra.mrb[0].mxu0 %v2563
      %v2733 = vpop.f32.mrb[0].mxu0
      %v2734 = vadd.f32 0.0, %v2733
      %v2735 = vpop.f32.mrb[0].mxu0
      %v2736 = vadd.f32 0.0, %v2735
      %2737 = vmatprep.mubr.f32.mxu0 0.0
      %2738 = vmatmul.mubr.f32.gmra.mrb[0].mxu0 %v2566
      %v2739 = vpop.f32.mrb[0].mxu0
      %v2740 = vadd.f32 0.0, %v2739
      %v2741 = vpop.f32.mrb[0].mxu0
      %v2742 = vadd.f32 0.0, %v2741
      %2743 = vmatprep.mubr.f32.mxu0 0.0
      %2744 = vmatmul.mubr.f32.gmra.mrb[0].mxu0 %v2569
      %v2745 = vpop.f32.mrb[0].mxu0
      %v2746 = vadd.f32 0.0, %v2745
      %v2747 = vpop.f32.mrb[0].mxu0
      %v2748 = vadd.f32 0.0, %v2747
      %2749 = vmatprep.mubr.f32.mxu0 0.0
      %2750 = vmatmul.mubr.f32.gmra.mrb[0].mxu0 %v2572
      %v2751 = vpop.f32.mrb[0].mxu0
      %v2752 = vadd.f32 0.0, %v2751
      %v2753 = vpop.f32.mrb[0].mxu0
      %v2754 = vadd.f32 0.0, %v2753
      %2755 = vmatprep.mubr.f32.mxu0 0.0
      %2756 = vmatmul.mubr.f32.gmra.mrb[0].mxu0 %v2575
      %v2757 = vpop.f32.mrb[0].mxu0
      %v2758 = vadd.f32 0.0, %v2757
      %v2759 = vpop.f32.mrb[0].mxu0
      %v2760 = vadd.f32 0.0, %v2759
      %2761 = vdwg.mxu0
      %v2762 = vld [vmem:[%s10] sm:$0xff]
      %v2763 = vld [vmem:[%s10 + $0x8] sm:$0xff]
      %v2764 = vld [vmem:[%s10 + $0x10] sm:$0xff]
      %v2765 = vld [vmem:[%s10 + $0x18] sm:$0xff]
      %v2766 = vld [vmem:[%s10 + $0x20] sm:$0xff]
      %v2767 = vld [vmem:[%s10 + $0x28] sm:$0xff]
      %v2768 = vld [vmem:[%s10 + $0x30] sm:$0xff]
      %v2769 = vld [vmem:[%s10 + $0x38] sm:$0xff]
      %v2770 = vld [vmem:[%s10 + $0x40] sm:$0xff]
      %v2771 = vld [vmem:[%s10 + $0x48] sm:$0xff]
      %v2772 = vld [vmem:[%s10 + $0x50] sm:$0xff]
      %v2773 = vld [vmem:[%s10 + $0x58] sm:$0xff]
      %v2774 = vld [vmem:[%s10 + $0x60] sm:$0xff]
      %v2775 = vld [vmem:[%s10 + $0x68] sm:$0xff]
      %v2776 = vld [vmem:[%s10 + $0x70] sm:$0xff]
      %v2777 = vld [vmem:[%s10 + $0x78] sm:$0xff]
      %v2778 = vld [vmem:[%s10 + $0x80] sm:$0xff]
      %v2779 = vld [vmem:[%s10 + $0x88] sm:$0xff]
      %v2780 = vld [vmem:[%s10 + $0x90] sm:$0xff]
      %v2781 = vld [vmem:[%s10 + $0x98] sm:$0xff]
      %v2782 = vld [vmem:[%s10 + $0xa0] sm:$0xff]
      %v2783 = vld [vmem:[%s10 + $0xa8] sm:$0xff]
      %v2784 = vld [vmem:[%s10 + $0xb0] sm:$0xff]
      %v2785 = vld [vmem:[%s10 + $0xb8] sm:$0xff]
      %v2786 = vld [vmem:[%s10 + $0xc0] sm:$0xff]
      %v2787 = vld [vmem:[%s10 + $0xc8] sm:$0xff]
      %v2788 = vld [vmem:[%s10 + $0xd0] sm:$0xff]
      %v2789 = vld [vmem:[%s10 + $0xd8] sm:$0xff]
      %v2790 = vld [vmem:[%s10 + $0xe0] sm:$0xff]
      %v2791 = vld [vmem:[%s10 + $0xe8] sm:$0xff]
      %v2792 = vld [vmem:[%s10 + $0xf0] sm:$0xff]
      %v2793 = vld [vmem:[%s10 + $0xf8] sm:$0xff]
      %v2794 = vld [vmem:[%s10 + $0x100] sm:$0xff]
      %v2795 = vld [vmem:[%s10 + $0x108] sm:$0xff]
      %v2796 = vld [vmem:[%s10 + $0x110] sm:$0xff]
      %v2797 = vld [vmem:[%s10 + $0x118] sm:$0xff]
      %v2798 = vld [vmem:[%s10 + $0x120] sm:$0xff]
      %v2799 = vld [vmem:[%s10 + $0x128] sm:$0xff]
      %v2800 = vld [vmem:[%s10 + $0x130] sm:$0xff]
      %v2801 = vld [vmem:[%s10 + $0x138] sm:$0xff]
      %v2802 = vmul.f32 %v2644, %v2762
      %v2803 = vmul.f32 %v2646, %v2763
      %v2804 = vmul.f32 %v2650, %v2764
      %v2805 = vmul.f32 %v2652, %v2765
      %v2806 = vmul.f32 %v2656, %v2766
      %v2807 = vmul.f32 %v2658, %v2767
      %v2808 = vmul.f32 %v2662, %v2768
      %v2809 = vmul.f32 %v2664, %v2769
      %v2810 = vmul.f32 %v2668, %v2770
      %v2811 = vmul.f32 %v2670, %v2771
      %v2812 = vmul.f32 %v2674, %v2772
      %v2813 = vmul.f32 %v2676, %v2773
      %v2814 = vmul.f32 %v2680, %v2774
      %v2815 = vmul.f32 %v2682, %v2775
      %v2816 = vmul.f32 %v2686, %v2776
      %v2817 = vmul.f32 %v2688, %v2777
      %v2818 = vmul.f32 %v2692, %v2778
      %v2819 = vmul.f32 %v2694, %v2779
      %v2820 = vmul.f32 %v2698, %v2780
      %v2821 = vmul.f32 %v2700, %v2781
      %v2822 = vmul.f32 %v2704, %v2782
      %v2823 = vmul.f32 %v2706, %v2783
      %v2824 = vmul.f32 %v2710, %v2784
      %v2825 = vmul.f32 %v2712, %v2785
      %v2826 = vmul.f32 %v2716, %v2786
      %v2827 = vmul.f32 %v2718, %v2787
      %v2828 = vmul.f32 %v2722, %v2788
      %v2829 = vmul.f32 %v2724, %v2789
      %v2830 = vmul.f32 %v2728, %v2790
      %v2831 = vmul.f32 %v2730, %v2791
      %v2832 = vmul.f32 %v2734, %v2792
      %v2833 = vmul.f32 %v2736, %v2793
      %v2834 = vmul.f32 %v2740, %v2794
      %v2835 = vmul.f32 %v2742, %v2795
      %v2836 = vmul.f32 %v2746, %v2796
      %v2837 = vmul.f32 %v2748, %v2797
      %v2838 = vmul.f32 %v2752, %v2798
      %v2839 = vmul.f32 %v2754, %v2799
      %v2840 = vmul.f32 %v2758, %v2800
      %v2841 = vmul.f32 %v2760, %v2801
      %v2842 = vld [vmem:[%s11] sm:$0xff]
      %v2843 = vld [vmem:[%s11 + $0x8] sm:$0xff]
      %v2844 = vld [vmem:[%s11 + $0x10] sm:$0xff]
      %v2845 = vld [vmem:[%s11 + $0x18] sm:$0xff]
      %v2846 = vld [vmem:[%s11 + $0x20] sm:$0xff]
      %v2847 = vld [vmem:[%s11 + $0x28] sm:$0xff]
      %v2848 = vld [vmem:[%s11 + $0x30] sm:$0xff]
      %v2849 = vld [vmem:[%s11 + $0x38] sm:$0xff]
      %v2850 = vld [vmem:[%s11 + $0x40] sm:$0xff]
      %v2851 = vld [vmem:[%s11 + $0x48] sm:$0xff]
      %v2852 = vld [vmem:[%s11 + $0x50] sm:$0xff]
      %v2853 = vld [vmem:[%s11 + $0x58] sm:$0xff]
      %v2854 = vld [vmem:[%s11 + $0x60] sm:$0xff]
      %v2855 = vld [vmem:[%s11 + $0x68] sm:$0xff]
      %v2856 = vld [vmem:[%s11 + $0x70] sm:$0xff]
      %v2857 = vld [vmem:[%s11 + $0x78] sm:$0xff]
      %v2858 = vld [vmem:[%s11 + $0x80] sm:$0xff]
      %v2859 = vld [vmem:[%s11 + $0x88] sm:$0xff]
      %v2860 = vld [vmem:[%s11 + $0x90] sm:$0xff]
      %v2861 = vld [vmem:[%s11 + $0x98] sm:$0xff]
      %v2862 = vld [vmem:[%s11 + $0xa0] sm:$0xff]
      %v2863 = vld [vmem:[%s11 + $0xa8] sm:$0xff]
      %v2864 = vld [vmem:[%s11 + $0xb0] sm:$0xff]
      %v2865 = vld [vmem:[%s11 + $0xb8] sm:$0xff]
      %v2866 = vld [vmem:[%s11 + $0xc0] sm:$0xff]
      %v2867 = vld [vmem:[%s12] sm:$0xff]
      %v2868 = vld [vmem:[%s12 + $0x8] sm:$0xff]
      %v2869 = vld [vmem:[%s12 + $0x10] sm:$0xff]
      %v2870 = vld [vmem:[%s12 + $0x18] sm:$0xff]
      %v2871 = vld [vmem:[%s12 + $0x20] sm:$0xff]
      %v2872 = vld [vmem:[%s12 + $0x28] sm:$0xff]
      %v2873 = vld [vmem:[%s12 + $0x30] sm:$0xff]
      %v2874 = vld [vmem:[%s12 + $0x38] sm:$0xff]
      %v2875 = vld [vmem:[%s12 + $0x40] sm:$0xff]
      %v2876 = vld [vmem:[%s12 + $0x48] sm:$0xff]
      %v2877 = vld [vmem:[%s12 + $0x50] sm:$0xff]
      %v2878 = vld [vmem:[%s12 + $0x58] sm:$0xff]
      %v2879 = vld [vmem:[%s12 + $0x60] sm:$0xff]
      %v2880 = vld [vmem:[%s12 + $0x68] sm:$0xff]
      %v2881 = vld [vmem:[%s12 + $0x70] sm:$0xff]
      %v2882 = vld [vmem:[%s12 + $0x78] sm:$0xff]
      %v2883 = vld [vmem:[%s12 + $0x80] sm:$0xff]
      %v2884 = vld [vmem:[%s12 + $0x88] sm:$0xff]
      %v2885 = vld [vmem:[%s12 + $0x90] sm:$0xff]
      %v2886 = vld [vmem:[%s12 + $0x98] sm:$0xff]
      %vm2887 = vcmask 588800
      %v2889 = vsel %vm2887, %v2803, 0
      %v2892 = vsel %vm2887, %v2805, 0
      %v2895 = vsel %vm2887, %v2807, 0
      %v2898 = vsel %vm2887, %v2809, 0
      %v2901 = vsel %vm2887, %v2811, 0
      %v2904 = vsel %vm2887, %v2813, 0
      %v2907 = vsel %vm2887, %v2815, 0
      %v2910 = vsel %vm2887, %v2817, 0
      %v2913 = vsel %vm2887, %v2819, 0
      %v2916 = vsel %vm2887, %v2821, 0
      %v2919 = vsel %vm2887, %v2823, 0
      %v2922 = vsel %vm2887, %v2825, 0
      %v2925 = vsel %vm2887, %v2827, 0
      %v2928 = vsel %vm2887, %v2829, 0
      %v2931 = vsel %vm2887, %v2831, 0
      %v2934 = vsel %vm2887, %v2833, 0
      %v2937 = vsel %vm2887, %v2835, 0
      %v2940 = vsel %vm2887, %v2837, 0
      %v2943 = vsel %vm2887, %v2839, 0
      %v2946 = vsel %vm2887, %v2841, 0
      %2948 = vmatprep.subr.mxu0 0.0
      %2949 = vmatpush1.msra.mxu0 %v2842
      %2950 = vmatprep.subr.mxu0 0.0
      %2951 = vmatpush1.msra.mxu0 %v2843
      %2952 = vmatprep.subr.mxu0 0.0
      %2953 = vmatpush1.msra.mxu0 %v2844
      %2954 = vmatprep.subr.mxu0 0.0
      %2955 = vmatpush1.msra.mxu0 %v2845
      %2956 = vmatprep.subr.mxu0 0.0
      %2957 = vmatpush1.msra.mxu0 %v2846
      %2958 = vmatprep.subr.mxu0 0.0
      %2959 = vmatpush1.msra.mxu0 %v2847
      %2960 = vmatprep.subr.mxu0 0.0
      %2961 = vmatpush1.msra.mxu0 %v2848
      %2962 = vmatprep.subr.mxu0 0.0
      %2963 = vmatpush1.msra.mxu0 %v2849
      %2964 = vmatprep.subr.mxu0 0.0
      %2965 = vmatpush1.msra.mxu0 %v2850
      %2966 = vmatprep.subr.mxu0 0.0
      %2967 = vmatpush1.msra.mxu0 %v2851
      %2968 = vmatprep.subr.mxu0 0.0
      %2969 = vmatpush1.msra.mxu0 %v2852
      %2970 = vmatprep.subr.mxu0 0.0
      %2971 = vmatpush1.msra.mxu0 %v2853
      %2972 = vmatprep.subr.mxu0 0.0
      %2973 = vmatpush1.msra.mxu0 %v2854
      %2974 = vmatprep.subr.mxu0 0.0
      %2975 = vmatpush1.msra.mxu0 %v2855
      %2976 = vmatprep.subr.mxu0 0.0
      %2977 = vmatpush1.msra.mxu0 %v2856
      %2978 = vmatprep.subr.mxu0 0.0
      %2979 = vmatpush1.msra.mxu0 %v2857
      %2980 = vmatprep.subr.mxu0 0.0
      %2981 = vmatpush1.msra.mxu0 %v2858
      %2982 = vmatprep.subr.mxu0 0.0
      %2983 = vmatpush1.msra.mxu0 %v2859
      %2984 = vmatprep.subr.mxu0 0.0
      %2985 = vmatpush1.msra.mxu0 %v2860
      %2986 = vmatprep.subr.mxu0 0.0
      %2987 = vmatpush1.msra.mxu0 %v2861
      %2988 = vmatprep.subr.mxu0 0.0
      %2989 = vmatpush1.msra.mxu0 %v2862
      %2990 = vmatprep.subr.mxu0 0.0
      %2991 = vmatpush1.msra.mxu0 %v2863
      %2992 = vmatprep.subr.mxu0 0.0
      %2993 = vmatpush1.msra.mxu0 %v2864
      %2994 = vmatprep.subr.mxu0 0.0
      %2995 = vmatpush1.msra.mxu0 %v2865
      %2996 = vmatprep.subr.mxu0 0.0
      %2997 = vmatpush1.msra.mxu0 %v2866
      %2998 = vmatprep.subr.mxu0 0.0
      %2999 = vmatpush1.msra.mxu0 0.0
      %3000 = vmatprep.subr.mxu0 0.0
      %3001 = vmatpush1.msra.mxu0 0.0
      %3002 = vmatprep.subr.mxu0 0.0
      %3003 = vmatpush1.msra.mxu0 0.0
      %3004 = vmatprep.subr.mxu0 0.0
      %3005 = vmatpush1.msra.mxu0 0.0
      %3006 = vmatprep.subr.mxu0 0.0
      %3007 = vmatpush1.msra.mxu0 0.0
      %3008 = vmatprep.subr.mxu0 0.0
      %3009 = vmatpush1.msra.mxu0 0.0
      %3010 = vmatprep.subr.mxu0 0.0
      %3011 = vmatpush1.msra.mxu0 0.0
      %3012 = vmatprep.mubr.f32.mxu0 %v2889
      %3013 = vmatmul.mubr.f32.gmra.mrb[0].mxu0 %v2802
      %v3014 = vpop.f32.mrb[0].mxu0
      %v3015 = vadd.f32 %v2867, %v3014
      %v3016 = vpop.f32.mrb[0].mxu0
      %3017 = vmatprep.mubr.f32.mxu0 %v2892
      %3018 = vmatmul.mubr.f32.gmra.mrb[0].mxu0 %v2804
      %v3019 = vpop.f32.mrb[0].mxu0
      %v3020 = vadd.f32 %v2868, %v3019
      %v3021 = vpop.f32.mrb[0].mxu0
      %3022 = vmatprep.mubr.f32.mxu0 %v2895
      %3023 = vmatmul.mubr.f32.gmra.mrb[0].mxu0 %v2806
      %v3024 = vpop.f32.mrb[0].mxu0
      %v3025 = vadd.f32 %v2869, %v3024
      %v3026 = vpop.f32.mrb[0].mxu0
      %3027 = vmatprep.mubr.f32.mxu0 %v2898
      %3028 = vmatmul.mubr.f32.gmra.mrb[0].mxu0 %v2808
      %v3029 = vpop.f32.mrb[0].mxu0
      %v3030 = vadd.f32 %v2870, %v3029
      %v3031 = vpop.f32.mrb[0].mxu0
      %3032 = vmatprep.mubr.f32.mxu0 %v2901
      %3033 = vmatmul.mubr.f32.gmra.mrb[0].mxu0 %v2810
      %v3034 = vpop.f32.mrb[0].mxu0
      %v3035 = vadd.f32 %v2871, %v3034
      %v3036 = vpop.f32.mrb[0].mxu0
      %3037 = vmatprep.mubr.f32.mxu0 %v2904
      %3038 = vmatmul.mubr.f32.gmra.mrb[0].mxu0 %v2812
      %v3039 = vpop.f32.mrb[0].mxu0
      %v3040 = vadd.f32 %v2872, %v3039
      %v3041 = vpop.f32.mrb[0].mxu0
      %3042 = vmatprep.mubr.f32.mxu0 %v2907
      %3043 = vmatmul.mubr.f32.gmra.mrb[0].mxu0 %v2814
      %v3044 = vpop.f32.mrb[0].mxu0
      %v3045 = vadd.f32 %v2873, %v3044
      %v3046 = vpop.f32.mrb[0].mxu0
      %3047 = vmatprep.mubr.f32.mxu0 %v2910
      %3048 = vmatmul.mubr.f32.gmra.mrb[0].mxu0 %v2816
      %v3049 = vpop.f32.mrb[0].mxu0
      %v3050 = vadd.f32 %v2874, %v3049
      %v3051 = vpop.f32.mrb[0].mxu0
      %3052 = vmatprep.mubr.f32.mxu0 %v2913
      %3053 = vmatmul.mubr.f32.gmra.mrb[0].mxu0 %v2818
      %v3054 = vpop.f32.mrb[0].mxu0
      %v3055 = vadd.f32 %v2875, %v3054
      %v3056 = vpop.f32.mrb[0].mxu0
      %3057 = vmatprep.mubr.f32.mxu0 %v2916
      %3058 = vmatmul.mubr.f32.gmra.mrb[0].mxu0 %v2820
      %v3059 = vpop.f32.mrb[0].mxu0
      %v3060 = vadd.f32 %v2876, %v3059
      %v3061 = vpop.f32.mrb[0].mxu0
      %3062 = vmatprep.mubr.f32.mxu0 %v2919
      %3063 = vmatmul.mubr.f32.gmra.mrb[0].mxu0 %v2822
      %v3064 = vpop.f32.mrb[0].mxu0
      %v3065 = vadd.f32 %v2877, %v3064
      %v3066 = vpop.f32.mrb[0].mxu0
      %3067 = vmatprep.mubr.f32.mxu0 %v2922
      %3068 = vmatmul.mubr.f32.gmra.mrb[0].mxu0 %v2824
      %v3069 = vpop.f32.mrb[0].mxu0
      %v3070 = vadd.f32 %v2878, %v3069
      %v3071 = vpop.f32.mrb[0].mxu0
      %3072 = vmatprep.mubr.f32.mxu0 %v2925
      %3073 = vmatmul.mubr.f32.gmra.mrb[0].mxu0 %v2826
      %v3074 = vpop.f32.mrb[0].mxu0
      %v3075 = vadd.f32 %v2879, %v3074
      %v3076 = vpop.f32.mrb[0].mxu0
      %3077 = vmatprep.mubr.f32.mxu0 %v2928
      %3078 = vmatmul.mubr.f32.gmra.mrb[0].mxu0 %v2828
      %v3079 = vpop.f32.mrb[0].mxu0
      %v3080 = vadd.f32 %v2880, %v3079
      %v3081 = vpop.f32.mrb[0].mxu0
      %3082 = vmatprep.mubr.f32.mxu0 %v2931
      %3083 = vmatmul.mubr.f32.gmra.mrb[0].mxu0 %v2830
      %v3084 = vpop.f32.mrb[0].mxu0
      %v3085 = vadd.f32 %v2881, %v3084
      %v3086 = vpop.f32.mrb[0].mxu0
      %3087 = vmatprep.mubr.f32.mxu0 %v2934
      %3088 = vmatmul.mubr.f32.gmra.mrb[0].mxu0 %v2832
      %v3089 = vpop.f32.mrb[0].mxu0
      %v3090 = vadd.f32 %v2882, %v3089
      %v3091 = vpop.f32.mrb[0].mxu0
      %3092 = vmatprep.mubr.f32.mxu0 %v2937
      %3093 = vmatmul.mubr.f32.gmra.mrb[0].mxu0 %v2834
      %v3094 = vpop.f32.mrb[0].mxu0
      %v3095 = vadd.f32 %v2883, %v3094
      %v3096 = vpop.f32.mrb[0].mxu0
      %3097 = vmatprep.mubr.f32.mxu0 %v2940
      %3098 = vmatmul.mubr.f32.gmra.mrb[0].mxu0 %v2836
      %v3099 = vpop.f32.mrb[0].mxu0
      %v3100 = vadd.f32 %v2884, %v3099
      %v3101 = vpop.f32.mrb[0].mxu0
      %3102 = vmatprep.mubr.f32.mxu0 %v2943
      %3103 = vmatmul.mubr.f32.gmra.mrb[0].mxu0 %v2838
      %v3104 = vpop.f32.mrb[0].mxu0
      %v3105 = vadd.f32 %v2885, %v3104
      %v3106 = vpop.f32.mrb[0].mxu0
      %3107 = vmatprep.mubr.f32.mxu0 %v2946
      %3108 = vmatmul.mubr.f32.gmra.mrb[0].mxu0 %v2840
      %v3109 = vpop.f32.mrb[0].mxu0
      %v3110 = vadd.f32 %v2886, %v3109
      %v3111 = vpop.f32.mrb[0].mxu0
      %3112 = vdwg.mxu0
      %v3113 = vmax.f32 %v3015, 0.0
      %v3114 = vmax.f32 %v3020, 0.0
      %v3115 = vmax.f32 %v3025, 0.0
      %v3116 = vmax.f32 %v3030, 0.0
      %v3117 = vmax.f32 %v3035, 0.0
      %v3118 = vmax.f32 %v3040, 0.0
      %v3119 = vmax.f32 %v3045, 0.0
      %v3120 = vmax.f32 %v3050, 0.0
      %v3121 = vmax.f32 %v3055, 0.0
      %v3122 = vmax.f32 %v3060, 0.0
      %v3123 = vmax.f32 %v3065, 0.0
      %v3124 = vmax.f32 %v3070, 0.0
      %v3125 = vmax.f32 %v3075, 0.0
      %v3126 = vmax.f32 %v3080, 0.0
      %v3127 = vmax.f32 %v3085, 0.0
      %v3128 = vmax.f32 %v3090, 0.0
      %v3129 = vmax.f32 %v3095, 0.0
      %v3130 = vmax.f32 %v3100, 0.0
      %v3131 = vmax.f32 %v3105, 0.0
      %v3132 = vmax.f32 %v3110, 0.0
      %s3133 = scalar_lea.vmem %s12, 160
      %v3134 = vld [vmem:[%s3133] sm:$0xff]
      %v3135 = vld [vmem:[%s3133 + $0x8] sm:$0xff]
      %v3136 = vld [vmem:[%s3133 + $0x10] sm:$0xff]
      %v3137 = vld [vmem:[%s3133 + $0x18] sm:$0xff]
      %v3138 = vld [vmem:[%s3133 + $0x20] sm:$0xff]
      %v3139 = vld [vmem:[%s3133 + $0x28] sm:$0xff]
      %v3140 = vld [vmem:[%s3133 + $0x30] sm:$0xff]
      %v3141 = vld [vmem:[%s3133 + $0x38] sm:$0xff]
      %v3142 = vld [vmem:[%s3133 + $0x40] sm:$0xff]
      %v3143 = vld [vmem:[%s3133 + $0x48] sm:$0xff]
      %v3144 = vld [vmem:[%s3133 + $0x50] sm:$0xff]
      %v3145 = vld [vmem:[%s3133 + $0x58] sm:$0xff]
      %v3146 = vld [vmem:[%s3133 + $0x60] sm:$0xff]
      %v3147 = vld [vmem:[%s3133 + $0x68] sm:$0xff]
      %v3148 = vld [vmem:[%s3133 + $0x70] sm:$0xff]
      %v3149 = vld [vmem:[%s3133 + $0x78] sm:$0xff]
      %v3150 = vld [vmem:[%s3133 + $0x80] sm:$0xff]
      %v3151 = vld [vmem:[%s3133 + $0x88] sm:$0xff]
      %v3152 = vld [vmem:[%s3133 + $0x90] sm:$0xff]
      %v3153 = vld [vmem:[%s3133 + $0x98] sm:$0xff]
      %v3154 = vmul.f32 %v3113, %v3134
      %v3155 = vmul.f32 %v3114, %v3135
      %v3156 = vmul.f32 %v3115, %v3136
      %v3157 = vmul.f32 %v3116, %v3137
      %v3158 = vmul.f32 %v3117, %v3138
      %v3159 = vmul.f32 %v3118, %v3139
      %v3160 = vmul.f32 %v3119, %v3140
      %v3161 = vmul.f32 %v3120, %v3141
      %v3162 = vmul.f32 %v3121, %v3142
      %v3163 = vmul.f32 %v3122, %v3143
      %v3164 = vmul.f32 %v3123, %v3144
      %v3165 = vmul.f32 %v3124, %v3145
      %v3166 = vmul.f32 %v3125, %v3146
      %v3167 = vmul.f32 %v3126, %v3147
      %v3168 = vmul.f32 %v3127, %v3148
      %v3169 = vmul.f32 %v3128, %v3149
      %v3170 = vmul.f32 %v3129, %v3150
      %v3171 = vmul.f32 %v3130, %v3151
      %v3172 = vmul.f32 %v3131, %v3152
      %v3173 = vmul.f32 %v3132, %v3153
      %s3174 = scalar_lea.vmem %s12, 320
      %v3175 = vld [vmem:[%s3174] sm:$0xff]
      %v3176 = vld [vmem:[%s3174 + $0x8] sm:$0xff]
      %v3177 = vld [vmem:[%s3174 + $0x10] sm:$0xff]
      %v3178 = vld [vmem:[%s3174 + $0x18] sm:$0xff]
      %v3179 = vld [vmem:[%s3174 + $0x20] sm:$0xff]
      %v3180 = vld [vmem:[%s3174 + $0x28] sm:$0xff]
      %v3181 = vld [vmem:[%s3174 + $0x30] sm:$0xff]
      %v3182 = vld [vmem:[%s3174 + $0x38] sm:$0xff]
      %v3183 = vld [vmem:[%s3174 + $0x40] sm:$0xff]
      %v3184 = vld [vmem:[%s3174 + $0x48] sm:$0xff]
      %v3185 = vld [vmem:[%s3174 + $0x50] sm:$0xff]
      %v3186 = vld [vmem:[%s3174 + $0x58] sm:$0xff]
      %v3187 = vld [vmem:[%s3174 + $0x60] sm:$0xff]
      %v3188 = vld [vmem:[%s3174 + $0x68] sm:$0xff]
      %v3189 = vld [vmem:[%s3174 + $0x70] sm:$0xff]
      %v3190 = vld [vmem:[%s3174 + $0x78] sm:$0xff]
      %v3191 = vld [vmem:[%s3174 + $0x80] sm:$0xff]
      %v3192 = vld [vmem:[%s3174 + $0x88] sm:$0xff]
      %v3193 = vld [vmem:[%s3174 + $0x90] sm:$0xff]
      %v3194 = vld [vmem:[%s3174 + $0x98] sm:$0xff]
      %v3195 = vadd.f32 %v3154, %v3175
      %v3196 = vadd.f32 %v3155, %v3176
      %v3197 = vadd.f32 %v3156, %v3177
      %v3198 = vadd.f32 %v3157, %v3178
      %v3199 = vadd.f32 %v3158, %v3179
      %v3200 = vadd.f32 %v3159, %v3180
      %v3201 = vadd.f32 %v3160, %v3181
      %v3202 = vadd.f32 %v3161, %v3182
      %v3203 = vadd.f32 %v3162, %v3183
      %v3204 = vadd.f32 %v3163, %v3184
      %v3205 = vadd.f32 %v3164, %v3185
      %v3206 = vadd.f32 %v3165, %v3186
      %v3207 = vadd.f32 %v3166, %v3187
      %v3208 = vadd.f32 %v3167, %v3188
      %v3209 = vadd.f32 %v3168, %v3189
      %v3210 = vadd.f32 %v3169, %v3190
      %v3211 = vadd.f32 %v3170, %v3191
      %v3212 = vadd.f32 %v3171, %v3192
      %v3213 = vadd.f32 %v3172, %v3193
      %v3214 = vadd.f32 %v3173, %v3194
      %v3215 = vld [vmem:[%s13] sm:$0xff]
      %v3216 = vld [vmem:[%s13 + $0x8] sm:$0xff]
      %v3217 = vld [vmem:[%s13 + $0x10] sm:$0xff]
      %v3218 = vld [vmem:[%s13 + $0x18] sm:$0xff]
      %v3219 = vld [vmem:[%s13 + $0x20] sm:$0xff]
      %v3220 = vld [vmem:[%s13 + $0x28] sm:$0xff]
      %v3221 = vld [vmem:[%s13 + $0x30] sm:$0xff]
      %v3222 = vld [vmem:[%s13 + $0x38] sm:$0xff]
      %v3223 = vld [vmem:[%s13 + $0x40] sm:$0xff]
      %v3224 = vld [vmem:[%s13 + $0x48] sm:$0xff]
      %v3226 = vsel %vm2061, %v3216, 0
      %v3229 = vsel %vm2061, %v3218, 0
      %v3232 = vsel %vm2061, %v3220, 0
      %v3235 = vsel %vm2061, %v3222, 0
      %v3238 = vsel %vm2061, %v3224, 0
      %3240 = vmatprep.subr.mxu0 0.0
      %3241 = vmatpush1.msra.mxu0 %v3195
      %3242 = vmatprep.subr.mxu0 0.0
      %3243 = vmatpush1.msra.mxu0 %v3196
      %3244 = vmatprep.subr.mxu0 0.0
      %3245 = vmatpush1.msra.mxu0 %v3197
      %3246 = vmatprep.subr.mxu0 0.0
      %3247 = vmatpush1.msra.mxu0 %v3198
      %3248 = vmatprep.subr.mxu0 0.0
      %3249 = vmatpush1.msra.mxu0 %v3199
      %3250 = vmatprep.subr.mxu0 0.0
      %3251 = vmatpush1.msra.mxu0 %v3200
      %3252 = vmatprep.subr.mxu0 0.0
      %3253 = vmatpush1.msra.mxu0 %v3201
      %3254 = vmatprep.subr.mxu0 0.0
      %3255 = vmatpush1.msra.mxu0 %v3202
      %3256 = vmatprep.subr.mxu0 0.0
      %3257 = vmatpush1.msra.mxu0 %v3203
      %3258 = vmatprep.subr.mxu0 0.0
      %3259 = vmatpush1.msra.mxu0 %v3204
      %3260 = vmatprep.subr.mxu0 0.0
      %3261 = vmatpush1.msra.mxu0 %v3205
      %3262 = vmatprep.subr.mxu0 0.0
      %3263 = vmatpush1.msra.mxu0 %v3206
      %3264 = vmatprep.subr.mxu0 0.0
      %3265 = vmatpush1.msra.mxu0 %v3207
      %3266 = vmatprep.subr.mxu0 0.0
      %3267 = vmatpush1.msra.mxu0 %v3208
      %3268 = vmatprep.subr.mxu0 0.0
      %3269 = vmatpush1.msra.mxu0 %v3209
      %3270 = vmatprep.subr.mxu0 0.0
      %3271 = vmatpush1.msra.mxu0 %v3210
      %3272 = vmatprep.subr.mxu0 0.0
      %3273 = vmatpush1.msra.mxu0 %v3211
      %3274 = vmatprep.subr.mxu0 0.0
      %3275 = vmatpush1.msra.mxu0 %v3212
      %3276 = vmatprep.subr.mxu0 0.0
      %3277 = vmatpush1.msra.mxu0 %v3213
      %3278 = vmatprep.subr.mxu0 0.0
      %3279 = vmatpush1.msra.mxu0 %v3214
      %3280 = vmatprep.subr.mxu0 0.0
      %3281 = vmatpush1.msra.mxu0 0.0
      %3282 = vmatprep.subr.mxu0 0.0
      %3283 = vmatpush1.msra.mxu0 0.0
      %3284 = vmatprep.subr.mxu0 0.0
      %3285 = vmatpush1.msra.mxu0 0.0
      %3286 = vmatprep.subr.mxu0 0.0
      %3287 = vmatpush1.msra.mxu0 0.0
      %3288 = vmatprep.subr.mxu0 0.0
      %3289 = vmatpush1.msra.mxu0 0.0
      %3290 = vmatprep.subr.mxu0 0.0
      %3291 = vmatpush1.msra.mxu0 0.0
      %3292 = vmatprep.subr.mxu0 0.0
      %3293 = vmatpush1.msra.mxu0 0.0
      %3294 = vmatprep.subr.mxu0 0.0
      %3295 = vmatpush1.msra.mxu0 0.0
      %3296 = vmatprep.subr.mxu0 0.0
      %3297 = vmatpush1.msra.mxu0 0.0
      %3298 = vmatprep.subr.mxu0 0.0
      %3299 = vmatpush1.msra.mxu0 0.0
      %3300 = vmatprep.subr.mxu0 0.0
      %3301 = vmatpush1.msra.mxu0 0.0
      %3302 = vmatprep.subr.mxu0 0.0
      %3303 = vmatpush1.msra.mxu0 0.0
      %3304 = vmatprep.mubr.f32.mxu0 %v3226
      %3305 = vmatmul.mubr.f32.gmra.mrb[0].mxu0 %v3215
      %v3306 = vpop.f32.mrb[0].mxu0
      %v3307 = vadd.f32 0.0, %v3306
      %v3308 = vpop.f32.mrb[0].mxu0
      %3309 = vmatprep.mubr.f32.mxu0 %v3229
      %3310 = vmatmul.mubr.f32.gmra.mrb[0].mxu0 %v3217
      %v3311 = vpop.f32.mrb[0].mxu0
      %v3312 = vadd.f32 0.0, %v3311
      %v3313 = vpop.f32.mrb[0].mxu0
      %3314 = vmatprep.mubr.f32.mxu0 %v3232
      %3315 = vmatmul.mubr.f32.gmra.mrb[0].mxu0 %v3219
      %v3316 = vpop.f32.mrb[0].mxu0
      %v3317 = vadd.f32 0.0, %v3316
      %v3318 = vpop.f32.mrb[0].mxu0
      %3319 = vmatprep.mubr.f32.mxu0 %v3235
      %3320 = vmatmul.mubr.f32.gmra.mrb[0].mxu0 %v3221
      %v3321 = vpop.f32.mrb[0].mxu0
      %v3322 = vadd.f32 0.0, %v3321
      %v3323 = vpop.f32.mrb[0].mxu0
      %3324 = vmatprep.mubr.f32.mxu0 %v3238
      %3325 = vmatmul.mubr.f32.gmra.mrb[0].mxu0 %v3223
      %v3326 = vpop.f32.mrb[0].mxu0
      %v3327 = vadd.f32 0.0, %v3326
      %v3328 = vpop.f32.mrb[0].mxu0
      %3329 = vdwg.mxu0
      %s3330 = scalar_lea.vmem %s13, 80
      %v3331 = vld [vmem:[%s3330] sm:$0xff]
      %v3332 = vld [vmem:[%s3330 + $0x8] sm:$0xff]
      %v3333 = vld [vmem:[%s3330 + $0x10] sm:$0xff]
      %v3334 = vld [vmem:[%s3330 + $0x18] sm:$0xff]
      %v3335 = vld [vmem:[%s3330 + $0x20] sm:$0xff]
      %v3336 = vld [vmem:[%s3330 + $0x28] sm:$0xff]
      %v3337 = vld [vmem:[%s3330 + $0x30] sm:$0xff]
      %v3338 = vld [vmem:[%s3330 + $0x38] sm:$0xff]
      %v3339 = vld [vmem:[%s3330 + $0x40] sm:$0xff]
      %v3340 = vld [vmem:[%s3330 + $0x48] sm:$0xff]
      %v3342 = vsel %vm2061, %v3332, 0
      %v3345 = vsel %vm2061, %v3334, 0
      %v3348 = vsel %vm2061, %v3336, 0
      %v3351 = vsel %vm2061, %v3338, 0
      %v3354 = vsel %vm2061, %v3340, 0
      %3356 = vmatprep.subr.mxu0 0.0
      %3357 = vmatpush1.msra.mxu0 %v3195
      %3358 = vmatprep.subr.mxu0 0.0
      %3359 = vmatpush1.msra.mxu0 %v3196
      %3360 = vmatprep.subr.mxu0 0.0
      %3361 = vmatpush1.msra.mxu0 %v3197
      %3362 = vmatprep.subr.mxu0 0.0
      %3363 = vmatpush1.msra.mxu0 %v3198
      %3364 = vmatprep.subr.mxu0 0.0
      %3365 = vmatpush1.msra.mxu0 %v3199
      %3366 = vmatprep.subr.mxu0 0.0
      %3367 = vmatpush1.msra.mxu0 %v3200
      %3368 = vmatprep.subr.mxu0 0.0
      %3369 = vmatpush1.msra.mxu0 %v3201
      %3370 = vmatprep.subr.mxu0 0.0
      %3371 = vmatpush1.msra.mxu0 %v3202
      %3372 = vmatprep.subr.mxu0 0.0
      %3373 = vmatpush1.msra.mxu0 %v3203
      %3374 = vmatprep.subr.mxu0 0.0
      %3375 = vmatpush1.msra.mxu0 %v3204
      %3376 = vmatprep.subr.mxu0 0.0
      %3377 = vmatpush1.msra.mxu0 %v3205
      %3378 = vmatprep.subr.mxu0 0.0
      %3379 = vmatpush1.msra.mxu0 %v3206
      %3380 = vmatprep.subr.mxu0 0.0
      %3381 = vmatpush1.msra.mxu0 %v3207
      %3382 = vmatprep.subr.mxu0 0.0
      %3383 = vmatpush1.msra.mxu0 %v3208
      %3384 = vmatprep.subr.mxu0 0.0
      %3385 = vmatpush1.msra.mxu0 %v3209
      %3386 = vmatprep.subr.mxu0 0.0
      %3387 = vmatpush1.msra.mxu0 %v3210
      %3388 = vmatprep.subr.mxu0 0.0
      %3389 = vmatpush1.msra.mxu0 %v3211
      %3390 = vmatprep.subr.mxu0 0.0
      %3391 = vmatpush1.msra.mxu0 %v3212
      %3392 = vmatprep.subr.mxu0 0.0
      %3393 = vmatpush1.msra.mxu0 %v3213
      %3394 = vmatprep.subr.mxu0 0.0
      %3395 = vmatpush1.msra.mxu0 %v3214
      %3396 = vmatprep.subr.mxu0 0.0
      %3397 = vmatpush1.msra.mxu0 0.0
      %3398 = vmatprep.subr.mxu0 0.0
      %3399 = vmatpush1.msra.mxu0 0.0
      %3400 = vmatprep.subr.mxu0 0.0
      %3401 = vmatpush1.msra.mxu0 0.0
      %3402 = vmatprep.subr.mxu0 0.0
      %3403 = vmatpush1.msra.mxu0 0.0
      %3404 = vmatprep.subr.mxu0 0.0
      %3405 = vmatpush1.msra.mxu0 0.0
      %3406 = vmatprep.subr.mxu0 0.0
      %3407 = vmatpush1.msra.mxu0 0.0
      %3408 = vmatprep.subr.mxu0 0.0
      %3409 = vmatpush1.msra.mxu0 0.0
      %3410 = vmatprep.subr.mxu0 0.0
      %3411 = vmatpush1.msra.mxu0 0.0
      %3412 = vmatprep.subr.mxu0 0.0
      %3413 = vmatpush1.msra.mxu0 0.0
      %3414 = vmatprep.subr.mxu0 0.0
      %3415 = vmatpush1.msra.mxu0 0.0
      %3416 = vmatprep.subr.mxu0 0.0
      %3417 = vmatpush1.msra.mxu0 0.0
      %3418 = vmatprep.subr.mxu0 0.0
      %3419 = vmatpush1.msra.mxu0 0.0
      %3420 = vmatprep.mubr.f32.mxu0 %v3342
      %3421 = vmatmul.mubr.f32.gmra.mrb[0].mxu0 %v3331
      %v3422 = vpop.f32.mrb[0].mxu0
      %v3423 = vadd.f32 0.0, %v3422
      %v3424 = vpop.f32.mrb[0].mxu0
      %3425 = vmatprep.mubr.f32.mxu0 %v3345
      %3426 = vmatmul.mubr.f32.gmra.mrb[0].mxu0 %v3333
      %v3427 = vpop.f32.mrb[0].mxu0
      %v3428 = vadd.f32 0.0, %v3427
      %v3429 = vpop.f32.mrb[0].mxu0
      %3430 = vmatprep.mubr.f32.mxu0 %v3348
      %3431 = vmatmul.mubr.f32.gmra.mrb[0].mxu0 %v3335
      %v3432 = vpop.f32.mrb[0].mxu0
      %v3433 = vadd.f32 0.0, %v3432
      %v3434 = vpop.f32.mrb[0].mxu0
      %3435 = vmatprep.mubr.f32.mxu0 %v3351
      %3436 = vmatmul.mubr.f32.gmra.mrb[0].mxu0 %v3337
      %v3437 = vpop.f32.mrb[0].mxu0
      %v3438 = vadd.f32 0.0, %v3437
      %v3439 = vpop.f32.mrb[0].mxu0
      %3440 = vmatprep.mubr.f32.mxu0 %v3354
      %3441 = vmatmul.mubr.f32.gmra.mrb[0].mxu0 %v3339
      %v3442 = vpop.f32.mrb[0].mxu0
      %v3443 = vadd.f32 0.0, %v3442
      %v3444 = vpop.f32.mrb[0].mxu0
      %3445 = vdwg.mxu0
      %s3446 = scalar_lea.vmem %s13, 160
      %v3447 = vld [vmem:[%s3446] sm:$0xff]
      %v3448 = vld [vmem:[%s3446 + $0x8] sm:$0xff]
      %v3449 = vld [vmem:[%s3446 + $0x10] sm:$0xff]
      %v3450 = vld [vmem:[%s3446 + $0x18] sm:$0xff]
      %v3451 = vld [vmem:[%s3446 + $0x20] sm:$0xff]
      %v3452 = vld [vmem:[%s3446 + $0x28] sm:$0xff]
      %v3453 = vld [vmem:[%s3446 + $0x30] sm:$0xff]
      %v3454 = vld [vmem:[%s3446 + $0x38] sm:$0xff]
      %v3455 = vld [vmem:[%s3446 + $0x40] sm:$0xff]
      %v3456 = vld [vmem:[%s3446 + $0x48] sm:$0xff]
      %v3458 = vsel %vm2061, %v3448, 0
      %v3461 = vsel %vm2061, %v3450, 0
      %v3464 = vsel %vm2061, %v3452, 0
      %v3467 = vsel %vm2061, %v3454, 0
      %v3470 = vsel %vm2061, %v3456, 0
      %3472 = vmatprep.subr.mxu0 0.0
      %3473 = vmatpush1.msra.mxu0 %v3195
      %3474 = vmatprep.subr.mxu0 0.0
      %3475 = vmatpush1.msra.mxu0 %v3196
      %3476 = vmatprep.subr.mxu0 0.0
      %3477 = vmatpush1.msra.mxu0 %v3197
      %3478 = vmatprep.subr.mxu0 0.0
      %3479 = vmatpush1.msra.mxu0 %v3198
      %3480 = vmatprep.subr.mxu0 0.0
      %3481 = vmatpush1.msra.mxu0 %v3199
      %3482 = vmatprep.subr.mxu0 0.0
      %3483 = vmatpush1.msra.mxu0 %v3200
      %3484 = vmatprep.subr.mxu0 0.0
      %3485 = vmatpush1.msra.mxu0 %v3201
      %3486 = vmatprep.subr.mxu0 0.0
      %3487 = vmatpush1.msra.mxu0 %v3202
      %3488 = vmatprep.subr.mxu0 0.0
      %3489 = vmatpush1.msra.mxu0 %v3203
      %3490 = vmatprep.subr.mxu0 0.0
      %3491 = vmatpush1.msra.mxu0 %v3204
      %3492 = vmatprep.subr.mxu0 0.0
      %3493 = vmatpush1.msra.mxu0 %v3205
      %3494 = vmatprep.subr.mxu0 0.0
      %3495 = vmatpush1.msra.mxu0 %v3206
      %3496 = vmatprep.subr.mxu0 0.0
      %3497 = vmatpush1.msra.mxu0 %v3207
      %3498 = vmatprep.subr.mxu0 0.0
      %3499 = vmatpush1.msra.mxu0 %v3208
      %3500 = vmatprep.subr.mxu0 0.0
      %3501 = vmatpush1.msra.mxu0 %v3209
      %3502 = vmatprep.subr.mxu0 0.0
      %3503 = vmatpush1.msra.mxu0 %v3210
      %3504 = vmatprep.subr.mxu0 0.0
      %3505 = vmatpush1.msra.mxu0 %v3211
      %3506 = vmatprep.subr.mxu0 0.0
      %3507 = vmatpush1.msra.mxu0 %v3212
      %3508 = vmatprep.subr.mxu0 0.0
      %3509 = vmatpush1.msra.mxu0 %v3213
      %3510 = vmatprep.subr.mxu0 0.0
      %3511 = vmatpush1.msra.mxu0 %v3214
      %3512 = vmatprep.subr.mxu0 0.0
      %3513 = vmatpush1.msra.mxu0 0.0
      %3514 = vmatprep.subr.mxu0 0.0
      %3515 = vmatpush1.msra.mxu0 0.0
      %3516 = vmatprep.subr.mxu0 0.0
      %3517 = vmatpush1.msra.mxu0 0.0
      %3518 = vmatprep.subr.mxu0 0.0
      %3519 = vmatpush1.msra.mxu0 0.0
      %3520 = vmatprep.subr.mxu0 0.0
      %3521 = vmatpush1.msra.mxu0 0.0
      %3522 = vmatprep.subr.mxu0 0.0
      %3523 = vmatpush1.msra.mxu0 0.0
      %3524 = vmatprep.subr.mxu0 0.0
      %3525 = vmatpush1.msra.mxu0 0.0
      %3526 = vmatprep.subr.mxu0 0.0
      %3527 = vmatpush1.msra.mxu0 0.0
      %3528 = vmatprep.subr.mxu0 0.0
      %3529 = vmatpush1.msra.mxu0 0.0
      %3530 = vmatprep.subr.mxu0 0.0
      %3531 = vmatpush1.msra.mxu0 0.0
      %3532 = vmatprep.subr.mxu0 0.0
      %3533 = vmatpush1.msra.mxu0 0.0
      %3534 = vmatprep.subr.mxu0 0.0
      %3535 = vmatpush1.msra.mxu0 0.0
      %3536 = vmatprep.mubr.f32.mxu0 %v3458
      %3537 = vmatmul.mubr.f32.gmra.mrb[0].mxu0 %v3447
      %v3538 = vpop.f32.mrb[0].mxu0
      %v3539 = vadd.f32 0.0, %v3538
      %v3540 = vpop.f32.mrb[0].mxu0
      %3541 = vmatprep.mubr.f32.mxu0 %v3461
      %3542 = vmatmul.mubr.f32.gmra.mrb[0].mxu0 %v3449
      %v3543 = vpop.f32.mrb[0].mxu0
      %v3544 = vadd.f32 0.0, %v3543
      %v3545 = vpop.f32.mrb[0].mxu0
      %3546 = vmatprep.mubr.f32.mxu0 %v3464
      %3547 = vmatmul.mubr.f32.gmra.mrb[0].mxu0 %v3451
      %v3548 = vpop.f32.mrb[0].mxu0
      %v3549 = vadd.f32 0.0, %v3548
      %v3550 = vpop.f32.mrb[0].mxu0
      %3551 = vmatprep.mubr.f32.mxu0 %v3467
      %3552 = vmatmul.mubr.f32.gmra.mrb[0].mxu0 %v3453
      %v3553 = vpop.f32.mrb[0].mxu0
      %v3554 = vadd.f32 0.0, %v3553
      %v3555 = vpop.f32.mrb[0].mxu0
      %3556 = vmatprep.mubr.f32.mxu0 %v3470
      %3557 = vmatmul.mubr.f32.gmra.mrb[0].mxu0 %v3455
      %v3558 = vpop.f32.mrb[0].mxu0
      %v3559 = vadd.f32 0.0, %v3558
      %v3560 = vpop.f32.mrb[0].mxu0
      %3561 = vdwg.mxu0
      %s3562 = scalar_lea.vmem %s14, 64
      %v3563 = vld [vmem:[%s3562] sm:$0xff]
      %v3564 = vld [vmem:[%s3562 + $0x8] sm:$0xff]
      %v3565 = vld [vmem:[%s3562 + $0x10] sm:$0xff]
      %v3566 = vld [vmem:[%s3562 + $0x18] sm:$0xff]
      %v3567 = vld [vmem:[%s3562 + $0x20] sm:$0xff]
      %v3568 = vld [vmem:[%s3562 + $0x28] sm:$0xff]
      %v3569 = vld [vmem:[%s3562 + $0x30] sm:$0xff]
      %v3570 = vld [vmem:[%s3562 + $0x38] sm:$0xf]
      %v3571 = vld [vmem:[%s14] sm:$0xff]
      %v3572 = vld [vmem:[%s14 + $0x8] sm:$0xff]
      %v3573 = vld [vmem:[%s14 + $0x10] sm:$0xff]
      %v3574 = vld [vmem:[%s14 + $0x18] sm:$0xff]
      %v3575 = vld [vmem:[%s14 + $0x20] sm:$0xff]
      %v3576 = vld [vmem:[%s14 + $0x28] sm:$0xff]
      %v3577 = vld [vmem:[%s14 + $0x30] sm:$0xff]
      %v3578 = vld [vmem:[%s14 + $0x38] sm:$0xf]
      %v3580 = vsel %vm1455, %v3307, 0
      %v3583 = vsel %vm1455, %v3312, 0
      %v3586 = vsel %vm1455, %v3317, 0
      %v3589 = vsel %vm1455, %v3322, 0
      %v3592 = vsel %vm1455, %v3327, 0
      %v3595 = vsel %vm1516, %v3578, 0
      %3597 = vmatprep.subr.mxu0 0.0
      %3598 = vmatpush1.msra.mxu0 %v3571
      %3599 = vmatprep.subr.mxu0 0.0
      %3600 = vmatpush1.msra.mxu0 %v3572
      %3601 = vmatprep.subr.mxu0 0.0
      %3602 = vmatpush1.msra.mxu0 %v3573
      %3603 = vmatprep.subr.mxu0 0.0
      %3604 = vmatpush1.msra.mxu0 %v3574
      %3605 = vmatprep.subr.mxu0 0.0
      %3606 = vmatpush1.msra.mxu0 %v3575
      %3607 = vmatprep.subr.mxu0 0.0
      %3608 = vmatpush1.msra.mxu0 %v3576
      %3609 = vmatprep.subr.mxu0 0.0
      %3610 = vmatpush1.msra.mxu0 %v3577
      %3611 = vmatprep.subr.mxu0 0.0
      %3612 = vmatpush1.msra.mxu0 %v3595
      %3613 = vmatprep.subr.mxu0 0.0
      %3614 = vmatpush1.msra.mxu0 0.0
      %3615 = vmatprep.subr.mxu0 0.0
      %3616 = vmatpush1.msra.mxu0 0.0
      %3617 = vmatprep.subr.mxu0 0.0
      %3618 = vmatpush1.msra.mxu0 0.0
      %3619 = vmatprep.subr.mxu0 0.0
      %3620 = vmatpush1.msra.mxu0 0.0
      %3621 = vmatprep.subr.mxu0 0.0
      %3622 = vmatpush1.msra.mxu0 0.0
      %3623 = vmatprep.subr.mxu0 0.0
      %3624 = vmatpush1.msra.mxu0 0.0
      %3625 = vmatprep.subr.mxu0 0.0
      %3626 = vmatpush1.msra.mxu0 0.0
      %3627 = vmatprep.subr.mxu0 0.0
      %3628 = vmatpush1.msra.mxu0 0.0
      %3629 = vmatprep.subr.mxu0 0.0
      %3630 = vmatpush1.msra.mxu0 0.0
      %3631 = vmatprep.subr.mxu0 0.0
      %3632 = vmatpush1.msra.mxu0 0.0
      %3633 = vmatprep.subr.mxu0 0.0
      %3634 = vmatpush1.msra.mxu0 0.0
      %3635 = vmatprep.subr.mxu0 0.0
      %3636 = vmatpush1.msra.mxu0 0.0
      %3637 = vmatprep.subr.mxu0 0.0
      %3638 = vmatpush1.msra.mxu0 0.0
      %3639 = vmatprep.subr.mxu0 0.0
      %3640 = vmatpush1.msra.mxu0 0.0
      %3641 = vmatprep.subr.mxu0 0.0
      %3642 = vmatpush1.msra.mxu0 0.0
      %3643 = vmatprep.subr.mxu0 0.0
      %3644 = vmatpush1.msra.mxu0 0.0
      %3645 = vmatprep.subr.mxu0 0.0
      %3646 = vmatpush1.msra.mxu0 0.0
      %3647 = vmatprep.subr.mxu0 0.0
      %3648 = vmatpush1.msra.mxu0 0.0
      %3649 = vmatprep.subr.mxu0 0.0
      %3650 = vmatpush1.msra.mxu0 0.0
      %3651 = vmatprep.subr.mxu0 0.0
      %3652 = vmatpush1.msra.mxu0 0.0
      %3653 = vmatprep.subr.mxu0 0.0
      %3654 = vmatpush1.msra.mxu0 0.0
      %3655 = vmatprep.subr.mxu0 0.0
      %3656 = vmatpush1.msra.mxu0 0.0
      %3657 = vmatprep.subr.mxu0 0.0
      %3658 = vmatpush1.msra.mxu0 0.0
      %3659 = vmatprep.subr.mxu0 0.0
      %3660 = vmatpush1.msra.mxu0 0.0
      %3661 = vmatprep.mubr.f32.mxu0 0.0
      %3662 = vmatmul.mubr.f32.gmra.mrb[0].mxu0 %v3580
      %v3663 = vpop.f32.mrb[0].mxu0
      %v3664 = vadd.f32 0.0, %v3663
      %v3665 = vpop.f32.mrb[0].mxu0
      %3666 = vmatprep.mubr.f32.mxu0 0.0
      %3667 = vmatmul.mubr.f32.gmra.mrb[0].mxu0 %v3583
      %v3668 = vpop.f32.mrb[0].mxu0
      %v3669 = vadd.f32 0.0, %v3668
      %v3670 = vpop.f32.mrb[0].mxu0
      %3671 = vmatprep.mubr.f32.mxu0 0.0
      %3672 = vmatmul.mubr.f32.gmra.mrb[0].mxu0 %v3586
      %v3673 = vpop.f32.mrb[0].mxu0
      %v3674 = vadd.f32 0.0, %v3673
      %v3675 = vpop.f32.mrb[0].mxu0
      %3676 = vmatprep.mubr.f32.mxu0 0.0
      %3677 = vmatmul.mubr.f32.gmra.mrb[0].mxu0 %v3589
      %v3678 = vpop.f32.mrb[0].mxu0
      %v3679 = vadd.f32 0.0, %v3678
      %v3680 = vpop.f32.mrb[0].mxu0
      %3681 = vmatprep.mubr.f32.mxu0 0.0
      %3682 = vmatmul.mubr.f32.gmra.mrb[0].mxu0 %v3592
      %v3683 = vpop.f32.mrb[0].mxu0
      %v3684 = vadd.f32 0.0, %v3683
      %v3685 = vpop.f32.mrb[0].mxu0
      %3686 = vdwg.mxu0
      %v3688 = vsel %vm1455, %v3423, 0
      %v3691 = vsel %vm1455, %v3428, 0
      %v3694 = vsel %vm1455, %v3433, 0
      %v3697 = vsel %vm1455, %v3438, 0
      %v3700 = vsel %vm1455, %v3443, 0
      %v3703 = vsel %vm1516, %v3570, 0
      %3705 = vmatprep.subr.mxu0 0.0
      %3706 = vmatpush1.msra.mxu0 %v3563
      %3707 = vmatprep.subr.mxu0 0.0
      %3708 = vmatpush1.msra.mxu0 %v3564
      %3709 = vmatprep.subr.mxu0 0.0
      %3710 = vmatpush1.msra.mxu0 %v3565
      %3711 = vmatprep.subr.mxu0 0.0
      %3712 = vmatpush1.msra.mxu0 %v3566
      %3713 = vmatprep.subr.mxu0 0.0
      %3714 = vmatpush1.msra.mxu0 %v3567
      %3715 = vmatprep.subr.mxu0 0.0
      %3716 = vmatpush1.msra.mxu0 %v3568
      %3717 = vmatprep.subr.mxu0 0.0
      %3718 = vmatpush1.msra.mxu0 %v3569
      %3719 = vmatprep.subr.mxu0 0.0
      %3720 = vmatpush1.msra.mxu0 %v3703
      %3721 = vmatprep.subr.mxu0 0.0
      %3722 = vmatpush1.msra.mxu0 0.0
      %3723 = vmatprep.subr.mxu0 0.0
      %3724 = vmatpush1.msra.mxu0 0.0
      %3725 = vmatprep.subr.mxu0 0.0
      %3726 = vmatpush1.msra.mxu0 0.0
      %3727 = vmatprep.subr.mxu0 0.0
      %3728 = vmatpush1.msra.mxu0 0.0
      %3729 = vmatprep.subr.mxu0 0.0
      %3730 = vmatpush1.msra.mxu0 0.0
      %3731 = vmatprep.subr.mxu0 0.0
      %3732 = vmatpush1.msra.mxu0 0.0
      %3733 = vmatprep.subr.mxu0 0.0
      %3734 = vmatpush1.msra.mxu0 0.0
      %3735 = vmatprep.subr.mxu0 0.0
      %3736 = vmatpush1.msra.mxu0 0.0
      %3737 = vmatprep.subr.mxu0 0.0
      %3738 = vmatpush1.msra.mxu0 0.0
      %3739 = vmatprep.subr.mxu0 0.0
      %3740 = vmatpush1.msra.mxu0 0.0
      %3741 = vmatprep.subr.mxu0 0.0
      %3742 = vmatpush1.msra.mxu0 0.0
      %3743 = vmatprep.subr.mxu0 0.0
      %3744 = vmatpush1.msra.mxu0 0.0
      %3745 = vmatprep.subr.mxu0 0.0
      %3746 = vmatpush1.msra.mxu0 0.0
      %3747 = vmatprep.subr.mxu0 0.0
      %3748 = vmatpush1.msra.mxu0 0.0
      %3749 = vmatprep.subr.mxu0 0.0
      %3750 = vmatpush1.msra.mxu0 0.0
      %3751 = vmatprep.subr.mxu0 0.0
      %3752 = vmatpush1.msra.mxu0 0.0
      %3753 = vmatprep.subr.mxu0 0.0
      %3754 = vmatpush1.msra.mxu0 0.0
      %3755 = vmatprep.subr.mxu0 0.0
      %3756 = vmatpush1.msra.mxu0 0.0
      %3757 = vmatprep.subr.mxu0 0.0
      %3758 = vmatpush1.msra.mxu0 0.0
      %3759 = vmatprep.subr.mxu0 0.0
      %3760 = vmatpush1.msra.mxu0 0.0
      %3761 = vmatprep.subr.mxu0 0.0
      %3762 = vmatpush1.msra.mxu0 0.0
      %3763 = vmatprep.subr.mxu0 0.0
      %3764 = vmatpush1.msra.mxu0 0.0
      %3765 = vmatprep.subr.mxu0 0.0
      %3766 = vmatpush1.msra.mxu0 0.0
      %3767 = vmatprep.subr.mxu0 0.0
      %3768 = vmatpush1.msra.mxu0 0.0
      %3769 = vmatprep.mubr.f32.mxu0 0.0
      %3770 = vmatmul.mubr.f32.gmra.mrb[0].mxu0 %v3688
      %v3771 = vpop.f32.mrb[0].mxu0
      %v3772 = vadd.f32 %v3664, %v3771
      %v3773 = vpop.f32.mrb[0].mxu0
      %3774 = vmatprep.mubr.f32.mxu0 0.0
      %3775 = vmatmul.mubr.f32.gmra.mrb[0].mxu0 %v3691
      %v3776 = vpop.f32.mrb[0].mxu0
      %v3777 = vadd.f32 %v3669, %v3776
      %v3778 = vpop.f32.mrb[0].mxu0
      %3779 = vmatprep.mubr.f32.mxu0 0.0
      %3780 = vmatmul.mubr.f32.gmra.mrb[0].mxu0 %v3694
      %v3781 = vpop.f32.mrb[0].mxu0
      %v3782 = vadd.f32 %v3674, %v3781
      %v3783 = vpop.f32.mrb[0].mxu0
      %3784 = vmatprep.mubr.f32.mxu0 0.0
      %3785 = vmatmul.mubr.f32.gmra.mrb[0].mxu0 %v3697
      %v3786 = vpop.f32.mrb[0].mxu0
      %v3787 = vadd.f32 %v3679, %v3786
      %v3788 = vpop.f32.mrb[0].mxu0
      %3789 = vmatprep.mubr.f32.mxu0 0.0
      %3790 = vmatmul.mubr.f32.gmra.mrb[0].mxu0 %v3700
      %v3791 = vpop.f32.mrb[0].mxu0
      %v3792 = vadd.f32 %v3684, %v3791
      %v3793 = vpop.f32.mrb[0].mxu0
      %3794 = vdwg.mxu0
      %s3795 = scalar_lea.vmem %s14, 128
      %v3796 = vld [vmem:[%s3795] sm:$0xff]
      %v3797 = vld [vmem:[%s3795 + $0x8] sm:$0xff]
      %v3798 = vld [vmem:[%s3795 + $0x10] sm:$0xff]
      %v3799 = vld [vmem:[%s3795 + $0x18] sm:$0xff]
      %v3800 = vld [vmem:[%s3795 + $0x20] sm:$0xff]
      %v3801 = vld [vmem:[%s3795 + $0x28] sm:$0xff]
      %v3802 = vld [vmem:[%s3795 + $0x30] sm:$0xff]
      %v3803 = vld [vmem:[%s3795 + $0x38] sm:$0xf]
      %v3805 = vsel %vm1455, %v3539, 0
      %v3808 = vsel %vm1455, %v3544, 0
      %v3811 = vsel %vm1455, %v3549, 0
      %v3814 = vsel %vm1455, %v3554, 0
      %v3817 = vsel %vm1455, %v3559, 0
      %v3820 = vsel %vm1516, %v3803, 0
      %3822 = vmatprep.subr.mxu0 0.0
      %3823 = vmatpush1.msra.mxu0 %v3796
      %3824 = vmatprep.subr.mxu0 0.0
      %3825 = vmatpush1.msra.mxu0 %v3797
      %3826 = vmatprep.subr.mxu0 0.0
      %3827 = vmatpush1.msra.mxu0 %v3798
      %3828 = vmatprep.subr.mxu0 0.0
      %3829 = vmatpush1.msra.mxu0 %v3799
      %3830 = vmatprep.subr.mxu0 0.0
      %3831 = vmatpush1.msra.mxu0 %v3800
      %3832 = vmatprep.subr.mxu0 0.0
      %3833 = vmatpush1.msra.mxu0 %v3801
      %3834 = vmatprep.subr.mxu0 0.0
      %3835 = vmatpush1.msra.mxu0 %v3802
      %3836 = vmatprep.subr.mxu0 0.0
      %3837 = vmatpush1.msra.mxu0 %v3820
      %3838 = vmatprep.subr.mxu0 0.0
      %3839 = vmatpush1.msra.mxu0 0.0
      %3840 = vmatprep.subr.mxu0 0.0
      %3841 = vmatpush1.msra.mxu0 0.0
      %3842 = vmatprep.subr.mxu0 0.0
      %3843 = vmatpush1.msra.mxu0 0.0
      %3844 = vmatprep.subr.mxu0 0.0
      %3845 = vmatpush1.msra.mxu0 0.0
      %3846 = vmatprep.subr.mxu0 0.0
      %3847 = vmatpush1.msra.mxu0 0.0
      %3848 = vmatprep.subr.mxu0 0.0
      %3849 = vmatpush1.msra.mxu0 0.0
      %3850 = vmatprep.subr.mxu0 0.0
      %3851 = vmatpush1.msra.mxu0 0.0
      %3852 = vmatprep.subr.mxu0 0.0
      %3853 = vmatpush1.msra.mxu0 0.0
      %3854 = vmatprep.subr.mxu0 0.0
      %3855 = vmatpush1.msra.mxu0 0.0
      %3856 = vmatprep.subr.mxu0 0.0
      %3857 = vmatpush1.msra.mxu0 0.0
      %3858 = vmatprep.subr.mxu0 0.0
      %3859 = vmatpush1.msra.mxu0 0.0
      %3860 = vmatprep.subr.mxu0 0.0
      %3861 = vmatpush1.msra.mxu0 0.0
      %3862 = vmatprep.subr.mxu0 0.0
      %3863 = vmatpush1.msra.mxu0 0.0
      %3864 = vmatprep.subr.mxu0 0.0
      %3865 = vmatpush1.msra.mxu0 0.0
      %3866 = vmatprep.subr.mxu0 0.0
      %3867 = vmatpush1.msra.mxu0 0.0
      %3868 = vmatprep.subr.mxu0 0.0
      %3869 = vmatpush1.msra.mxu0 0.0
      %3870 = vmatprep.subr.mxu0 0.0
      %3871 = vmatpush1.msra.mxu0 0.0
      %3872 = vmatprep.subr.mxu0 0.0
      %3873 = vmatpush1.msra.mxu0 0.0
      %3874 = vmatprep.subr.mxu0 0.0
      %3875 = vmatpush1.msra.mxu0 0.0
      %3876 = vmatprep.subr.mxu0 0.0
      %3877 = vmatpush1.msra.mxu0 0.0
      %3878 = vmatprep.subr.mxu0 0.0
      %3879 = vmatpush1.msra.mxu0 0.0
      %3880 = vmatprep.subr.mxu0 0.0
      %3881 = vmatpush1.msra.mxu0 0.0
      %3882 = vmatprep.subr.mxu0 0.0
      %3883 = vmatpush1.msra.mxu0 0.0
      %3884 = vmatprep.subr.mxu0 0.0
      %3885 = vmatpush1.msra.mxu0 0.0
      %3886 = vmatprep.mubr.f32.mxu0 0.0
      %3887 = vmatmul.mubr.f32.gmra.mrb[0].mxu0 %v3805
      %v3888 = vpop.f32.mrb[0].mxu0
      %v3889 = vadd.f32 0.0, %v3888
      %v3890 = vpop.f32.mrb[0].mxu0
      %3891 = vmatprep.mubr.f32.mxu0 0.0
      %3892 = vmatmul.mubr.f32.gmra.mrb[0].mxu0 %v3808
      %v3893 = vpop.f32.mrb[0].mxu0
      %v3894 = vadd.f32 0.0, %v3893
      %v3895 = vpop.f32.mrb[0].mxu0
      %3896 = vmatprep.mubr.f32.mxu0 0.0
      %3897 = vmatmul.mubr.f32.gmra.mrb[0].mxu0 %v3811
      %v3898 = vpop.f32.mrb[0].mxu0
      %v3899 = vadd.f32 0.0, %v3898
      %v3900 = vpop.f32.mrb[0].mxu0
      %3901 = vmatprep.mubr.f32.mxu0 0.0
      %3902 = vmatmul.mubr.f32.gmra.mrb[0].mxu0 %v3814
      %v3903 = vpop.f32.mrb[0].mxu0
      %v3904 = vadd.f32 0.0, %v3903
      %v3905 = vpop.f32.mrb[0].mxu0
      %3906 = vmatprep.mubr.f32.mxu0 0.0
      %3907 = vmatmul.mubr.f32.gmra.mrb[0].mxu0 %v3817
      %v3908 = vpop.f32.mrb[0].mxu0
      %v3909 = vadd.f32 0.0, %v3908
      %v3910 = vpop.f32.mrb[0].mxu0
      %3911 = vdwg.mxu0
      %v3912 = vadd.f32 %v3772, %v3889
      %v3913 = vadd.f32 %v3777, %v3894
      %v3914 = vadd.f32 %v3782, %v3899
      %v3915 = vadd.f32 %v3787, %v3904
      %v3916 = vadd.f32 %v3792, %v3909
      %v3917 = vld [vmem:[%s15] sm:$0xff]
      %v3918 = vld [vmem:[%s15 + $0x8] sm:$0xff]
      %v3919 = vld [vmem:[%s15 + $0x10] sm:$0xff]
      %v3920 = vld [vmem:[%s15 + $0x18] sm:$0xff]
      %v3921 = vld [vmem:[%s15 + $0x20] sm:$0xff]
      %3923 = vset.pattern.permute.xlu0 0
      %3924 = vperm.xlu0 %3923, %v3917
      %v3925 = vpop.permute.xlu0 %3924
      %3928 = vset.pattern.permute.xlu0 0
      %3929 = vperm.xlu0 %3928, %v3918
      %v3930 = vpop.permute.xlu0 %3929
      %3933 = vset.pattern.permute.xlu0 0
      %3934 = vperm.xlu0 %3933, %v3919
      %v3935 = vpop.permute.xlu0 %3934
      %3938 = vset.pattern.permute.xlu0 0
      %3939 = vperm.xlu0 %3938, %v3920
      %v3940 = vpop.permute.xlu0 %3939
      %3943 = vset.pattern.permute.xlu0 0
      %3944 = vperm.xlu0 %3943, %v3921
      %v3945 = vpop.permute.xlu0 %3944
      %v3947 = vadd.f32 %v3912, %v3925
      %v3948 = vadd.f32 %v3913, %v3930
      %v3949 = vadd.f32 %v3914, %v3935
      %v3950 = vadd.f32 %v3915, %v3940
      %v3951 = vadd.f32 %v3916, %v3945
      %3952 = vst.msk [vmem:[%s555] sm:$0xff] %vm732, %v3947
      %3953 = vst.msk [vmem:[%s555 + $0x8] sm:$0xff] %vm732, %v3948
      %3954 = vst.msk [vmem:[%s555 + $0x10] sm:$0xff] %vm732, %v3949
      %3955 = vst.msk [vmem:[%s555 + $0x18] sm:$0xff] %vm732, %v3950
      %3956 = vst.msk [vmem:[%s555 + $0x20] sm:$0xff] %vm732, %v3951
      %s3957 = smul.u32 5, %s29
      %p3958 = scmp.lt.s32.totalorder %s3957, 9
      %s3959 = scalar_select %p3958, %s3957, 9
      %s3960 = smul.addr %s3959, 8
      %s3961 = scalar_lea.vmem %s16, %s3960
      %p3962 = scmp.lt.s32.totalorder %s29, 1
      %s3963 = scalar_select %p3962, %s29, 1
      %s3964 = smul.addr %s3963, 8
      %s3965 = scalar_lea.vmem %s17, %s3964
      // Predicated region
      $region85: #{forward.1} parent=83 // pred_check
        %p3966 = pneg %p388
      $region86: #{forward.1} parent=83 // pred_check_branch
        %3968 = sbr.rel (%p3966) target = $region88
      $region87: #{forward.1} parent=83 // pred_region
        %s3969 = smul.u32 5, %s29
      $region88: #{forward.1} parent=83 // pred_fallthru
        _
      // Predicated region
      $region89: #{forward.1} parent=83 // pred_check
        %p3970 = pneg %p414
      $region90: #{forward.1} parent=83 // pred_check_branch
        %3972 = sbr.rel (%p3970) target = $region92
      $region91: #{forward.1} parent=83 // pred_region
        _
      $region92: #{forward.1} parent=83 // pred_fallthru
        _
    $region84: #{forward.1} parent=5 // pred_fallthru
      _
    %p3973 = scmp.le.s32.totalorder 2, %s24
    // Predicated region
    $region93: #{forward.1} parent=5 // pred_check
      %p3974 = pneg %p3973
    $region94: #{forward.1} parent=5 // pred_check_branch
      %3976 = sbr.rel (%p3974) target = $region96
    $region95: #{forward.1} parent=5 // pred_region
      %s3977 = ssub.s32 %s24, 2
      // Predicated region
      $region97: #{forward.1} parent=95 // pred_check
        %p3978 = pneg %p394
      $region98: #{forward.1} parent=95 // pred_check_branch
        %3980 = sbr.rel (%p3978) target = $region100
      $region99: #{forward.1} parent=95 // pred_region
        %s3981 = smul.u32 5, %s30
        %p3982 = scmp.lt.s32.totalorder %s3981, 9
        %s3983 = scalar_select %p3982, %s3981, 9
        %s3984 = smul.addr %s3983, 8
        %s3985 = scalar_lea.vmem %s16, %s3984
      $region100: #{forward.1} parent=95 // pred_fallthru
        _
      // Predicated region
      $region101: #{forward.1} parent=95 // pred_check
        %p3986 = pneg %p420
      $region102: #{forward.1} parent=95 // pred_check_branch
        %3988 = sbr.rel (%p3986) target = $region104
      $region103: #{forward.1} parent=95 // pred_region
        %p3989 = scmp.lt.s32.totalorder %s30, 1
        %s3990 = scalar_select %p3989, %s30, 1
        %s3991 = smul.addr %s3990, 8
        %s3992 = scalar_lea.vmem %s17, %s3991
      $region104: #{forward.1} parent=95 // pred_fallthru
        _
    $region96: #{forward.1} parent=5 // pred_fallthru
      _
  $region6: #{forward.1} parent=0 // loop_footer
    %s28 = sadd.s32 1, %s24
  $region7: #{forward.1} parent=0 // loop_footer_branch
    %23 = sbr.rel target = $region3
  $region8: #{forward.1} parent=0 // loop_exit
    _

</llo_original>
